<compile_context>
chip_gen: v7x
topology: tpu7x:2x2x1
jax: 0.10.0
libtpu: 0.0.40
codegen_flags: <defaults>
</compile_context>

<pallas_src>
import jax
import jax.numpy as jnp
from jax.experimental import pallas as pl
from jax.experimental.pallas import tpu as pltpu

# ---------------- model hyper-parameters (small, consistent with the module) ------
WINDOW = 3          # window_size (odd -> padding=window//2 keeps "same" size)
TIME = 8            # time_length
FEAT = 16           # feature_length
NCLASS = 5          # n_classes
BATCH = 2
C1 = 16             # conv_11 / conv_21 output channels
C3 = 32             # conv_31 output channels
PAD = WINDOW // 2
BN_EPS = 1e-5


# ---------------------------------- fused kernel -----------------------------------
def _xcm_fused_kernel(
    xT_ref, xv_ref,
    n1_ref, sc1_ref, sh1_ref, w12_ref, b12_ref,
    w21_ref, sc2_ref, sh2_ref, w22_ref, b22_ref,
    w31_ref, sc3_ref, sh3_ref, fcw_ref, fcb_ref,
    out_ref,
):
    f32 = jnp.float32
    B, F, T = xT_ref.shape              # (2, 16, 8)
    L = F + 1
    hi = jax.lax.Precision.HIGHEST

    # ---------------- in-kernel 'same' zero padding (VMEM values only) -------------
    zc = jnp.zeros((F, 1), f32)          # one zero column (lane pad)
    zr = jnp.zeros((1, T + 2), f32)      # one zero row    (sublane pad)
    xtp = []   # per batch: transposed image, padded both axes -> (F+2, T+2)
    xvp = []   # per batch: raw-view rows, padded along time   -> (F,   T+2)
    for b in range(B):
        xtp.append(jnp.concatenate(
            [zr, jnp.concatenate([zc, xT_ref[b], zc], axis=1), zr], axis=0))
        xvp.append(jnp.concatenate([zc, xv_ref[b], zc], axis=1))

    # ---- branch 1: Conv2d(1->16,'same') + BN + ReLU + Conv2d(16->1,1x1) + ReLU ----
    # rows are (b, f); one MXU matmul covers all 9 taps x 16 channels.
    xcat = jnp.concatenate(
        [jnp.concatenate([xtp[b][dj:dj + F, :] for b in range(B)], axis=0)
         for dj in range(WINDOW)], axis=1)                              # (B*F, 3*(T+2))
    hpre = jnp.dot(xcat, n1_ref[...], precision=hi,
                   preferred_element_type=f32)                          # (B*F, C1*T)
    h1 = jnp.maximum(hpre * sc1_ref[...] + sh1_ref[...], 0.0)           # folded BN + ReLU
    fb = jnp.maximum(
        jnp.dot(h1, w12_ref[...], precision=hi, preferred_element_type=f32)
        + b12_ref[...], 0.0)                                            # (B*F, T) == first_branch

    # ---- branch 2: View(F) + Conv1d(F->16,'same') + BN + ReLU + Conv1d(16->1) ----
    kcat = jnp.concatenate(
        [jnp.concatenate([xvp[b][:, d:d + T] for b in range(B)], axis=1)
         for d in range(WINDOW)], axis=0)                               # (3*F, B*T)
    conv2 = jnp.dot(w21_ref[...], kcat, precision=hi,
                    preferred_element_type=f32)                         # (C1, B*T)
    h2 = jnp.maximum(conv2 * sc2_ref[...] + sh2_ref[...], 0.0)
    y2 = jnp.maximum(
        jnp.dot(w22_ref[...], h2, precision=hi, preferred_element_type=f32)
        + b22_ref[...], 0.0)                                            # (1, B*T)

    # ---- head: concat + swap + Conv1d(T->32,'same') + BN + ReLU + AvgPool + FC ----
    zt = jnp.zeros((1, T), f32)
    a_rows = []
    for b in range(B):
        # main (after swap), padded along L, in (L+2, T) orientation
        m_b = jnp.concatenate(
            [zt, fb[b * F:(b + 1) * F, :], y2[:, b * T:(b + 1) * T], zt], axis=0)
        a_rows.append(jnp.concatenate(
            [m_b[d:d + L, :] for d in range(WINDOW)], axis=1))          # (L, 3*T)
    a_mat = jnp.concatenate(a_rows, axis=0)                             # (B*L, 3*T)
    conv3 = jnp.dot(a_mat, w31_ref[...], precision=hi,
                    preferred_element_type=f32)                         # (B*L, C3)
    h3 = jnp.maximum(conv3 * sc3_ref[...] + sh3_ref[...], 0.0)
    # AvgPool1d(L) per batch element (1/L is a compile-time constant).
    z = jnp.concatenate(
        [jnp.sum(h3[b * L:(b + 1) * L, :], axis=0, keepdims=True) for b in range(B)],
        axis=0) * (1.0 / L)                                             # (B, C3)
    logits = jnp.dot(z, fcw_ref[...], precision=hi,
                     preferred_element_type=f32) + fcb_ref[...]         # (B, NCLASS)
    mx = jnp.max(logits, axis=1, keepdims=True)
    e = jnp.exp(logits - mx)
    out_ref[...] = e / jnp.sum(e, axis=1, keepdims=True)                # softmax (classes)


# ---------------------------------- wrapper ----------------------------------------
def _fold_bn(gamma, beta, mean, var):
    scale = gamma / jnp.sqrt(var + BN_EPS)
    shift = beta - mean * scale
    return scale, shift


def xcm_forward(x, params):
    B = x.shape[0]
    T, F = TIME, FEAT
    f32 = jnp.float32

    # ----- cheap input reformatting (1 KB): squeeze, transpose, raw .view ----------
    x2d = x[:, 0]                                    # (B, T, F)  squeeze channel
    xT = jnp.transpose(x2d, (0, 2, 1))               # (B, F, T)  feature-major image
    xv = x.reshape(B, F, T)                          # torch .view(B, F, -1) raw reshape

    # ----- fold BatchNorm (eval / running stats) into scale & shift ----------------
    s1, t1 = _fold_bn(params["bn1_gamma"], params["bn1_beta"],
                      params["bn1_mean"], params["bn1_var"])
    s2, t2 = _fold_bn(params["bn2_gamma"], params["bn2_beta"],
                      params["bn2_mean"], params["bn2_var"])
    s3, t3 = _fold_bn(params["bn3_gamma"], params["bn3_beta"],
                      params["bn3_mean"], params["bn3_var"])

    # ----- branch-1 weight repack: Conv2d as one banded matmul ---------------------
    # n1cat[dj*(T+2)+tp, c*T+t] = w1[c, di, dj]  where tp == t + di
    sel = (jnp.arange(T + 2)[None, :, None]
           == jnp.arange(T)[None, None, :]
           + jnp.arange(WINDOW)[:, None, None]).astype(f32)             # (di, tp, t)
    n1cat = jnp.einsum('ipt,cij->jpct', sel,
                       params["w1"]).reshape(WINDOW * (T + 2), C1 * T)  # (30, 128)
    sc1 = jnp.repeat(s1, T).reshape(1, C1 * T)
    sh1 = jnp.repeat(s1 * params["b1"] + t1, T).reshape(1, C1 * T)
    # 1x1 conv over channels as a block-diagonal (C1*T, T) matrix
    w12big = jnp.einsum('c,tu->ctu', params["w12"],
                        jnp.eye(T, dtype=f32)).reshape(C1 * T, T)
    b12 = params["b12"].reshape(1, 1)

    # ----- branch-2 weight repack: 3 taps fused into one (C1, 3*F) matrix ----------
    w21cat = jnp.transpose(params["w21"], (0, 2, 1)).reshape(C1, WINDOW * F)
    sc2 = s2.reshape(C1, 1)
    sh2 = (s2 * params["b21"] + t2).reshape(C1, 1)
    w22row = params["w22"].reshape(1, C1)
    b22 = params["b22"].reshape(1, 1)

    # ----- head weight repack: 3 taps fused into one (3*T, C3) matrix --------------
    w31cat = jnp.transpose(params["w31"], (2, 1, 0)).reshape(WINDOW * T, C3)
    sc3 = s3.reshape(1, C3)
    sh3 = (s3 * params["b31"] + t3).reshape(1, C3)
    fcwT = params["fc_w"].T                          # (C3, NCLASS)
    fcb = params["fc_b"].reshape(1, NCLASS)

    operands = (xT, xv,
                n1cat, sc1, sh1, w12big, b12,
                w21cat, sc2, sh2, w22row, b22,
                w31cat, sc3, sh3, fcwT, fcb)

    def _full(shape):
        zeros = (0,) * len(shape)
        return pl.BlockSpec(shape, lambda i, z=zeros: z)

    return pl.pallas_call(
        _xcm_fused_kernel,
        out_shape=jax.ShapeDtypeStruct((B, NCLASS), f32),
        grid=(1,),                                    # single grid step, whole batch
        in_specs=[_full(op.shape) for op in operands],
        out_specs=_full((B, NCLASS)),
        compiler_params=pltpu.CompilerParams(
            dimension_semantics=("arbitrary",)),
    )(*operands)


# ------------------------------- pure-JAX reference --------------------------------
def xcm_reference(x, params):
    B, _, T, F = x.shape
    p = PAD
    hi = jax.lax.Precision.HIGHEST
    s1, t1 = _fold_bn(params["bn1_gamma"], params["bn1_beta"],
                      params["bn1_mean"], params["bn1_var"])
    s2, t2 = _fold_bn(params["bn2_gamma"], params["bn2_beta"],
                      params["bn2_mean"], params["bn2_var"])
    s3, t3 = _fold_bn(params["bn3_gamma"], params["bn3_beta"],
                      params["bn3_mean"], params["bn3_var"])

    x2d = x[:, 0]
    xpad = jnp.pad(x2d, ((0, 0), (p, p), (p, p)))
    pat = jnp.stack([xpad[:, di:di + T, dj:dj + F]
                     for di in range(WINDOW) for dj in range(WINDOW)], axis=1)
    conv1 = jnp.einsum('cq,bqtf->bctf', params["w1"].reshape(C1, -1), pat,
                       precision=hi) + params["b1"][None, :, None, None]
    h1 = jax.nn.relu(conv1 * s1[None, :, None, None] + t1[None, :, None, None])
    y1 = jax.nn.relu(jnp.einsum('c,bctf->btf', params["w12"], h1,
                                precision=hi) + params["b12"][0])
    fb = jnp.transpose(y1, (0, 2, 1))

    xv = x.reshape(B, F, T)
    xvp = jnp.pad(xv, ((0, 0), (0, 0), (p, p)))
    pat2 = jnp.stack([xvp[:, :, d:d + T] for d in range(WINDOW)], axis=1)   # (B,k,F,T)
    conv2 = jnp.einsum('cfd,bdft->bct', params["w21"], pat2,
                       precision=hi) + params["b21"][None, :, None]
    h2 = jax.nn.relu(conv2 * s2[None, :, None] + t2[None, :, None])
    y2 = jax.nn.relu(jnp.einsum('c,bct->bt', params["w22"], h2,
                                precision=hi) + params["b22"][0])[:, None, :]

    main = jnp.concatenate([fb, y2], axis=1)
    main = jnp.transpose(main, (0, 2, 1))
    L = F + 1
    mp = jnp.pad(main, ((0, 0), (0, 0), (p, p)))
    pat3 = jnp.stack([mp[:, :, d:d + L] for d in range(WINDOW)], axis=1)    # (B,k,T,L)
    conv3 = jnp.einsum('ctd,bdtl->bcl', params["w31"], pat3,
                       precision=hi) + params["b31"][None, :, None]
    h3 = jax.nn.relu(conv3 * s3[None, :, None] + t3[None, :, None])
    z = jnp.mean(h3, axis=2)                                    # (B, C3)
    logits = jnp.dot(z, params["fc_w"].T, precision=hi) + params["fc_b"][None, :]
    return jax.nn.softmax(logits, axis=1)


# ----------------------------------- params ----------------------------------------
def init_params(key):
    ks = jax.random.split(key, 24)

    def n(k, shape, scale=0.1):
        return (scale * jax.random.normal(k, shape)).astype(jnp.float32)

    return dict(
        # branch 1
        w1=n(ks[0], (C1, WINDOW, WINDOW)),
        b1=n(ks[1], (C1,)),
        bn1_gamma=1.0 + n(ks[2], (C1,)),
        bn1_beta=n(ks[3], (C1,)),
        bn1_mean=n(ks[4], (C1,)),
        bn1_var=jnp.abs(n(ks[5], (C1,))) + 1.0,
        w12=n(ks[6], (C1,)),
        b12=n(ks[7], (1,)),
        # branch 2
        w21=n(ks[8], (C1, FEAT, WINDOW)),
        b21=n(ks[9], (C1,)),
        bn2_gamma=1.0 + n(ks[10], (C1,)),
        bn2_beta=n(ks[11], (C1,)),
        bn2_mean=n(ks[12], (C1,)),
        bn2_var=jnp.abs(n(ks[13], (C1,))) + 1.0,
        w22=n(ks[14], (C1,)),
        b22=n(ks[15], (1,)),
        # head
        w31=n(ks[16], (C3, TIME, WINDOW)),
        b31=n(ks[17], (C3,)),
        bn3_gamma=1.0 + n(ks[18], (C3,)),
        bn3_beta=n(ks[19], (C3,)),
        bn3_mean=n(ks[20], (C3,)),
        bn3_var=jnp.abs(n(ks[21], (C3,))) + 1.0,
        fc_w=n(ks[22], (NCLASS, C3)),
        fc_b=n(ks[23], (NCLASS,)),
    )


if __name__ == "__main__":
    key = jax.random.PRNGKey(0)
    pkey, xkey = jax.random.split(key)
    params = init_params(pkey)
    x = jax.random.normal(xkey, (BATCH, 1, TIME, FEAT), dtype=jnp.float32)

    fwd = jax.jit(xcm_forward)
    out = jax.block_until_ready(fwd(x, params))
    ref = jax.block_until_ready(xcm_reference(x, params))

    assert out.shape == (BATCH, NCLASS), out.shape
    assert bool(jnp.all(jnp.isfinite(out)))
    assert bool(jnp.allclose(jnp.sum(out, axis=1), 1.0, atol=1e-5))
    assert bool(jnp.allclose(out, ref, atol=1e-4, rtol=1e-4)), (out, ref)
    print("KERNEL_OK")
</pallas_src>

<mosaic_0001>
module attributes {stable_mosaic.version = 11 : i64} {
  func.func @_xcm_fused_kernel(%arg0: i32, %arg1: memref<2x16x8xf32, #tpu.memory_space<vmem>>, %arg2: memref<2x16x8xf32, #tpu.memory_space<vmem>>, %arg3: memref<30x128xf32, #tpu.memory_space<vmem>>, %arg4: memref<1x128xf32, #tpu.memory_space<vmem>>, %arg5: memref<1x128xf32, #tpu.memory_space<vmem>>, %arg6: memref<128x8xf32, #tpu.memory_space<vmem>>, %arg7: memref<1x1xf32, #tpu.memory_space<vmem>>, %arg8: memref<16x48xf32, #tpu.memory_space<vmem>>, %arg9: memref<16x1xf32, #tpu.memory_space<vmem>>, %arg10: memref<16x1xf32, #tpu.memory_space<vmem>>, %arg11: memref<1x16xf32, #tpu.memory_space<vmem>>, %arg12: memref<1x1xf32, #tpu.memory_space<vmem>>, %arg13: memref<24x32xf32, #tpu.memory_space<vmem>>, %arg14: memref<1x32xf32, #tpu.memory_space<vmem>>, %arg15: memref<1x32xf32, #tpu.memory_space<vmem>>, %arg16: memref<32x5xf32, #tpu.memory_space<vmem>>, %arg17: memref<1x5xf32, #tpu.memory_space<vmem>>, %arg18: memref<2x5xf32, #tpu.memory_space<vmem>>) attributes {dimension_semantics = [#tpu.dimension_semantics<arbitrary>], iteration_bounds = array<i64: 1>, scalar_prefetch = 0 : i64, scratch_operands = 0 : i64, tpu.core_type = #tpu.core_type<tc>, window_params = [{pipeline_mode = #tpu.pipeline_mode<synchronous>, transform_indices = @transform_0, window_bounds = array<i64: 2, 16, 8>}, {pipeline_mode = #tpu.pipeline_mode<synchronous>, transform_indices = @transform_1, window_bounds = array<i64: 2, 16, 8>}, {pipeline_mode = #tpu.pipeline_mode<synchronous>, transform_indices = @transform_2, window_bounds = array<i64: 30, 128>}, {pipeline_mode = #tpu.pipeline_mode<synchronous>, transform_indices = @transform_3, window_bounds = array<i64: 1, 128>}, {pipeline_mode = #tpu.pipeline_mode<synchronous>, transform_indices = @transform_4, window_bounds = array<i64: 1, 128>}, {pipeline_mode = #tpu.pipeline_mode<synchronous>, transform_indices = @transform_5, window_bounds = array<i64: 128, 8>}, {pipeline_mode = #tpu.pipeline_mode<synchronous>, transform_indices = @transform_6, window_bounds = array<i64: 1, 1>}, {pipeline_mode = #tpu.pipeline_mode<synchronous>, transform_indices = @transform_7, window_bounds = array<i64: 16, 48>}, {pipeline_mode = #tpu.pipeline_mode<synchronous>, transform_indices = @transform_8, window_bounds = array<i64: 16, 1>}, {pipeline_mode = #tpu.pipeline_mode<synchronous>, transform_indices = @transform_9, window_bounds = array<i64: 16, 1>}, {pipeline_mode = #tpu.pipeline_mode<synchronous>, transform_indices = @transform_10, window_bounds = array<i64: 1, 16>}, {pipeline_mode = #tpu.pipeline_mode<synchronous>, transform_indices = @transform_11, window_bounds = array<i64: 1, 1>}, {pipeline_mode = #tpu.pipeline_mode<synchronous>, transform_indices = @transform_12, window_bounds = array<i64: 24, 32>}, {pipeline_mode = #tpu.pipeline_mode<synchronous>, transform_indices = @transform_13, window_bounds = array<i64: 1, 32>}, {pipeline_mode = #tpu.pipeline_mode<synchronous>, transform_indices = @transform_14, window_bounds = array<i64: 1, 32>}, {pipeline_mode = #tpu.pipeline_mode<synchronous>, transform_indices = @transform_15, window_bounds = array<i64: 32, 5>}, {pipeline_mode = #tpu.pipeline_mode<synchronous>, transform_indices = @transform_16, window_bounds = array<i64: 1, 5>}, {pipeline_mode = #tpu.pipeline_mode<synchronous>, transform_indices = @transform_17, window_bounds = array<i64: 2, 5>}]} {
    %cst = arith.constant 0.000000e+00 : f32
    %0 = vector.broadcast %cst : f32 to vector<16x1xf32>
    %cst_0 = arith.constant 0.000000e+00 : f32
    %1 = vector.broadcast %cst_0 : f32 to vector<1x10xf32>
    %c0 = arith.constant 0 : index
    %c0_1 = arith.constant 0 : index
    %c0_2 = arith.constant 0 : index
    %2 = vector.load %arg1[%c0, %c0_1, %c0_2] : memref<2x16x8xf32, #tpu.memory_space<vmem>>, vector<1x16x8xf32>
    %3 = vector.shape_cast %2 : vector<1x16x8xf32> to vector<16x8xf32>
    %4 = tpu.concatenate %0, %3, %0 in 1 : vector<16x1xf32>, vector<16x8xf32>, vector<16x1xf32> -> vector<16x10xf32>
    %5 = tpu.concatenate %1, %4, %1 in 0 : vector<1x10xf32>, vector<16x10xf32>, vector<1x10xf32> -> vector<18x10xf32>
    %c0_3 = arith.constant 0 : index
    %c0_4 = arith.constant 0 : index
    %c0_5 = arith.constant 0 : index
    %6 = vector.load %arg2[%c0_3, %c0_4, %c0_5] : memref<2x16x8xf32, #tpu.memory_space<vmem>>, vector<1x16x8xf32>
    %7 = vector.shape_cast %6 : vector<1x16x8xf32> to vector<16x8xf32>
    %8 = tpu.concatenate %0, %7, %0 in 1 : vector<16x1xf32>, vector<16x8xf32>, vector<16x1xf32> -> vector<16x10xf32>
    %c1 = arith.constant 1 : index
    %c0_6 = arith.constant 0 : index
    %c0_7 = arith.constant 0 : index
    %9 = vector.load %arg1[%c1, %c0_6, %c0_7] : memref<2x16x8xf32, #tpu.memory_space<vmem>>, vector<1x16x8xf32>
    %10 = vector.shape_cast %9 : vector<1x16x8xf32> to vector<16x8xf32>
    %11 = tpu.concatenate %0, %10, %0 in 1 : vector<16x1xf32>, vector<16x8xf32>, vector<16x1xf32> -> vector<16x10xf32>
    %12 = tpu.concatenate %1, %11, %1 in 0 : vector<1x10xf32>, vector<16x10xf32>, vector<1x10xf32> -> vector<18x10xf32>
    %c1_8 = arith.constant 1 : index
    %c0_9 = arith.constant 0 : index
    %c0_10 = arith.constant 0 : index
    %13 = vector.load %arg2[%c1_8, %c0_9, %c0_10] : memref<2x16x8xf32, #tpu.memory_space<vmem>>, vector<1x16x8xf32>
    %14 = vector.shape_cast %13 : vector<1x16x8xf32> to vector<16x8xf32>
    %15 = tpu.concatenate %0, %14, %0 in 1 : vector<16x1xf32>, vector<16x8xf32>, vector<16x1xf32> -> vector<16x10xf32>
    %16 = vector.extract_strided_slice %5 {offsets = [0, 0], sizes = [16, 10], strides = [1, 1]} : vector<18x10xf32> to vector<16x10xf32>
    %17 = vector.extract_strided_slice %12 {offsets = [0, 0], sizes = [16, 10], strides = [1, 1]} : vector<18x10xf32> to vector<16x10xf32>
    %18 = tpu.concatenate %16, %17 in 0 : vector<16x10xf32>, vector<16x10xf32> -> vector<32x10xf32>
    %19 = vector.extract_strided_slice %5 {offsets = [1, 0], sizes = [16, 10], strides = [1, 1]} : vector<18x10xf32> to vector<16x10xf32>
    %20 = vector.extract_strided_slice %12 {offsets = [1, 0], sizes = [16, 10], strides = [1, 1]} : vector<18x10xf32> to vector<16x10xf32>
    %21 = tpu.concatenate %19, %20 in 0 : vector<16x10xf32>, vector<16x10xf32> -> vector<32x10xf32>
    %22 = vector.extract_strided_slice %5 {offsets = [2, 0], sizes = [16, 10], strides = [1, 1]} : vector<18x10xf32> to vector<16x10xf32>
    %23 = vector.extract_strided_slice %12 {offsets = [2, 0], sizes = [16, 10], strides = [1, 1]} : vector<18x10xf32> to vector<16x10xf32>
    %24 = tpu.concatenate %22, %23 in 0 : vector<16x10xf32>, vector<16x10xf32> -> vector<32x10xf32>
    %25 = tpu.concatenate %18, %21, %24 in 1 : vector<32x10xf32>, vector<32x10xf32>, vector<32x10xf32> -> vector<32x30xf32>
    %c0_11 = arith.constant 0 : index
    %c0_12 = arith.constant 0 : index
    %26 = vector.load %arg3[%c0_11, %c0_12] : memref<30x128xf32, #tpu.memory_space<vmem>>, vector<30x128xf32>
    %cst_13 = arith.constant dense<0.000000e+00> : vector<32x128xf32>
    %27 = tpu.matmul %25, %26, %cst_13 {dimension_numbers = #tpu.dot_dimension_numbers<[1], [0], [0], [1], [0, 0, 1, 1], [], []>, precision = #tpu.contract_precision<fp32>} : vector<32x30xf32>, vector<30x128xf32>, vector<32x128xf32> -> vector<32x128xf32>
    %c0_14 = arith.constant 0 : index
    %c0_15 = arith.constant 0 : index
    %28 = vector.load %arg4[%c0_14, %c0_15] : memref<1x128xf32, #tpu.memory_space<vmem>>, vector<1x128xf32>
    %29 = vector.broadcast %28 : vector<1x128xf32> to vector<32x128xf32>
    %30 = arith.mulf %27, %29 : vector<32x128xf32>
    %c0_16 = arith.constant 0 : index
    %c0_17 = arith.constant 0 : index
    %31 = vector.load %arg5[%c0_16, %c0_17] : memref<1x128xf32, #tpu.memory_space<vmem>>, vector<1x128xf32>
    %32 = vector.broadcast %31 : vector<1x128xf32> to vector<32x128xf32>
    %33 = arith.addf %30, %32 : vector<32x128xf32>
    %cst_18 = arith.constant 0.000000e+00 : f32
    %34 = vector.broadcast %cst_18 : f32 to vector<32x128xf32>
    %35 = arith.maximumf %33, %34 : vector<32x128xf32>
    %c0_19 = arith.constant 0 : index
    %c0_20 = arith.constant 0 : index
    %36 = vector.load %arg6[%c0_19, %c0_20] : memref<128x8xf32, #tpu.memory_space<vmem>>, vector<128x8xf32>
    %cst_21 = arith.constant dense<0.000000e+00> : vector<32x8xf32>
    %37 = tpu.matmul %35, %36, %cst_21 {dimension_numbers = #tpu.dot_dimension_numbers<[1], [0], [0], [1], [0, 0, 1, 1], [], []>, precision = #tpu.contract_precision<fp32>} : vector<32x128xf32>, vector<128x8xf32>, vector<32x8xf32> -> vector<32x8xf32>
    %c0_22 = arith.constant 0 : index
    %c0_23 = arith.constant 0 : index
    %38 = vector.load %arg7[%c0_22, %c0_23] : memref<1x1xf32, #tpu.memory_space<vmem>>, vector<1x1xf32>
    %39 = vector.broadcast %38 : vector<1x1xf32> to vector<32x8xf32>
    %40 = arith.addf %37, %39 : vector<32x8xf32>
    %cst_24 = arith.constant 0.000000e+00 : f32
    %41 = vector.broadcast %cst_24 : f32 to vector<32x8xf32>
    %42 = arith.maximumf %40, %41 : vector<32x8xf32>
    %43 = vector.extract_strided_slice %8 {offsets = [0, 0], sizes = [16, 8], strides = [1, 1]} : vector<16x10xf32> to vector<16x8xf32>
    %44 = vector.extract_strided_slice %15 {offsets = [0, 0], sizes = [16, 8], strides = [1, 1]} : vector<16x10xf32> to vector<16x8xf32>
    %45 = tpu.concatenate %43, %44 in 1 : vector<16x8xf32>, vector<16x8xf32> -> vector<16x16xf32>
    %46 = vector.extract_strided_slice %8 {offsets = [0, 1], sizes = [16, 8], strides = [1, 1]} : vector<16x10xf32> to vector<16x8xf32>
    %47 = vector.extract_strided_slice %15 {offsets = [0, 1], sizes = [16, 8], strides = [1, 1]} : vector<16x10xf32> to vector<16x8xf32>
    %48 = tpu.concatenate %46, %47 in 1 : vector<16x8xf32>, vector<16x8xf32> -> vector<16x16xf32>
    %49 = vector.extract_strided_slice %8 {offsets = [0, 2], sizes = [16, 8], strides = [1, 1]} : vector<16x10xf32> to vector<16x8xf32>
    %50 = vector.extract_strided_slice %15 {offsets = [0, 2], sizes = [16, 8], strides = [1, 1]} : vector<16x10xf32> to vector<16x8xf32>
    %51 = tpu.concatenate %49, %50 in 1 : vector<16x8xf32>, vector<16x8xf32> -> vector<16x16xf32>
    %52 = tpu.concatenate %45, %48, %51 in 0 : vector<16x16xf32>, vector<16x16xf32>, vector<16x16xf32> -> vector<48x16xf32>
    %c0_25 = arith.constant 0 : index
    %c0_26 = arith.constant 0 : index
    %53 = vector.load %arg8[%c0_25, %c0_26] : memref<16x48xf32, #tpu.memory_space<vmem>>, vector<16x48xf32>
    %cst_27 = arith.constant dense<0.000000e+00> : vector<16x16xf32>
    %54 = tpu.matmul %53, %52, %cst_27 {dimension_numbers = #tpu.dot_dimension_numbers<[1], [0], [0], [1], [0, 0, 1, 1], [], []>, precision = #tpu.contract_precision<fp32>} : vector<16x48xf32>, vector<48x16xf32>, vector<16x16xf32> -> vector<16x16xf32>
    %c0_28 = arith.constant 0 : index
    %c0_29 = arith.constant 0 : index
    %55 = vector.load %arg9[%c0_28, %c0_29] : memref<16x1xf32, #tpu.memory_space<vmem>>, vector<16x1xf32>
    %56 = vector.broadcast %55 : vector<16x1xf32> to vector<16x16xf32>
    %57 = arith.mulf %54, %56 : vector<16x16xf32>
    %c0_30 = arith.constant 0 : index
    %c0_31 = arith.constant 0 : index
    %58 = vector.load %arg10[%c0_30, %c0_31] : memref<16x1xf32, #tpu.memory_space<vmem>>, vector<16x1xf32>
    %59 = vector.broadcast %58 : vector<16x1xf32> to vector<16x16xf32>
    %60 = arith.addf %57, %59 : vector<16x16xf32>
    %cst_32 = arith.constant 0.000000e+00 : f32
    %61 = vector.broadcast %cst_32 : f32 to vector<16x16xf32>
    %62 = arith.maximumf %60, %61 : vector<16x16xf32>
    %c0_33 = arith.constant 0 : index
    %c0_34 = arith.constant 0 : index
    %63 = vector.load %arg11[%c0_33, %c0_34] : memref<1x16xf32, #tpu.memory_space<vmem>>, vector<1x16xf32>
    %cst_35 = arith.constant dense<0.000000e+00> : vector<1x16xf32>
    %64 = tpu.matmul %63, %62, %cst_35 {dimension_numbers = #tpu.dot_dimension_numbers<[1], [0], [0], [1], [0, 0, 1, 1], [], []>, precision = #tpu.contract_precision<fp32>} : vector<1x16xf32>, vector<16x16xf32>, vector<1x16xf32> -> vector<1x16xf32>
    %c0_36 = arith.constant 0 : index
    %c0_37 = arith.constant 0 : index
    %65 = vector.load %arg12[%c0_36, %c0_37] : memref<1x1xf32, #tpu.memory_space<vmem>>, vector<1x1xf32>
    %66 = vector.broadcast %65 : vector<1x1xf32> to vector<1x16xf32>
    %67 = arith.addf %64, %66 : vector<1x16xf32>
    %cst_38 = arith.constant 0.000000e+00 : f32
    %68 = vector.broadcast %cst_38 : f32 to vector<1x16xf32>
    %69 = arith.maximumf %67, %68 : vector<1x16xf32>
    %cst_39 = arith.constant 0.000000e+00 : f32
    %70 = vector.broadcast %cst_39 : f32 to vector<1x8xf32>
    %71 = vector.extract_strided_slice %42 {offsets = [0, 0], sizes = [16, 8], strides = [1, 1]} : vector<32x8xf32> to vector<16x8xf32>
    %72 = vector.extract_strided_slice %69 {offsets = [0, 0], sizes = [1, 8], strides = [1, 1]} : vector<1x16xf32> to vector<1x8xf32>
    %73 = tpu.concatenate %70, %71, %72, %70 in 0 : vector<1x8xf32>, vector<16x8xf32>, vector<1x8xf32>, vector<1x8xf32> -> vector<19x8xf32>
    %74 = vector.extract_strided_slice %73 {offsets = [0, 0], sizes = [17, 8], strides = [1, 1]} : vector<19x8xf32> to vector<17x8xf32>
    %75 = vector.extract_strided_slice %73 {offsets = [1, 0], sizes = [17, 8], strides = [1, 1]} : vector<19x8xf32> to vector<17x8xf32>
    %76 = vector.extract_strided_slice %73 {offsets = [2, 0], sizes = [17, 8], strides = [1, 1]} : vector<19x8xf32> to vector<17x8xf32>
    %77 = tpu.concatenate %74, %75, %76 in 1 : vector<17x8xf32>, vector<17x8xf32>, vector<17x8xf32> -> vector<17x24xf32>
    %78 = vector.extract_strided_slice %42 {offsets = [16, 0], sizes = [16, 8], strides = [1, 1]} : vector<32x8xf32> to vector<16x8xf32>
    %79 = vector.extract_strided_slice %69 {offsets = [0, 8], sizes = [1, 8], strides = [1, 1]} : vector<1x16xf32> to vector<1x8xf32>
    %80 = tpu.concatenate %70, %78, %79, %70 in 0 : vector<1x8xf32>, vector<16x8xf32>, vector<1x8xf32>, vector<1x8xf32> -> vector<19x8xf32>
    %81 = vector.extract_strided_slice %80 {offsets = [0, 0], sizes = [17, 8], strides = [1, 1]} : vector<19x8xf32> to vector<17x8xf32>
    %82 = vector.extract_strided_slice %80 {offsets = [1, 0], sizes = [17, 8], strides = [1, 1]} : vector<19x8xf32> to vector<17x8xf32>
    %83 = vector.extract_strided_slice %80 {offsets = [2, 0], sizes = [17, 8], strides = [1, 1]} : vector<19x8xf32> to vector<17x8xf32>
    %84 = tpu.concatenate %81, %82, %83 in 1 : vector<17x8xf32>, vector<17x8xf32>, vector<17x8xf32> -> vector<17x24xf32>
    %85 = tpu.concatenate %77, %84 in 0 : vector<17x24xf32>, vector<17x24xf32> -> vector<34x24xf32>
    %c0_40 = arith.constant 0 : index
    %c0_41 = arith.constant 0 : index
    %86 = vector.load %arg13[%c0_40, %c0_41] : memref<24x32xf32, #tpu.memory_space<vmem>>, vector<24x32xf32>
    %cst_42 = arith.constant dense<0.000000e+00> : vector<34x32xf32>
    %87 = tpu.matmul %85, %86, %cst_42 {dimension_numbers = #tpu.dot_dimension_numbers<[1], [0], [0], [1], [0, 0, 1, 1], [], []>, precision = #tpu.contract_precision<fp32>} : vector<34x24xf32>, vector<24x32xf32>, vector<34x32xf32> -> vector<34x32xf32>
    %c0_43 = arith.constant 0 : index
    %c0_44 = arith.constant 0 : index
    %88 = vector.load %arg14[%c0_43, %c0_44] : memref<1x32xf32, #tpu.memory_space<vmem>>, vector<1x32xf32>
    %89 = vector.broadcast %88 : vector<1x32xf32> to vector<34x32xf32>
    %90 = arith.mulf %87, %89 : vector<34x32xf32>
    %c0_45 = arith.constant 0 : index
    %c0_46 = arith.constant 0 : index
    %91 = vector.load %arg15[%c0_45, %c0_46] : memref<1x32xf32, #tpu.memory_space<vmem>>, vector<1x32xf32>
    %92 = vector.broadcast %91 : vector<1x32xf32> to vector<34x32xf32>
    %93 = arith.addf %90, %92 : vector<34x32xf32>
    %cst_47 = arith.constant 0.000000e+00 : f32
    %94 = vector.broadcast %cst_47 : f32 to vector<34x32xf32>
    %95 = arith.maximumf %93, %94 : vector<34x32xf32>
    %96 = vector.extract_strided_slice %95 {offsets = [0, 0], sizes = [17, 32], strides = [1, 1]} : vector<34x32xf32> to vector<17x32xf32>
    %cst_48 = arith.constant dense<0.000000e+00> : vector<32xf32>
    %97 = vector.multi_reduction <add>, %96, %cst_48 [0] : vector<17x32xf32> to vector<32xf32>
    %98 = vector.shape_cast %97 : vector<32xf32> to vector<1x32xf32>
    %99 = vector.extract_strided_slice %95 {offsets = [17, 0], sizes = [17, 32], strides = [1, 1]} : vector<34x32xf32> to vector<17x32xf32>
    %cst_49 = arith.constant dense<0.000000e+00> : vector<32xf32>
    %100 = vector.multi_reduction <add>, %99, %cst_49 [0] : vector<17x32xf32> to vector<32xf32>
    %101 = vector.shape_cast %100 : vector<32xf32> to vector<1x32xf32>
    %102 = tpu.concatenate %98, %101 in 0 : vector<1x32xf32>, vector<1x32xf32> -> vector<2x32xf32>
    %cst_50 = arith.constant 0.0588235296 : f32
    %103 = vector.broadcast %cst_50 : f32 to vector<2x32xf32>
    %104 = arith.mulf %102, %103 : vector<2x32xf32>
    %c0_51 = arith.constant 0 : index
    %c0_52 = arith.constant 0 : index
    %105 = vector.load %arg16[%c0_51, %c0_52] : memref<32x5xf32, #tpu.memory_space<vmem>>, vector<32x5xf32>
    %cst_53 = arith.constant dense<0.000000e+00> : vector<2x5xf32>
    %106 = tpu.matmul %104, %105, %cst_53 {dimension_numbers = #tpu.dot_dimension_numbers<[1], [0], [0], [1], [0, 0, 1, 1], [], []>, precision = #tpu.contract_precision<fp32>} : vector<2x32xf32>, vector<32x5xf32>, vector<2x5xf32> -> vector<2x5xf32>
    %c0_54 = arith.constant 0 : index
    %c0_55 = arith.constant 0 : index
    %107 = vector.load %arg17[%c0_54, %c0_55] : memref<1x5xf32, #tpu.memory_space<vmem>>, vector<1x5xf32>
    %108 = vector.broadcast %107 : vector<1x5xf32> to vector<2x5xf32>
    %109 = arith.addf %106, %108 : vector<2x5xf32>
    %cst_56 = arith.constant dense<0xFF800000> : vector<2xf32>
    %110 = vector.multi_reduction <maximumf>, %109, %cst_56 [1] : vector<2x5xf32> to vector<2xf32>
    %111 = vector.shape_cast %110 : vector<2xf32> to vector<2x1xf32>
    %112 = vector.broadcast %111 : vector<2x1xf32> to vector<2x5xf32>
    %113 = arith.subf %109, %112 : vector<2x5xf32>
    %114 = math.exp %113 : vector<2x5xf32>
    %cst_57 = arith.constant dense<0.000000e+00> : vector<2xf32>
    %115 = vector.multi_reduction <add>, %114, %cst_57 [1] : vector<2x5xf32> to vector<2xf32>
    %116 = vector.shape_cast %115 : vector<2xf32> to vector<2x1xf32>
    %117 = vector.broadcast %116 : vector<2x1xf32> to vector<2x5xf32>
    %118 = arith.divf %114, %117 : vector<2x5xf32>
    %c0_58 = arith.constant 0 : index
    %c0_59 = arith.constant 0 : index
    %119 = vector.load %arg18[%c0_58, %c0_59] : memref<2x5xf32, #tpu.memory_space<vmem>>, vector<2x5xf32>
    tpu.vector_store %arg18[%c0_58, %c0_59], %118 {strides = array<i32>} : memref<2x5xf32, #tpu.memory_space<vmem>>, vector<2x5xf32>,
    return
  }
  func.func @transform_0(%arg0: i32) -> (i32, i32, i32) {
    %c0_i32 = arith.constant 0 : i32
    %c0_i32_0 = arith.constant 0 : i32
    %c0_i32_1 = arith.constant 0 : i32
    %c0_i32_2 = arith.constant 0 : i32
    return %c0_i32, %c0_i32_0, %c0_i32_1 : i32, i32, i32
  }
  func.func @transform_1(%arg0: i32) -> (i32, i32, i32) {
    %c0_i32 = arith.constant 0 : i32
    %c0_i32_0 = arith.constant 0 : i32
    %c0_i32_1 = arith.constant 0 : i32
    %c0_i32_2 = arith.constant 0 : i32
    return %c0_i32, %c0_i32_0, %c0_i32_1 : i32, i32, i32
  }
  func.func @transform_2(%arg0: i32) -> (i32, i32) {
    %c0_i32 = arith.constant 0 : i32
    %c0_i32_0 = arith.constant 0 : i32
    %c0_i32_1 = arith.constant 0 : i32
    return %c0_i32, %c0_i32_0 : i32, i32
  }
  func.func @transform_3(%arg0: i32) -> (i32, i32) {
    %c0_i32 = arith.constant 0 : i32
    %c0_i32_0 = arith.constant 0 : i32
    %c0_i32_1 = arith.constant 0 : i32
    return %c0_i32, %c0_i32_0 : i32, i32
  }
  func.func @transform_4(%arg0: i32) -> (i32, i32) {
    %c0_i32 = arith.constant 0 : i32
    %c0_i32_0 = arith.constant 0 : i32
    %c0_i32_1 = arith.constant 0 : i32
    return %c0_i32, %c0_i32_0 : i32, i32
  }
  func.func @transform_5(%arg0: i32) -> (i32, i32) {
    %c0_i32 = arith.constant 0 : i32
    %c0_i32_0 = arith.constant 0 : i32
    %c0_i32_1 = arith.constant 0 : i32
    return %c0_i32, %c0_i32_0 : i32, i32
  }
  func.func @transform_6(%arg0: i32) -> (i32, i32) {
    %c0_i32 = arith.constant 0 : i32
    %c0_i32_0 = arith.constant 0 : i32
    %c0_i32_1 = arith.constant 0 : i32
    return %c0_i32, %c0_i32_0 : i32, i32
  }
  func.func @transform_7(%arg0: i32) -> (i32, i32) {
    %c0_i32 = arith.constant 0 : i32
    %c0_i32_0 = arith.constant 0 : i32
    %c0_i32_1 = arith.constant 0 : i32
    return %c0_i32, %c0_i32_0 : i32, i32
  }
  func.func @transform_8(%arg0: i32) -> (i32, i32) {
    %c0_i32 = arith.constant 0 : i32
    %c0_i32_0 = arith.constant 0 : i32
    %c0_i32_1 = arith.constant 0 : i32
    return %c0_i32, %c0_i32_0 : i32, i32
  }
  func.func @transform_9(%arg0: i32) -> (i32, i32) {
    %c0_i32 = arith.constant 0 : i32
    %c0_i32_0 = arith.constant 0 : i32
    %c0_i32_1 = arith.constant 0 : i32
    return %c0_i32, %c0_i32_0 : i32, i32
  }
  func.func @transform_10(%arg0: i32) -> (i32, i32) {
    %c0_i32 = arith.constant 0 : i32
    %c0_i32_0 = arith.constant 0 : i32
    %c0_i32_1 = arith.constant 0 : i32
    return %c0_i32, %c0_i32_0 : i32, i32
  }
  func.func @transform_11(%arg0: i32) -> (i32, i32) {
    %c0_i32 = arith.constant 0 : i32
    %c0_i32_0 = arith.constant 0 : i32
    %c0_i32_1 = arith.constant 0 : i32
    return %c0_i32, %c0_i32_0 : i32, i32
  }
  func.func @transform_12(%arg0: i32) -> (i32, i32) {
    %c0_i32 = arith.constant 0 : i32
    %c0_i32_0 = arith.constant 0 : i32
    %c0_i32_1 = arith.constant 0 : i32
    return %c0_i32, %c0_i32_0 : i32, i32
  }
  func.func @transform_13(%arg0: i32) -> (i32, i32) {
    %c0_i32 = arith.constant 0 : i32
    %c0_i32_0 = arith.constant 0 : i32
    %c0_i32_1 = arith.constant 0 : i32
    return %c0_i32, %c0_i32_0 : i32, i32
  }
  func.func @transform_14(%arg0: i32) -> (i32, i32) {
    %c0_i32 = arith.constant 0 : i32
    %c0_i32_0 = arith.constant 0 : i32
    %c0_i32_1 = arith.constant 0 : i32
    return %c0_i32, %c0_i32_0 : i32, i32
  }
  func.func @transform_15(%arg0: i32) -> (i32, i32) {
    %c0_i32 = arith.constant 0 : i32
    %c0_i32_0 = arith.constant 0 : i32
    %c0_i32_1 = arith.constant 0 : i32
    return %c0_i32, %c0_i32_0 : i32, i32
  }
  func.func @transform_16(%arg0: i32) -> (i32, i32) {
    %c0_i32 = arith.constant 0 : i32
    %c0_i32_0 = arith.constant 0 : i32
    %c0_i32_1 = arith.constant 0 : i32
    return %c0_i32, %c0_i32_0 : i32, i32
  }
  func.func @transform_17(%arg0: i32) -> (i32, i32) {
    %c0_i32 = arith.constant 0 : i32
    %c0_i32_0 = arith.constant 0 : i32
    %c0_i32_1 = arith.constant 0 : i32
    return %c0_i32, %c0_i32_0 : i32, i32
  }
}

</mosaic_0001>

<llo_original>
// kernel: xcm_forward.1
$region0: #{xcm_forward.1}
  #allocation0 [shape = 'u32[]', space=smem, size = 0x4, offset = 0x4, fixed_abs, tag = 'smem constant byte address 0x4 - core index']
  #allocation1 [shape = 'u32[144,128]{1,0:T(1,128)}', space=vmem, size = 0x12000, scoped, tag = 'internal scratch']
  #allocation2 [shape = 'f32[1,1]{1,0:T(1,128)S(1)}', space=vmem, size = 0x200, scoped, tag = 'scoped memory for xcm_forward.1']
  #allocation3 [shape = 'f32[1,1]{1,0:T(1,128)S(1)}', space=vmem, size = 0x200, scoped, tag = 'scoped memory for xcm_forward.1']
  %s0 = inlined_call_operand.vmem [shape: f32[2,16,8], index: 0, kind: input, shape index: {}]
  %s1 = inlined_call_operand.vmem [shape: f32[2,16,8], index: 1, kind: input, shape index: {}]
  %s2 = inlined_call_operand.vmem [shape: f32[30,128], index: 2, kind: input, shape index: {}]
  %s3 = inlined_call_operand.vmem [shape: f32[1,128], index: 3, kind: input, shape index: {}]
  %s4 = inlined_call_operand.vmem [shape: f32[1,128], index: 4, kind: input, shape index: {}]
  %s5 = inlined_call_operand.vmem [shape: f32[128,8], index: 5, kind: input, shape index: {}]
  %s6 = inlined_call_operand.<no memory space> [shape: f32[1,1], index: 6, kind: input, shape index: {}]
  %s7 = inlined_call_operand.vmem [shape: f32[16,48], index: 7, kind: input, shape index: {}]
  %s8 = inlined_call_operand.vmem [shape: f32[16,1], index: 8, kind: input, shape index: {}]
  %s9 = inlined_call_operand.vmem [shape: f32[16,1], index: 9, kind: input, shape index: {}]
  %s10 = inlined_call_operand.vmem [shape: f32[1,16], index: 10, kind: input, shape index: {}]
  %s11 = inlined_call_operand.<no memory space> [shape: f32[1,1], index: 11, kind: input, shape index: {}]
  %s12 = inlined_call_operand.vmem [shape: f32[24,32], index: 12, kind: input, shape index: {}]
  %s13 = inlined_call_operand.vmem [shape: f32[1,32], index: 13, kind: input, shape index: {}]
  %s14 = inlined_call_operand.vmem [shape: f32[1,32], index: 14, kind: input, shape index: {}]
  %s15 = inlined_call_operand.vmem [shape: f32[32,5], index: 15, kind: input, shape index: {}]
  %s16 = inlined_call_operand.vmem [shape: f32[1,5], index: 16, kind: input, shape index: {}]
  %s17 = inlined_call_operand.hbm [shape: f32[2,5], index: 17, kind: output, shape index: {}]
  %s18 = sld [smem:[#allocation0]]
  $region78: #{xcm_forward.1} parent=0
    _
  %s20 = ssub.s32 1, %s18
  %s21 = scalar_select 0, %s20, %s18
  %v22 = vstv %s6
  %23 = vst [vmem:[#allocation2] sm:$0x1] %v22
  %v24 = vstv %s11
  %25 = vst [vmem:[#allocation3] sm:$0x1] %v24
  $region1: #{xcm_forward.1} parent=0
    #allocation4 [shape = 'u8[1024]{0}', space=vmem, size = 0x400, scoped, tag = 'output window, operand 0, single buffered']
    #allocation5 [shape = 's32[1]{0}', space=sflag, size = 0x4, scoped, tag = 'scoped memory for xcm_forward.1']
    %26 = vsyncpa [#allocation5], 0
    // Predicated region
    $region2: #{xcm_forward.1} parent=1 // pred_check
      _
    $region3: #{xcm_forward.1} parent=1 // pred_check_branch
      %28 = sbr.rel (0) target = $region5
    $region4: #{xcm_forward.1} parent=1 // pred_region
      _
    $region5: #{xcm_forward.1} parent=1 // pred_fallthru
      _
    // Predicated region
    $region6: #{xcm_forward.1} parent=1 // pred_check
      _
    $region7: #{xcm_forward.1} parent=1 // pred_check_branch
      %30 = sbr.rel (0) target = $region9
    $region8: #{xcm_forward.1} parent=1 // pred_region
      _
    $region9: #{xcm_forward.1} parent=1 // pred_fallthru
      _
    // Predicated region
    $region10: #{xcm_forward.1} parent=1 // pred_check
      _
    $region11: #{xcm_forward.1} parent=1 // pred_check_branch
      %32 = sbr.rel (0) target = $region13
    $region12: #{xcm_forward.1} parent=1 // pred_region
      _
    $region13: #{xcm_forward.1} parent=1 // pred_fallthru
      _
    // Predicated region
    $region14: #{xcm_forward.1} parent=1 // pred_check
      _
    $region15: #{xcm_forward.1} parent=1 // pred_check_branch
      %34 = sbr.rel (0) target = $region17
    $region16: #{xcm_forward.1} parent=1 // pred_region
      _
    $region17: #{xcm_forward.1} parent=1 // pred_fallthru
      _
    // Predicated region
    $region18: #{xcm_forward.1} parent=1 // pred_check
      _
    $region19: #{xcm_forward.1} parent=1 // pred_check_branch
      %36 = sbr.rel (0) target = $region21
    $region20: #{xcm_forward.1} parent=1 // pred_region
      _
    $region21: #{xcm_forward.1} parent=1 // pred_fallthru
      _
    // Predicated region
    $region22: #{xcm_forward.1} parent=1 // pred_check
      _
    $region23: #{xcm_forward.1} parent=1 // pred_check_branch
      %38 = sbr.rel (0) target = $region25
    $region24: #{xcm_forward.1} parent=1 // pred_region
      _
    $region25: #{xcm_forward.1} parent=1 // pred_fallthru
      _
    // Predicated region
    $region26: #{xcm_forward.1} parent=1 // pred_check
      _
    $region27: #{xcm_forward.1} parent=1 // pred_check_branch
      %40 = sbr.rel (0) target = $region29
    $region28: #{xcm_forward.1} parent=1 // pred_region
      _
    $region29: #{xcm_forward.1} parent=1 // pred_fallthru
      _
    // Predicated region
    $region30: #{xcm_forward.1} parent=1 // pred_check
      _
    $region31: #{xcm_forward.1} parent=1 // pred_check_branch
      %42 = sbr.rel (0) target = $region33
    $region32: #{xcm_forward.1} parent=1 // pred_region
      _
    $region33: #{xcm_forward.1} parent=1 // pred_fallthru
      _
    // Predicated region
    $region34: #{xcm_forward.1} parent=1 // pred_check
      _
    $region35: #{xcm_forward.1} parent=1 // pred_check_branch
      %44 = sbr.rel (0) target = $region37
    $region36: #{xcm_forward.1} parent=1 // pred_region
      _
    $region37: #{xcm_forward.1} parent=1 // pred_fallthru
      _
    // Predicated region
    $region38: #{xcm_forward.1} parent=1 // pred_check
      _
    $region39: #{xcm_forward.1} parent=1 // pred_check_branch
      %46 = sbr.rel (0) target = $region41
    $region40: #{xcm_forward.1} parent=1 // pred_region
      _
    $region41: #{xcm_forward.1} parent=1 // pred_fallthru
      _
    // Predicated region
    $region42: #{xcm_forward.1} parent=1 // pred_check
      _
    $region43: #{xcm_forward.1} parent=1 // pred_check_branch
      %48 = sbr.rel (0) target = $region45
    $region44: #{xcm_forward.1} parent=1 // pred_region
      _
    $region45: #{xcm_forward.1} parent=1 // pred_fallthru
      _
    // Predicated region
    $region46: #{xcm_forward.1} parent=1 // pred_check
      _
    $region47: #{xcm_forward.1} parent=1 // pred_check_branch
      %50 = sbr.rel (0) target = $region49
    $region48: #{xcm_forward.1} parent=1 // pred_region
      _
    $region49: #{xcm_forward.1} parent=1 // pred_fallthru
      _
    // Predicated region
    $region50: #{xcm_forward.1} parent=1 // pred_check
      _
    $region51: #{xcm_forward.1} parent=1 // pred_check_branch
      %52 = sbr.rel (0) target = $region53
    $region52: #{xcm_forward.1} parent=1 // pred_region
      _
    $region53: #{xcm_forward.1} parent=1 // pred_fallthru
      _
    // Predicated region
    $region54: #{xcm_forward.1} parent=1 // pred_check
      _
    $region55: #{xcm_forward.1} parent=1 // pred_check_branch
      %54 = sbr.rel (0) target = $region57
    $region56: #{xcm_forward.1} parent=1 // pred_region
      _
    $region57: #{xcm_forward.1} parent=1 // pred_fallthru
      _
    // Predicated region
    $region58: #{xcm_forward.1} parent=1 // pred_check
      _
    $region59: #{xcm_forward.1} parent=1 // pred_check_branch
      %56 = sbr.rel (0) target = $region61
    $region60: #{xcm_forward.1} parent=1 // pred_region
      _
    $region61: #{xcm_forward.1} parent=1 // pred_fallthru
      _
    // Predicated region
    $region62: #{xcm_forward.1} parent=1 // pred_check
      _
    $region63: #{xcm_forward.1} parent=1 // pred_check_branch
      %58 = sbr.rel (0) target = $region65
    $region64: #{xcm_forward.1} parent=1 // pred_region
      _
    $region65: #{xcm_forward.1} parent=1 // pred_fallthru
      _
    // Predicated region
    $region66: #{xcm_forward.1} parent=1 // pred_check
      _
    $region67: #{xcm_forward.1} parent=1 // pred_check_branch
      %60 = sbr.rel (0) target = $region69
    $region68: #{xcm_forward.1} parent=1 // pred_region
      _
    $region69: #{xcm_forward.1} parent=1 // pred_fallthru
      _
    %v61 = vld [vmem:[%s0] sm:$0xff]
    %v62 = vld [vmem:[%s0 + $0x8] sm:$0xff]
    %65 = vrot.lane.b32.xlu0 %v61, 1
    %v66 = vpop.permute.xlu0 %65
    %67 = vrot.lane.b32.xlu0 %v62, 1
    %v68 = vpop.permute.xlu0 %67
    %vm71 = vcmask 7168
    %v72 = vsel %vm71, 0.0, %v66
    %v73 = vsel %vm71, 0.0, %v68
    %vm74 = vcmask 72704
    %v75 = vsel %vm74, %v72, 0.0
    %v76 = vsel %vm74, %v73, 0.0
    %vm79 = vcmask 1040384
    %v80 = vrot.slane %v75, 7
    %v81 = vrot.slane %v76, 7
    %v82 = vsel %vm79, %v80, %v81
    %v86 = vsel %vm79, 0.0, %v80
    %v87 = vsel %vm79, %v81, 0.0
    %v88 = vld [vmem:[%s1] sm:$0xff]
    %v89 = vld [vmem:[%s1 + $0x8] sm:$0xff]
    %92 = vrot.lane.b32.xlu0 %v88, 1
    %v93 = vpop.permute.xlu0 %92
    %94 = vrot.lane.b32.xlu0 %v89, 1
    %v95 = vpop.permute.xlu0 %94
    %v98 = vsel %vm71, 0.0, %v93
    %v99 = vsel %vm71, 0.0, %v95
    %v100 = vsel %vm74, %v98, 0.0
    %v101 = vsel %vm74, %v99, 0.0
    %s102 = scalar_lea.vmem %s0, 16
    %v103 = vld [vmem:[%s102] sm:$0xff]
    %v104 = vld [vmem:[%s102 + $0x8] sm:$0xff]
    %107 = vrot.lane.b32.xlu0 %v103, 1
    %v108 = vpop.permute.xlu0 %107
    %109 = vrot.lane.b32.xlu0 %v104, 1
    %v110 = vpop.permute.xlu0 %109
    %v113 = vsel %vm71, 0.0, %v108
    %v114 = vsel %vm71, 0.0, %v110
    %v115 = vsel %vm74, %v113, 0.0
    %v116 = vsel %vm74, %v114, 0.0
    %v119 = vrot.slane %v115, 7
    %v120 = vrot.slane %v116, 7
    %v121 = vsel %vm79, %v119, %v120
    %v125 = vsel %vm79, 0.0, %v119
    %v126 = vsel %vm79, %v120, 0.0
    %s127 = scalar_lea.vmem %s1, 16
    %v128 = vld [vmem:[%s127] sm:$0xff]
    %v129 = vld [vmem:[%s127 + $0x8] sm:$0xff]
    %132 = vrot.lane.b32.xlu0 %v128, 1
    %v133 = vpop.permute.xlu0 %132
    %134 = vrot.lane.b32.xlu0 %v129, 1
    %v135 = vpop.permute.xlu0 %134
    %v138 = vsel %vm71, 0.0, %v133
    %v139 = vsel %vm71, 0.0, %v135
    %v140 = vsel %vm74, %v138, 0.0
    %v141 = vsel %vm74, %v139, 0.0
    %vm144 = vcmask 1046528
    %v145 = vrot.slane %v86, 1
    %v146 = vrot.slane %v82, 1
    %v147 = vsel %vm144, %v145, %v146
    %v148 = vrot.slane %v87, 1
    %v149 = vsel %vm144, %v146, %v148
    %v152 = vrot.slane %v125, 1
    %v153 = vrot.slane %v121, 1
    %v154 = vsel %vm144, %v152, %v153
    %v155 = vrot.slane %v126, 1
    %v156 = vsel %vm144, %v153, %v155
    %vm157 = vcmask 1045504
    %v158 = vrot.slane %v86, 2
    %v159 = vrot.slane %v82, 2
    %v160 = vsel %vm157, %v158, %v159
    %v161 = vrot.slane %v87, 2
    %v162 = vsel %vm157, %v159, %v161
    %v163 = vrot.slane %v125, 2
    %v164 = vrot.slane %v121, 2
    %v165 = vsel %vm157, %v163, %v164
    %v166 = vrot.slane %v126, 2
    %v167 = vsel %vm157, %v164, %v166
    %168 = vrot.lane.b32.xlu0 %v147, 10
    %v169 = vpop.permute.xlu0 %168
    %170 = vrot.lane.b32.xlu0 %v149, 10
    %v171 = vpop.permute.xlu0 %170
    %172 = vrot.lane.b32.xlu0 %v154, 10
    %v173 = vpop.permute.xlu0 %172
    %174 = vrot.lane.b32.xlu0 %v156, 10
    %v175 = vpop.permute.xlu0 %174
    %180 = vrot.lane.b32.xlu0 %v160, 20
    %v181 = vpop.permute.xlu0 %180
    %182 = vrot.lane.b32.xlu0 %v162, 20
    %v183 = vpop.permute.xlu0 %182
    %184 = vrot.lane.b32.xlu0 %v165, 20
    %v185 = vpop.permute.xlu0 %184
    %186 = vrot.lane.b32.xlu0 %v167, 20
    %v187 = vpop.permute.xlu0 %186
    %vm192 = vcmask 80896
    %v193 = vsel %vm192, %v86, %v169
    %v194 = vsel %vm192, %v82, %v171
    %v195 = vsel %vm192, %v125, %v173
    %v196 = vsel %vm192, %v121, %v175
    %vm197 = vcmask 162816
    %v198 = vsel %vm197, %v193, %v181
    %v199 = vsel %vm197, %v194, %v183
    %v200 = vsel %vm197, %v195, %v185
    %v201 = vsel %vm197, %v196, %v187
    %v202 = vld [vmem:[%s2] sm:$0xff]
    %v203 = vld [vmem:[%s2 + $0x8] sm:$0xff]
    %v204 = vld [vmem:[%s2 + $0x10] sm:$0xff]
    %v205 = vld [vmem:[%s2 + $0x18] sm:$0x3f]
    %vm206 = vcmask 244736
    %v208 = vsel %vm206, %v198, 0
    %v211 = vsel %vm206, %v199, 0
    %v214 = vsel %vm206, %v200, 0
    %v217 = vsel %vm206, %v201, 0
    %v220 = vsel %vm157, %v205, 0
    %222 = vmatprep.subr.mxu0 0.0
    %v223 = vand.u32 %v202, 4294901760
    %224 = vmatpush1.msra.mxu0 %v223
    %225 = vmatprep.subr.mxu0 0.0
    %v226 = vand.u32 %v203, 4294901760
    %227 = vmatpush1.msra.mxu0 %v226
    %228 = vmatprep.subr.mxu0 0.0
    %v229 = vand.u32 %v204, 4294901760
    %230 = vmatpush1.msra.mxu0 %v229
    %231 = vmatprep.subr.mxu0 0.0
    %v232 = vand.u32 %v220, 4294901760
    %233 = vmatpush1.msra.mxu0 %v232
    %234 = vmatprep.subr.mxu0 0.0
    %235 = vmatpush1.msra.mxu0 0.0
    %236 = vmatprep.subr.mxu0 0.0
    %237 = vmatpush1.msra.mxu0 0.0
    %238 = vmatprep.subr.mxu0 0.0
    %239 = vmatpush1.msra.mxu0 0.0
    %240 = vmatprep.subr.mxu0 0.0
    %241 = vmatpush1.msra.mxu0 0.0
    %242 = vmatprep.subr.mxu0 0.0
    %243 = vmatpush1.msra.mxu0 0.0
    %244 = vmatprep.subr.mxu0 0.0
    %245 = vmatpush1.msra.mxu0 0.0
    %246 = vmatprep.subr.mxu0 0.0
    %247 = vmatpush1.msra.mxu0 0.0
    %248 = vmatprep.subr.mxu0 0.0
    %249 = vmatpush1.msra.mxu0 0.0
    %250 = vmatprep.subr.mxu0 0.0
    %251 = vmatpush1.msra.mxu0 0.0
    %252 = vmatprep.subr.mxu0 0.0
    %253 = vmatpush1.msra.mxu0 0.0
    %254 = vmatprep.subr.mxu0 0.0
    %255 = vmatpush1.msra.mxu0 0.0
    %256 = vmatprep.subr.mxu0 0.0
    %257 = vmatpush1.msra.mxu0 0.0
    %258 = vmatprep.subr.mxu0 0.0
    %259 = vmatpush1.msra.mxu0 0.0
    %260 = vmatprep.subr.mxu0 0.0
    %261 = vmatpush1.msra.mxu0 0.0
    %262 = vmatprep.subr.mxu0 0.0
    %263 = vmatpush1.msra.mxu0 0.0
    %264 = vmatprep.subr.mxu0 0.0
    %265 = vmatpush1.msra.mxu0 0.0
    %266 = vmatprep.subr.mxu0 0.0
    %267 = vmatpush1.msra.mxu0 0.0
    %268 = vmatprep.subr.mxu0 0.0
    %269 = vmatpush1.msra.mxu0 0.0
    %270 = vmatprep.subr.mxu0 0.0
    %271 = vmatpush1.msra.mxu0 0.0
    %272 = vmatprep.subr.mxu0 0.0
    %273 = vmatpush1.msra.mxu0 0.0
    %274 = vmatprep.subr.mxu0 0.0
    %275 = vmatpush1.msra.mxu0 0.0
    %276 = vmatprep.subr.mxu0 0.0
    %277 = vmatpush1.msra.mxu0 0.0
    %278 = vmatprep.subr.mxu0 0.0
    %279 = vmatpush1.msra.mxu0 0.0
    %280 = vmatprep.subr.mxu0 0.0
    %281 = vmatpush1.msra.mxu0 0.0
    %282 = vmatprep.subr.mxu0 0.0
    %283 = vmatpush1.msra.mxu0 0.0
    %284 = vmatprep.subr.mxu0 0.0
    %285 = vmatpush1.msra.mxu0 0.0
    %286 = vmatprep.subr.mxu0 0.0
    %287 = vmatpush1.msra.mxu0 0.0
    %288 = vmatprep.subr.mxu0 0.0
    %289 = vmatpush1.msra.mxu0 0.0
    %290 = vmatprep.mubr.f32.mxu0 0.0
    %v291 = vand.u32 %v208, 4294901760
    %v292 = vsub.f32 %v208, %v291
    %v293 = vand.u32 %v292, 4294901760
    %v294 = vsub.f32 %v292, %v293
    %v295 = vand.u32 %v294, 4294901760
    %296 = vmatmul.mubr.f32.gmra.mrb[0].mxu0 %v295
    %v297 = vpop.f32.mrb[0].mxu0
    %v298 = vadd.f32 0.0, %v297
    %v299 = vpop.f32.mrb[0].mxu0
    %300 = vmatprep.mubr.f32.mxu0 0.0
    %v301 = vand.u32 %v211, 4294901760
    %v302 = vsub.f32 %v211, %v301
    %v303 = vand.u32 %v302, 4294901760
    %v304 = vsub.f32 %v302, %v303
    %v305 = vand.u32 %v304, 4294901760
    %306 = vmatmul.mubr.f32.gmra.mrb[0].mxu0 %v305
    %v307 = vpop.f32.mrb[0].mxu0
    %v308 = vadd.f32 0.0, %v307
    %v309 = vpop.f32.mrb[0].mxu0
    %310 = vmatprep.mubr.f32.mxu0 0.0
    %v311 = vand.u32 %v214, 4294901760
    %v312 = vsub.f32 %v214, %v311
    %v313 = vand.u32 %v312, 4294901760
    %v314 = vsub.f32 %v312, %v313
    %v315 = vand.u32 %v314, 4294901760
    %316 = vmatmul.mubr.f32.gmra.mrb[0].mxu0 %v315
    %v317 = vpop.f32.mrb[0].mxu0
    %v318 = vadd.f32 0.0, %v317
    %v319 = vpop.f32.mrb[0].mxu0
    %320 = vmatprep.mubr.f32.mxu0 0.0
    %v321 = vand.u32 %v217, 4294901760
    %v322 = vsub.f32 %v217, %v321
    %v323 = vand.u32 %v322, 4294901760
    %v324 = vsub.f32 %v322, %v323
    %v325 = vand.u32 %v324, 4294901760
    %326 = vmatmul.mubr.f32.gmra.mrb[0].mxu0 %v325
    %v327 = vpop.f32.mrb[0].mxu0
    %v328 = vadd.f32 0.0, %v327
    %v329 = vpop.f32.mrb[0].mxu0
    %330 = vdwg.mxu0
    %331 = vmatprep.subr.mxu0 0.0
    %v332 = vand.u32 %v202, 4294901760
    %v333 = vsub.f32 %v202, %v332
    %v334 = vand.u32 %v333, 4294901760
    %v335 = vsub.f32 %v333, %v334
    %v336 = vand.u32 %v335, 4294901760
    %337 = vmatpush1.msra.mxu0 %v336
    %338 = vmatprep.subr.mxu0 0.0
    %v339 = vand.u32 %v203, 4294901760
    %v340 = vsub.f32 %v203, %v339
    %v341 = vand.u32 %v340, 4294901760
    %v342 = vsub.f32 %v340, %v341
    %v343 = vand.u32 %v342, 4294901760
    %344 = vmatpush1.msra.mxu0 %v343
    %345 = vmatprep.subr.mxu0 0.0
    %v346 = vand.u32 %v204, 4294901760
    %v347 = vsub.f32 %v204, %v346
    %v348 = vand.u32 %v347, 4294901760
    %v349 = vsub.f32 %v347, %v348
    %v350 = vand.u32 %v349, 4294901760
    %351 = vmatpush1.msra.mxu0 %v350
    %352 = vmatprep.subr.mxu0 0.0
    %v353 = vand.u32 %v220, 4294901760
    %v354 = vsub.f32 %v220, %v353
    %v355 = vand.u32 %v354, 4294901760
    %v356 = vsub.f32 %v354, %v355
    %v357 = vand.u32 %v356, 4294901760
    %358 = vmatpush1.msra.mxu0 %v357
    %359 = vmatprep.subr.mxu0 0.0
    %360 = vmatpush1.msra.mxu0 0.0
    %361 = vmatprep.subr.mxu0 0.0
    %362 = vmatpush1.msra.mxu0 0.0
    %363 = vmatprep.subr.mxu0 0.0
    %364 = vmatpush1.msra.mxu0 0.0
    %365 = vmatprep.subr.mxu0 0.0
    %366 = vmatpush1.msra.mxu0 0.0
    %367 = vmatprep.subr.mxu0 0.0
    %368 = vmatpush1.msra.mxu0 0.0
    %369 = vmatprep.subr.mxu0 0.0
    %370 = vmatpush1.msra.mxu0 0.0
    %371 = vmatprep.subr.mxu0 0.0
    %372 = vmatpush1.msra.mxu0 0.0
    %373 = vmatprep.subr.mxu0 0.0
    %374 = vmatpush1.msra.mxu0 0.0
    %375 = vmatprep.subr.mxu0 0.0
    %376 = vmatpush1.msra.mxu0 0.0
    %377 = vmatprep.subr.mxu0 0.0
    %378 = vmatpush1.msra.mxu0 0.0
    %379 = vmatprep.subr.mxu0 0.0
    %380 = vmatpush1.msra.mxu0 0.0
    %381 = vmatprep.subr.mxu0 0.0
    %382 = vmatpush1.msra.mxu0 0.0
    %383 = vmatprep.subr.mxu0 0.0
    %384 = vmatpush1.msra.mxu0 0.0
    %385 = vmatprep.subr.mxu0 0.0
    %386 = vmatpush1.msra.mxu0 0.0
    %387 = vmatprep.subr.mxu0 0.0
    %388 = vmatpush1.msra.mxu0 0.0
    %389 = vmatprep.subr.mxu0 0.0
    %390 = vmatpush1.msra.mxu0 0.0
    %391 = vmatprep.subr.mxu0 0.0
    %392 = vmatpush1.msra.mxu0 0.0
    %393 = vmatprep.subr.mxu0 0.0
    %394 = vmatpush1.msra.mxu0 0.0
    %395 = vmatprep.subr.mxu0 0.0
    %396 = vmatpush1.msra.mxu0 0.0
    %397 = vmatprep.subr.mxu0 0.0
    %398 = vmatpush1.msra.mxu0 0.0
    %399 = vmatprep.subr.mxu0 0.0
    %400 = vmatpush1.msra.mxu0 0.0
    %401 = vmatprep.subr.mxu0 0.0
    %402 = vmatpush1.msra.mxu0 0.0
    %403 = vmatprep.subr.mxu0 0.0
    %404 = vmatpush1.msra.mxu0 0.0
    %405 = vmatprep.subr.mxu0 0.0
    %406 = vmatpush1.msra.mxu0 0.0
    %407 = vmatprep.subr.mxu0 0.0
    %408 = vmatpush1.msra.mxu0 0.0
    %409 = vmatprep.subr.mxu0 0.0
    %410 = vmatpush1.msra.mxu0 0.0
    %411 = vmatprep.subr.mxu0 0.0
    %412 = vmatpush1.msra.mxu0 0.0
    %413 = vmatprep.subr.mxu0 0.0
    %414 = vmatpush1.msra.mxu0 0.0
    %415 = vmatprep.mubr.f32.mxu0 0.0
    %v416 = vand.u32 %v208, 4294901760
    %417 = vmatmul.mubr.f32.gmra.mrb[0].mxu0 %v416
    %v418 = vpop.f32.mrb[0].mxu0
    %v419 = vadd.f32 %v298, %v418
    %v420 = vpop.f32.mrb[0].mxu0
    %421 = vmatprep.mubr.f32.mxu0 0.0
    %v422 = vand.u32 %v211, 4294901760
    %423 = vmatmul.mubr.f32.gmra.mrb[0].mxu0 %v422
    %v424 = vpop.f32.mrb[0].mxu0
    %v425 = vadd.f32 %v308, %v424
    %v426 = vpop.f32.mrb[0].mxu0
    %427 = vmatprep.mubr.f32.mxu0 0.0
    %v428 = vand.u32 %v214, 4294901760
    %429 = vmatmul.mubr.f32.gmra.mrb[0].mxu0 %v428
    %v430 = vpop.f32.mrb[0].mxu0
    %v431 = vadd.f32 %v318, %v430
    %v432 = vpop.f32.mrb[0].mxu0
    %433 = vmatprep.mubr.f32.mxu0 0.0
    %v434 = vand.u32 %v217, 4294901760
    %435 = vmatmul.mubr.f32.gmra.mrb[0].mxu0 %v434
    %v436 = vpop.f32.mrb[0].mxu0
    %v437 = vadd.f32 %v328, %v436
    %v438 = vpop.f32.mrb[0].mxu0
    %439 = vdwg.mxu0
    %440 = vmatprep.subr.mxu0 0.0
    %v441 = vand.u32 %v202, 4294901760
    %v442 = vsub.f32 %v202, %v441
    %443 = vmatpush1.msra.mxu0 %v442
    %444 = vmatprep.subr.mxu0 0.0
    %v445 = vand.u32 %v203, 4294901760
    %v446 = vsub.f32 %v203, %v445
    %447 = vmatpush1.msra.mxu0 %v446
    %448 = vmatprep.subr.mxu0 0.0
    %v449 = vand.u32 %v204, 4294901760
    %v450 = vsub.f32 %v204, %v449
    %451 = vmatpush1.msra.mxu0 %v450
    %452 = vmatprep.subr.mxu0 0.0
    %v453 = vand.u32 %v220, 4294901760
    %v454 = vsub.f32 %v220, %v453
    %455 = vmatpush1.msra.mxu0 %v454
    %456 = vmatprep.subr.mxu0 0.0
    %457 = vmatpush1.msra.mxu0 0.0
    %458 = vmatprep.subr.mxu0 0.0
    %459 = vmatpush1.msra.mxu0 0.0
    %460 = vmatprep.subr.mxu0 0.0
    %461 = vmatpush1.msra.mxu0 0.0
    %462 = vmatprep.subr.mxu0 0.0
    %463 = vmatpush1.msra.mxu0 0.0
    %464 = vmatprep.subr.mxu0 0.0
    %465 = vmatpush1.msra.mxu0 0.0
    %466 = vmatprep.subr.mxu0 0.0
    %467 = vmatpush1.msra.mxu0 0.0
    %468 = vmatprep.subr.mxu0 0.0
    %469 = vmatpush1.msra.mxu0 0.0
    %470 = vmatprep.subr.mxu0 0.0
    %471 = vmatpush1.msra.mxu0 0.0
    %472 = vmatprep.subr.mxu0 0.0
    %473 = vmatpush1.msra.mxu0 0.0
    %474 = vmatprep.subr.mxu0 0.0
    %475 = vmatpush1.msra.mxu0 0.0
    %476 = vmatprep.subr.mxu0 0.0
    %477 = vmatpush1.msra.mxu0 0.0
    %478 = vmatprep.subr.mxu0 0.0
    %479 = vmatpush1.msra.mxu0 0.0
    %480 = vmatprep.subr.mxu0 0.0
    %481 = vmatpush1.msra.mxu0 0.0
    %482 = vmatprep.subr.mxu0 0.0
    %483 = vmatpush1.msra.mxu0 0.0
    %484 = vmatprep.subr.mxu0 0.0
    %485 = vmatpush1.msra.mxu0 0.0
    %486 = vmatprep.subr.mxu0 0.0
    %487 = vmatpush1.msra.mxu0 0.0
    %488 = vmatprep.subr.mxu0 0.0
    %489 = vmatpush1.msra.mxu0 0.0
    %490 = vmatprep.subr.mxu0 0.0
    %491 = vmatpush1.msra.mxu0 0.0
    %492 = vmatprep.subr.mxu0 0.0
    %493 = vmatpush1.msra.mxu0 0.0
    %494 = vmatprep.subr.mxu0 0.0
    %495 = vmatpush1.msra.mxu0 0.0
    %496 = vmatprep.subr.mxu0 0.0
    %497 = vmatpush1.msra.mxu0 0.0
    %498 = vmatprep.subr.mxu0 0.0
    %499 = vmatpush1.msra.mxu0 0.0
    %500 = vmatprep.subr.mxu0 0.0
    %501 = vmatpush1.msra.mxu0 0.0
    %502 = vmatprep.subr.mxu0 0.0
    %503 = vmatpush1.msra.mxu0 0.0
    %504 = vmatprep.subr.mxu0 0.0
    %505 = vmatpush1.msra.mxu0 0.0
    %506 = vmatprep.subr.mxu0 0.0
    %507 = vmatpush1.msra.mxu0 0.0
    %508 = vmatprep.subr.mxu0 0.0
    %509 = vmatpush1.msra.mxu0 0.0
    %510 = vmatprep.subr.mxu0 0.0
    %511 = vmatpush1.msra.mxu0 0.0
    %512 = vmatprep.mubr.f32.mxu0 0.0
    %v513 = vand.u32 %v208, 4294901760
    %v514 = vsub.f32 %v208, %v513
    %515 = vmatmul.mubr.f32.gmra.mrb[0].mxu0 %v514
    %v516 = vpop.f32.mrb[0].mxu0
    %v517 = vadd.f32 %v419, %v516
    %v518 = vpop.f32.mrb[0].mxu0
    %519 = vmatprep.mubr.f32.mxu0 0.0
    %v520 = vand.u32 %v211, 4294901760
    %v521 = vsub.f32 %v211, %v520
    %522 = vmatmul.mubr.f32.gmra.mrb[0].mxu0 %v521
    %v523 = vpop.f32.mrb[0].mxu0
    %v524 = vadd.f32 %v425, %v523
    %v525 = vpop.f32.mrb[0].mxu0
    %526 = vmatprep.mubr.f32.mxu0 0.0
    %v527 = vand.u32 %v214, 4294901760
    %v528 = vsub.f32 %v214, %v527
    %529 = vmatmul.mubr.f32.gmra.mrb[0].mxu0 %v528
    %v530 = vpop.f32.mrb[0].mxu0
    %v531 = vadd.f32 %v431, %v530
    %v532 = vpop.f32.mrb[0].mxu0
    %533 = vmatprep.mubr.f32.mxu0 0.0
    %v534 = vand.u32 %v217, 4294901760
    %v535 = vsub.f32 %v217, %v534
    %536 = vmatmul.mubr.f32.gmra.mrb[0].mxu0 %v535
    %v537 = vpop.f32.mrb[0].mxu0
    %v538 = vadd.f32 %v437, %v537
    %v539 = vpop.f32.mrb[0].mxu0
    %540 = vdwg.mxu0
    %541 = vmatprep.subr.mxu0 0.0
    %v542 = vand.u32 %v202, 4294901760
    %543 = vmatpush1.msra.mxu0 %v542
    %544 = vmatprep.subr.mxu0 0.0
    %v545 = vand.u32 %v203, 4294901760
    %546 = vmatpush1.msra.mxu0 %v545
    %547 = vmatprep.subr.mxu0 0.0
    %v548 = vand.u32 %v204, 4294901760
    %549 = vmatpush1.msra.mxu0 %v548
    %550 = vmatprep.subr.mxu0 0.0
    %v551 = vand.u32 %v220, 4294901760
    %552 = vmatpush1.msra.mxu0 %v551
    %553 = vmatprep.subr.mxu0 0.0
    %554 = vmatpush1.msra.mxu0 0.0
    %555 = vmatprep.subr.mxu0 0.0
    %556 = vmatpush1.msra.mxu0 0.0
    %557 = vmatprep.subr.mxu0 0.0
    %558 = vmatpush1.msra.mxu0 0.0
    %559 = vmatprep.subr.mxu0 0.0
    %560 = vmatpush1.msra.mxu0 0.0
    %561 = vmatprep.subr.mxu0 0.0
    %562 = vmatpush1.msra.mxu0 0.0
    %563 = vmatprep.subr.mxu0 0.0
    %564 = vmatpush1.msra.mxu0 0.0
    %565 = vmatprep.subr.mxu0 0.0
    %566 = vmatpush1.msra.mxu0 0.0
    %567 = vmatprep.subr.mxu0 0.0
    %568 = vmatpush1.msra.mxu0 0.0
    %569 = vmatprep.subr.mxu0 0.0
    %570 = vmatpush1.msra.mxu0 0.0
    %571 = vmatprep.subr.mxu0 0.0
    %572 = vmatpush1.msra.mxu0 0.0
    %573 = vmatprep.subr.mxu0 0.0
    %574 = vmatpush1.msra.mxu0 0.0
    %575 = vmatprep.subr.mxu0 0.0
    %576 = vmatpush1.msra.mxu0 0.0
    %577 = vmatprep.subr.mxu0 0.0
    %578 = vmatpush1.msra.mxu0 0.0
    %579 = vmatprep.subr.mxu0 0.0
    %580 = vmatpush1.msra.mxu0 0.0
    %581 = vmatprep.subr.mxu0 0.0
    %582 = vmatpush1.msra.mxu0 0.0
    %583 = vmatprep.subr.mxu0 0.0
    %584 = vmatpush1.msra.mxu0 0.0
    %585 = vmatprep.subr.mxu0 0.0
    %586 = vmatpush1.msra.mxu0 0.0
    %587 = vmatprep.subr.mxu0 0.0
    %588 = vmatpush1.msra.mxu0 0.0
    %589 = vmatprep.subr.mxu0 0.0
    %590 = vmatpush1.msra.mxu0 0.0
    %591 = vmatprep.subr.mxu0 0.0
    %592 = vmatpush1.msra.mxu0 0.0
    %593 = vmatprep.subr.mxu0 0.0
    %594 = vmatpush1.msra.mxu0 0.0
    %595 = vmatprep.subr.mxu0 0.0
    %596 = vmatpush1.msra.mxu0 0.0
    %597 = vmatprep.subr.mxu0 0.0
    %598 = vmatpush1.msra.mxu0 0.0
    %599 = vmatprep.subr.mxu0 0.0
    %600 = vmatpush1.msra.mxu0 0.0
    %601 = vmatprep.subr.mxu0 0.0
    %602 = vmatpush1.msra.mxu0 0.0
    %603 = vmatprep.subr.mxu0 0.0
    %604 = vmatpush1.msra.mxu0 0.0
    %605 = vmatprep.subr.mxu0 0.0
    %606 = vmatpush1.msra.mxu0 0.0
    %607 = vmatprep.subr.mxu0 0.0
    %608 = vmatpush1.msra.mxu0 0.0
    %609 = vmatprep.mubr.f32.mxu0 0.0
    %v610 = vand.u32 %v208, 4294901760
    %v611 = vsub.f32 %v208, %v610
    %v612 = vand.u32 %v611, 4294901760
    %613 = vmatmul.mubr.f32.gmra.mrb[0].mxu0 %v612
    %v614 = vpop.f32.mrb[0].mxu0
    %v615 = vadd.f32 %v517, %v614
    %v616 = vpop.f32.mrb[0].mxu0
    %617 = vmatprep.mubr.f32.mxu0 0.0
    %v618 = vand.u32 %v211, 4294901760
    %v619 = vsub.f32 %v211, %v618
    %v620 = vand.u32 %v619, 4294901760
    %621 = vmatmul.mubr.f32.gmra.mrb[0].mxu0 %v620
    %v622 = vpop.f32.mrb[0].mxu0
    %v623 = vadd.f32 %v524, %v622
    %v624 = vpop.f32.mrb[0].mxu0
    %625 = vmatprep.mubr.f32.mxu0 0.0
    %v626 = vand.u32 %v214, 4294901760
    %v627 = vsub.f32 %v214, %v626
    %v628 = vand.u32 %v627, 4294901760
    %629 = vmatmul.mubr.f32.gmra.mrb[0].mxu0 %v628
    %v630 = vpop.f32.mrb[0].mxu0
    %v631 = vadd.f32 %v531, %v630
    %v632 = vpop.f32.mrb[0].mxu0
    %633 = vmatprep.mubr.f32.mxu0 0.0
    %v634 = vand.u32 %v217, 4294901760
    %v635 = vsub.f32 %v217, %v634
    %v636 = vand.u32 %v635, 4294901760
    %637 = vmatmul.mubr.f32.gmra.mrb[0].mxu0 %v636
    %v638 = vpop.f32.mrb[0].mxu0
    %v639 = vadd.f32 %v538, %v638
    %v640 = vpop.f32.mrb[0].mxu0
    %641 = vdwg.mxu0
    %642 = vmatprep.subr.mxu0 0.0
    %v643 = vand.u32 %v202, 4294901760
    %v644 = vsub.f32 %v202, %v643
    %v645 = vand.u32 %v644, 4294901760
    %646 = vmatpush1.msra.mxu0 %v645
    %647 = vmatprep.subr.mxu0 0.0
    %v648 = vand.u32 %v203, 4294901760
    %v649 = vsub.f32 %v203, %v648
    %v650 = vand.u32 %v649, 4294901760
    %651 = vmatpush1.msra.mxu0 %v650
    %652 = vmatprep.subr.mxu0 0.0
    %v653 = vand.u32 %v204, 4294901760
    %v654 = vsub.f32 %v204, %v653
    %v655 = vand.u32 %v654, 4294901760
    %656 = vmatpush1.msra.mxu0 %v655
    %657 = vmatprep.subr.mxu0 0.0
    %v658 = vand.u32 %v220, 4294901760
    %v659 = vsub.f32 %v220, %v658
    %v660 = vand.u32 %v659, 4294901760
    %661 = vmatpush1.msra.mxu0 %v660
    %662 = vmatprep.subr.mxu0 0.0
    %663 = vmatpush1.msra.mxu0 0.0
    %664 = vmatprep.subr.mxu0 0.0
    %665 = vmatpush1.msra.mxu0 0.0
    %666 = vmatprep.subr.mxu0 0.0
    %667 = vmatpush1.msra.mxu0 0.0
    %668 = vmatprep.subr.mxu0 0.0
    %669 = vmatpush1.msra.mxu0 0.0
    %670 = vmatprep.subr.mxu0 0.0
    %671 = vmatpush1.msra.mxu0 0.0
    %672 = vmatprep.subr.mxu0 0.0
    %673 = vmatpush1.msra.mxu0 0.0
    %674 = vmatprep.subr.mxu0 0.0
    %675 = vmatpush1.msra.mxu0 0.0
    %676 = vmatprep.subr.mxu0 0.0
    %677 = vmatpush1.msra.mxu0 0.0
    %678 = vmatprep.subr.mxu0 0.0
    %679 = vmatpush1.msra.mxu0 0.0
    %680 = vmatprep.subr.mxu0 0.0
    %681 = vmatpush1.msra.mxu0 0.0
    %682 = vmatprep.subr.mxu0 0.0
    %683 = vmatpush1.msra.mxu0 0.0
    %684 = vmatprep.subr.mxu0 0.0
    %685 = vmatpush1.msra.mxu0 0.0
    %686 = vmatprep.subr.mxu0 0.0
    %687 = vmatpush1.msra.mxu0 0.0
    %688 = vmatprep.subr.mxu0 0.0
    %689 = vmatpush1.msra.mxu0 0.0
    %690 = vmatprep.subr.mxu0 0.0
    %691 = vmatpush1.msra.mxu0 0.0
    %692 = vmatprep.subr.mxu0 0.0
    %693 = vmatpush1.msra.mxu0 0.0
    %694 = vmatprep.subr.mxu0 0.0
    %695 = vmatpush1.msra.mxu0 0.0
    %696 = vmatprep.subr.mxu0 0.0
    %697 = vmatpush1.msra.mxu0 0.0
    %698 = vmatprep.subr.mxu0 0.0
    %699 = vmatpush1.msra.mxu0 0.0
    %700 = vmatprep.subr.mxu0 0.0
    %701 = vmatpush1.msra.mxu0 0.0
    %702 = vmatprep.subr.mxu0 0.0
    %703 = vmatpush1.msra.mxu0 0.0
    %704 = vmatprep.subr.mxu0 0.0
    %705 = vmatpush1.msra.mxu0 0.0
    %706 = vmatprep.subr.mxu0 0.0
    %707 = vmatpush1.msra.mxu0 0.0
    %708 = vmatprep.subr.mxu0 0.0
    %709 = vmatpush1.msra.mxu0 0.0
    %710 = vmatprep.subr.mxu0 0.0
    %711 = vmatpush1.msra.mxu0 0.0
    %712 = vmatprep.subr.mxu0 0.0
    %713 = vmatpush1.msra.mxu0 0.0
    %714 = vmatprep.subr.mxu0 0.0
    %715 = vmatpush1.msra.mxu0 0.0
    %716 = vmatprep.subr.mxu0 0.0
    %717 = vmatpush1.msra.mxu0 0.0
    %718 = vmatprep.mubr.f32.mxu0 0.0
    %v719 = vand.u32 %v208, 4294901760
    %720 = vmatmul.mubr.f32.gmra.mrb[0].mxu0 %v719
    %v721 = vpop.f32.mrb[0].mxu0
    %v722 = vadd.f32 %v615, %v721
    %v723 = vpop.f32.mrb[0].mxu0
    %724 = vmatprep.mubr.f32.mxu0 0.0
    %v725 = vand.u32 %v211, 4294901760
    %726 = vmatmul.mubr.f32.gmra.mrb[0].mxu0 %v725
    %v727 = vpop.f32.mrb[0].mxu0
    %v728 = vadd.f32 %v623, %v727
    %v729 = vpop.f32.mrb[0].mxu0
    %730 = vmatprep.mubr.f32.mxu0 0.0
    %v731 = vand.u32 %v214, 4294901760
    %732 = vmatmul.mubr.f32.gmra.mrb[0].mxu0 %v731
    %v733 = vpop.f32.mrb[0].mxu0
    %v734 = vadd.f32 %v631, %v733
    %v735 = vpop.f32.mrb[0].mxu0
    %736 = vmatprep.mubr.f32.mxu0 0.0
    %v737 = vand.u32 %v217, 4294901760
    %738 = vmatmul.mubr.f32.gmra.mrb[0].mxu0 %v737
    %v739 = vpop.f32.mrb[0].mxu0
    %v740 = vadd.f32 %v639, %v739
    %v741 = vpop.f32.mrb[0].mxu0
    %742 = vdwg.mxu0
    %743 = vmatprep.subr.mxu0 0.0
    %v744 = vand.u32 %v202, 4294901760
    %745 = vmatpush1.msra.mxu0 %v744
    %746 = vmatprep.subr.mxu0 0.0
    %v747 = vand.u32 %v203, 4294901760
    %748 = vmatpush1.msra.mxu0 %v747
    %749 = vmatprep.subr.mxu0 0.0
    %v750 = vand.u32 %v204, 4294901760
    %751 = vmatpush1.msra.mxu0 %v750
    %752 = vmatprep.subr.mxu0 0.0
    %v753 = vand.u32 %v220, 4294901760
    %754 = vmatpush1.msra.mxu0 %v753
    %755 = vmatprep.subr.mxu0 0.0
    %756 = vmatpush1.msra.mxu0 0.0
    %757 = vmatprep.subr.mxu0 0.0
    %758 = vmatpush1.msra.mxu0 0.0
    %759 = vmatprep.subr.mxu0 0.0
    %760 = vmatpush1.msra.mxu0 0.0
    %761 = vmatprep.subr.mxu0 0.0
    %762 = vmatpush1.msra.mxu0 0.0
    %763 = vmatprep.subr.mxu0 0.0
    %764 = vmatpush1.msra.mxu0 0.0
    %765 = vmatprep.subr.mxu0 0.0
    %766 = vmatpush1.msra.mxu0 0.0
    %767 = vmatprep.subr.mxu0 0.0
    %768 = vmatpush1.msra.mxu0 0.0
    %769 = vmatprep.subr.mxu0 0.0
    %770 = vmatpush1.msra.mxu0 0.0
    %771 = vmatprep.subr.mxu0 0.0
    %772 = vmatpush1.msra.mxu0 0.0
    %773 = vmatprep.subr.mxu0 0.0
    %774 = vmatpush1.msra.mxu0 0.0
    %775 = vmatprep.subr.mxu0 0.0
    %776 = vmatpush1.msra.mxu0 0.0
    %777 = vmatprep.subr.mxu0 0.0
    %778 = vmatpush1.msra.mxu0 0.0
    %779 = vmatprep.subr.mxu0 0.0
    %780 = vmatpush1.msra.mxu0 0.0
    %781 = vmatprep.subr.mxu0 0.0
    %782 = vmatpush1.msra.mxu0 0.0
    %783 = vmatprep.subr.mxu0 0.0
    %784 = vmatpush1.msra.mxu0 0.0
    %785 = vmatprep.subr.mxu0 0.0
    %786 = vmatpush1.msra.mxu0 0.0
    %787 = vmatprep.subr.mxu0 0.0
    %788 = vmatpush1.msra.mxu0 0.0
    %789 = vmatprep.subr.mxu0 0.0
    %790 = vmatpush1.msra.mxu0 0.0
    %791 = vmatprep.subr.mxu0 0.0
    %792 = vmatpush1.msra.mxu0 0.0
    %793 = vmatprep.subr.mxu0 0.0
    %794 = vmatpush1.msra.mxu0 0.0
    %795 = vmatprep.subr.mxu0 0.0
    %796 = vmatpush1.msra.mxu0 0.0
    %797 = vmatprep.subr.mxu0 0.0
    %798 = vmatpush1.msra.mxu0 0.0
    %799 = vmatprep.subr.mxu0 0.0
    %800 = vmatpush1.msra.mxu0 0.0
    %801 = vmatprep.subr.mxu0 0.0
    %802 = vmatpush1.msra.mxu0 0.0
    %803 = vmatprep.subr.mxu0 0.0
    %804 = vmatpush1.msra.mxu0 0.0
    %805 = vmatprep.subr.mxu0 0.0
    %806 = vmatpush1.msra.mxu0 0.0
    %807 = vmatprep.subr.mxu0 0.0
    %808 = vmatpush1.msra.mxu0 0.0
    %809 = vmatprep.subr.mxu0 0.0
    %810 = vmatpush1.msra.mxu0 0.0
    %811 = vmatprep.mubr.f32.mxu0 0.0
    %v812 = vand.u32 %v208, 4294901760
    %813 = vmatmul.mubr.f32.gmra.mrb[0].mxu0 %v812
    %v814 = vpop.f32.mrb[0].mxu0
    %v815 = vadd.f32 %v722, %v814
    %v816 = vpop.f32.mrb[0].mxu0
    %817 = vmatprep.mubr.f32.mxu0 0.0
    %v818 = vand.u32 %v211, 4294901760
    %819 = vmatmul.mubr.f32.gmra.mrb[0].mxu0 %v818
    %v820 = vpop.f32.mrb[0].mxu0
    %v821 = vadd.f32 %v728, %v820
    %v822 = vpop.f32.mrb[0].mxu0
    %823 = vmatprep.mubr.f32.mxu0 0.0
    %v824 = vand.u32 %v214, 4294901760
    %825 = vmatmul.mubr.f32.gmra.mrb[0].mxu0 %v824
    %v826 = vpop.f32.mrb[0].mxu0
    %v827 = vadd.f32 %v734, %v826
    %v828 = vpop.f32.mrb[0].mxu0
    %829 = vmatprep.mubr.f32.mxu0 0.0
    %v830 = vand.u32 %v217, 4294901760
    %831 = vmatmul.mubr.f32.gmra.mrb[0].mxu0 %v830
    %v832 = vpop.f32.mrb[0].mxu0
    %v833 = vadd.f32 %v740, %v832
    %v834 = vpop.f32.mrb[0].mxu0
    %835 = vdwg.mxu0
    %v836 = vld [vmem:[%s3] sm:$0x1]
    %v838 = vlaneseq
    %v839 = vshrl.u32 %v838, 7
    %v840 = vsub.s32 0, %v839
    %v841 = vrot.slane %v836, %v840
    %v843 = vmul.f32 %v815, %v841
    %v844 = vmul.f32 %v821, %v841
    %v845 = vmul.f32 %v827, %v841
    %v846 = vmul.f32 %v833, %v841
    %v847 = vld [vmem:[%s4] sm:$0x1]
    %v849 = vlaneseq
    %v850 = vshrl.u32 %v849, 7
    %v851 = vsub.s32 0, %v850
    %v852 = vrot.slane %v847, %v851
    %v854 = vadd.f32 %v843, %v852
    %v855 = vadd.f32 %v844, %v852
    %v856 = vadd.f32 %v845, %v852
    %v857 = vadd.f32 %v846, %v852
    %v858 = vmax.f32 %v854, 0.0
    %v859 = vmax.f32 %v855, 0.0
    %v860 = vmax.f32 %v856, 0.0
    %v861 = vmax.f32 %v857, 0.0
    %v862 = vld [vmem:[%s5] sm:$0xff]
    %v863 = vld [vmem:[%s5 + $0x8] sm:$0xff]
    %v864 = vld [vmem:[%s5 + $0x10] sm:$0xff]
    %v865 = vld [vmem:[%s5 + $0x18] sm:$0xff]
    %v866 = vld [vmem:[%s5 + $0x20] sm:$0xff]
    %v867 = vld [vmem:[%s5 + $0x28] sm:$0xff]
    %v868 = vld [vmem:[%s5 + $0x30] sm:$0xff]
    %v869 = vld [vmem:[%s5 + $0x38] sm:$0xff]
    %v870 = vld [vmem:[%s5 + $0x40] sm:$0xff]
    %v871 = vld [vmem:[%s5 + $0x48] sm:$0xff]
    %v872 = vld [vmem:[%s5 + $0x50] sm:$0xff]
    %v873 = vld [vmem:[%s5 + $0x58] sm:$0xff]
    %v874 = vld [vmem:[%s5 + $0x60] sm:$0xff]
    %v875 = vld [vmem:[%s5 + $0x68] sm:$0xff]
    %v876 = vld [vmem:[%s5 + $0x70] sm:$0xff]
    %v877 = vld [vmem:[%s5 + $0x78] sm:$0xff]
    %v878 = vld [vmem:[#allocation2] sm:$0x1]
    %v880 = vlaneseq
    %v881 = vshrl.u32 %v880, 7
    %v882 = vsub.s32 0, %v881
    %v883 = vrot.slane %v878, %v882
    %884 = vset.pattern.permute.xlu0 0
    %885 = vperm.xlu0 %884, %v883
    %v886 = vpop.permute.xlu0 %885
    %888 = vmatprep.subr.mxu0 0.0
    %v889 = vand.u32 %v862, 4294901760
    %890 = vmatpush1.msra.mxu0 %v889
    %891 = vmatprep.subr.mxu0 0.0
    %v892 = vand.u32 %v863, 4294901760
    %893 = vmatpush1.msra.mxu0 %v892
    %894 = vmatprep.subr.mxu0 0.0
    %v895 = vand.u32 %v864, 4294901760
    %896 = vmatpush1.msra.mxu0 %v895
    %897 = vmatprep.subr.mxu0 0.0
    %v898 = vand.u32 %v865, 4294901760
    %899 = vmatpush1.msra.mxu0 %v898
    %900 = vmatprep.subr.mxu0 0.0
    %v901 = vand.u32 %v866, 4294901760
    %902 = vmatpush1.msra.mxu0 %v901
    %903 = vmatprep.subr.mxu0 0.0
    %v904 = vand.u32 %v867, 4294901760
    %905 = vmatpush1.msra.mxu0 %v904
    %906 = vmatprep.subr.mxu0 0.0
    %v907 = vand.u32 %v868, 4294901760
    %908 = vmatpush1.msra.mxu0 %v907
    %909 = vmatprep.subr.mxu0 0.0
    %v910 = vand.u32 %v869, 4294901760
    %911 = vmatpush1.msra.mxu0 %v910
    %912 = vmatprep.subr.mxu0 0.0
    %v913 = vand.u32 %v870, 4294901760
    %914 = vmatpush1.msra.mxu0 %v913
    %915 = vmatprep.subr.mxu0 0.0
    %v916 = vand.u32 %v871, 4294901760
    %917 = vmatpush1.msra.mxu0 %v916
    %918 = vmatprep.subr.mxu0 0.0
    %v919 = vand.u32 %v872, 4294901760
    %920 = vmatpush1.msra.mxu0 %v919
    %921 = vmatprep.subr.mxu0 0.0
    %v922 = vand.u32 %v873, 4294901760
    %923 = vmatpush1.msra.mxu0 %v922
    %924 = vmatprep.subr.mxu0 0.0
    %v925 = vand.u32 %v874, 4294901760
    %926 = vmatpush1.msra.mxu0 %v925
    %927 = vmatprep.subr.mxu0 0.0
    %v928 = vand.u32 %v875, 4294901760
    %929 = vmatpush1.msra.mxu0 %v928
    %930 = vmatprep.subr.mxu0 0.0
    %v931 = vand.u32 %v876, 4294901760
    %932 = vmatpush1.msra.mxu0 %v931
    %933 = vmatprep.subr.mxu0 0.0
    %v934 = vand.u32 %v877, 4294901760
    %935 = vmatpush1.msra.mxu0 %v934
    %936 = vmatprep.subr.mxu0 0.0
    %937 = vmatpush1.msra.mxu0 0.0
    %938 = vmatprep.subr.mxu0 0.0
    %939 = vmatpush1.msra.mxu0 0.0
    %940 = vmatprep.subr.mxu0 0.0
    %941 = vmatpush1.msra.mxu0 0.0
    %942 = vmatprep.subr.mxu0 0.0
    %943 = vmatpush1.msra.mxu0 0.0
    %944 = vmatprep.subr.mxu0 0.0
    %945 = vmatpush1.msra.mxu0 0.0
    %946 = vmatprep.subr.mxu0 0.0
    %947 = vmatpush1.msra.mxu0 0.0
    %948 = vmatprep.subr.mxu0 0.0
    %949 = vmatpush1.msra.mxu0 0.0
    %950 = vmatprep.subr.mxu0 0.0
    %951 = vmatpush1.msra.mxu0 0.0
    %952 = vmatprep.subr.mxu0 0.0
    %953 = vmatpush1.msra.mxu0 0.0
    %954 = vmatprep.subr.mxu0 0.0
    %955 = vmatpush1.msra.mxu0 0.0
    %956 = vmatprep.subr.mxu0 0.0
    %957 = vmatpush1.msra.mxu0 0.0
    %958 = vmatprep.subr.mxu0 0.0
    %959 = vmatpush1.msra.mxu0 0.0
    %960 = vmatprep.subr.mxu0 0.0
    %961 = vmatpush1.msra.mxu0 0.0
    %962 = vmatprep.subr.mxu0 0.0
    %963 = vmatpush1.msra.mxu0 0.0
    %964 = vmatprep.subr.mxu0 0.0
    %965 = vmatpush1.msra.mxu0 0.0
    %966 = vmatprep.subr.mxu0 0.0
    %967 = vmatpush1.msra.mxu0 0.0
    %968 = vmatprep.mubr.f32.mxu0 0.0
    %v969 = vand.u32 %v858, 4294901760
    %v970 = vsub.f32 %v858, %v969
    %v971 = vand.u32 %v970, 4294901760
    %v972 = vsub.f32 %v970, %v971
    %v973 = vand.u32 %v972, 4294901760
    %974 = vmatmul.mubr.f32.gmra.mrb[0].mxu0 %v973
    %v975 = vpop.f32.mrb[0].mxu0
    %v976 = vadd.f32 %v886, %v975
    %v977 = vpop.f32.mrb[0].mxu0
    %978 = vmatprep.mubr.f32.mxu0 0.0
    %v979 = vand.u32 %v859, 4294901760
    %v980 = vsub.f32 %v859, %v979
    %v981 = vand.u32 %v980, 4294901760
    %v982 = vsub.f32 %v980, %v981
    %v983 = vand.u32 %v982, 4294901760
    %984 = vmatmul.mubr.f32.gmra.mrb[0].mxu0 %v983
    %v985 = vpop.f32.mrb[0].mxu0
    %v986 = vadd.f32 %v886, %v985
    %v987 = vpop.f32.mrb[0].mxu0
    %988 = vmatprep.mubr.f32.mxu0 0.0
    %v989 = vand.u32 %v860, 4294901760
    %v990 = vsub.f32 %v860, %v989
    %v991 = vand.u32 %v990, 4294901760
    %v992 = vsub.f32 %v990, %v991
    %v993 = vand.u32 %v992, 4294901760
    %994 = vmatmul.mubr.f32.gmra.mrb[0].mxu0 %v993
    %v995 = vpop.f32.mrb[0].mxu0
    %v996 = vadd.f32 %v886, %v995
    %v997 = vpop.f32.mrb[0].mxu0
    %998 = vmatprep.mubr.f32.mxu0 0.0
    %v999 = vand.u32 %v861, 4294901760
    %v1000 = vsub.f32 %v861, %v999
    %v1001 = vand.u32 %v1000, 4294901760
    %v1002 = vsub.f32 %v1000, %v1001
    %v1003 = vand.u32 %v1002, 4294901760
    %1004 = vmatmul.mubr.f32.gmra.mrb[0].mxu0 %v1003
    %v1005 = vpop.f32.mrb[0].mxu0
    %v1006 = vadd.f32 %v886, %v1005
    %v1007 = vpop.f32.mrb[0].mxu0
    %1008 = vdwg.mxu0
    %1009 = vmatprep.subr.mxu0 0.0
    %v1010 = vand.u32 %v862, 4294901760
    %v1011 = vsub.f32 %v862, %v1010
    %v1012 = vand.u32 %v1011, 4294901760
    %v1013 = vsub.f32 %v1011, %v1012
    %v1014 = vand.u32 %v1013, 4294901760
    %1015 = vmatpush1.msra.mxu0 %v1014
    %1016 = vmatprep.subr.mxu0 0.0
    %v1017 = vand.u32 %v863, 4294901760
    %v1018 = vsub.f32 %v863, %v1017
    %v1019 = vand.u32 %v1018, 4294901760
    %v1020 = vsub.f32 %v1018, %v1019
    %v1021 = vand.u32 %v1020, 4294901760
    %1022 = vmatpush1.msra.mxu0 %v1021
    %1023 = vmatprep.subr.mxu0 0.0
    %v1024 = vand.u32 %v864, 4294901760
    %v1025 = vsub.f32 %v864, %v1024
    %v1026 = vand.u32 %v1025, 4294901760
    %v1027 = vsub.f32 %v1025, %v1026
    %v1028 = vand.u32 %v1027, 4294901760
    %1029 = vmatpush1.msra.mxu0 %v1028
    %1030 = vmatprep.subr.mxu0 0.0
    %v1031 = vand.u32 %v865, 4294901760
    %v1032 = vsub.f32 %v865, %v1031
    %v1033 = vand.u32 %v1032, 4294901760
    %v1034 = vsub.f32 %v1032, %v1033
    %v1035 = vand.u32 %v1034, 4294901760
    %1036 = vmatpush1.msra.mxu0 %v1035
    %1037 = vmatprep.subr.mxu0 0.0
    %v1038 = vand.u32 %v866, 4294901760
    %v1039 = vsub.f32 %v866, %v1038
    %v1040 = vand.u32 %v1039, 4294901760
    %v1041 = vsub.f32 %v1039, %v1040
    %v1042 = vand.u32 %v1041, 4294901760
    %1043 = vmatpush1.msra.mxu0 %v1042
    %1044 = vmatprep.subr.mxu0 0.0
    %v1045 = vand.u32 %v867, 4294901760
    %v1046 = vsub.f32 %v867, %v1045
    %v1047 = vand.u32 %v1046, 4294901760
    %v1048 = vsub.f32 %v1046, %v1047
    %v1049 = vand.u32 %v1048, 4294901760
    %1050 = vmatpush1.msra.mxu0 %v1049
    %1051 = vmatprep.subr.mxu0 0.0
    %v1052 = vand.u32 %v868, 4294901760
    %v1053 = vsub.f32 %v868, %v1052
    %v1054 = vand.u32 %v1053, 4294901760
    %v1055 = vsub.f32 %v1053, %v1054
    %v1056 = vand.u32 %v1055, 4294901760
    %1057 = vmatpush1.msra.mxu0 %v1056
    %1058 = vmatprep.subr.mxu0 0.0
    %v1059 = vand.u32 %v869, 4294901760
    %v1060 = vsub.f32 %v869, %v1059
    %v1061 = vand.u32 %v1060, 4294901760
    %v1062 = vsub.f32 %v1060, %v1061
    %v1063 = vand.u32 %v1062, 4294901760
    %1064 = vmatpush1.msra.mxu0 %v1063
    %1065 = vmatprep.subr.mxu0 0.0
    %v1066 = vand.u32 %v870, 4294901760
    %v1067 = vsub.f32 %v870, %v1066
    %v1068 = vand.u32 %v1067, 4294901760
    %v1069 = vsub.f32 %v1067, %v1068
    %v1070 = vand.u32 %v1069, 4294901760
    %1071 = vmatpush1.msra.mxu0 %v1070
    %1072 = vmatprep.subr.mxu0 0.0
    %v1073 = vand.u32 %v871, 4294901760
    %v1074 = vsub.f32 %v871, %v1073
    %v1075 = vand.u32 %v1074, 4294901760
    %v1076 = vsub.f32 %v1074, %v1075
    %v1077 = vand.u32 %v1076, 4294901760
    %1078 = vmatpush1.msra.mxu0 %v1077
    %1079 = vmatprep.subr.mxu0 0.0
    %v1080 = vand.u32 %v872, 4294901760
    %v1081 = vsub.f32 %v872, %v1080
    %v1082 = vand.u32 %v1081, 4294901760
    %v1083 = vsub.f32 %v1081, %v1082
    %v1084 = vand.u32 %v1083, 4294901760
    %1085 = vmatpush1.msra.mxu0 %v1084
    %1086 = vmatprep.subr.mxu0 0.0
    %v1087 = vand.u32 %v873, 4294901760
    %v1088 = vsub.f32 %v873, %v1087
    %v1089 = vand.u32 %v1088, 4294901760
    %v1090 = vsub.f32 %v1088, %v1089
    %v1091 = vand.u32 %v1090, 4294901760
    %1092 = vmatpush1.msra.mxu0 %v1091
    %1093 = vmatprep.subr.mxu0 0.0
    %v1094 = vand.u32 %v874, 4294901760
    %v1095 = vsub.f32 %v874, %v1094
    %v1096 = vand.u32 %v1095, 4294901760
    %v1097 = vsub.f32 %v1095, %v1096
    %v1098 = vand.u32 %v1097, 4294901760
    %1099 = vmatpush1.msra.mxu0 %v1098
    %1100 = vmatprep.subr.mxu0 0.0
    %v1101 = vand.u32 %v875, 4294901760
    %v1102 = vsub.f32 %v875, %v1101
    %v1103 = vand.u32 %v1102, 4294901760
    %v1104 = vsub.f32 %v1102, %v1103
    %v1105 = vand.u32 %v1104, 4294901760
    %1106 = vmatpush1.msra.mxu0 %v1105
    %1107 = vmatprep.subr.mxu0 0.0
    %v1108 = vand.u32 %v876, 4294901760
    %v1109 = vsub.f32 %v876, %v1108
    %v1110 = vand.u32 %v1109, 4294901760
    %v1111 = vsub.f32 %v1109, %v1110
    %v1112 = vand.u32 %v1111, 4294901760
    %1113 = vmatpush1.msra.mxu0 %v1112
    %1114 = vmatprep.subr.mxu0 0.0
    %v1115 = vand.u32 %v877, 4294901760
    %v1116 = vsub.f32 %v877, %v1115
    %v1117 = vand.u32 %v1116, 4294901760
    %v1118 = vsub.f32 %v1116, %v1117
    %v1119 = vand.u32 %v1118, 4294901760
    %1120 = vmatpush1.msra.mxu0 %v1119
    %1121 = vmatprep.subr.mxu0 0.0
    %1122 = vmatpush1.msra.mxu0 0.0
    %1123 = vmatprep.subr.mxu0 0.0
    %1124 = vmatpush1.msra.mxu0 0.0
    %1125 = vmatprep.subr.mxu0 0.0
    %1126 = vmatpush1.msra.mxu0 0.0
    %1127 = vmatprep.subr.mxu0 0.0
    %1128 = vmatpush1.msra.mxu0 0.0
    %1129 = vmatprep.subr.mxu0 0.0
    %1130 = vmatpush1.msra.mxu0 0.0
    %1131 = vmatprep.subr.mxu0 0.0
    %1132 = vmatpush1.msra.mxu0 0.0
    %1133 = vmatprep.subr.mxu0 0.0
    %1134 = vmatpush1.msra.mxu0 0.0
    %1135 = vmatprep.subr.mxu0 0.0
    %1136 = vmatpush1.msra.mxu0 0.0
    %1137 = vmatprep.subr.mxu0 0.0
    %1138 = vmatpush1.msra.mxu0 0.0
    %1139 = vmatprep.subr.mxu0 0.0
    %1140 = vmatpush1.msra.mxu0 0.0
    %1141 = vmatprep.subr.mxu0 0.0
    %1142 = vmatpush1.msra.mxu0 0.0
    %1143 = vmatprep.subr.mxu0 0.0
    %1144 = vmatpush1.msra.mxu0 0.0
    %1145 = vmatprep.subr.mxu0 0.0
    %1146 = vmatpush1.msra.mxu0 0.0
    %1147 = vmatprep.subr.mxu0 0.0
    %1148 = vmatpush1.msra.mxu0 0.0
    %1149 = vmatprep.subr.mxu0 0.0
    %1150 = vmatpush1.msra.mxu0 0.0
    %1151 = vmatprep.subr.mxu0 0.0
    %1152 = vmatpush1.msra.mxu0 0.0
    %1153 = vmatprep.mubr.f32.mxu0 0.0
    %v1154 = vand.u32 %v858, 4294901760
    %1155 = vmatmul.mubr.f32.gmra.mrb[0].mxu0 %v1154
    %v1156 = vpop.f32.mrb[0].mxu0
    %v1157 = vadd.f32 %v976, %v1156
    %v1158 = vpop.f32.mrb[0].mxu0
    %1159 = vmatprep.mubr.f32.mxu0 0.0
    %v1160 = vand.u32 %v859, 4294901760
    %1161 = vmatmul.mubr.f32.gmra.mrb[0].mxu0 %v1160
    %v1162 = vpop.f32.mrb[0].mxu0
    %v1163 = vadd.f32 %v986, %v1162
    %v1164 = vpop.f32.mrb[0].mxu0
    %1165 = vmatprep.mubr.f32.mxu0 0.0
    %v1166 = vand.u32 %v860, 4294901760
    %1167 = vmatmul.mubr.f32.gmra.mrb[0].mxu0 %v1166
    %v1168 = vpop.f32.mrb[0].mxu0
    %v1169 = vadd.f32 %v996, %v1168
    %v1170 = vpop.f32.mrb[0].mxu0
    %1171 = vmatprep.mubr.f32.mxu0 0.0
    %v1172 = vand.u32 %v861, 4294901760
    %1173 = vmatmul.mubr.f32.gmra.mrb[0].mxu0 %v1172
    %v1174 = vpop.f32.mrb[0].mxu0
    %v1175 = vadd.f32 %v1006, %v1174
    %v1176 = vpop.f32.mrb[0].mxu0
    %1177 = vdwg.mxu0
    %1178 = vmatprep.subr.mxu0 0.0
    %v1179 = vand.u32 %v862, 4294901760
    %v1180 = vsub.f32 %v862, %v1179
    %1181 = vmatpush1.msra.mxu0 %v1180
    %1182 = vmatprep.subr.mxu0 0.0
    %v1183 = vand.u32 %v863, 4294901760
    %v1184 = vsub.f32 %v863, %v1183
    %1185 = vmatpush1.msra.mxu0 %v1184
    %1186 = vmatprep.subr.mxu0 0.0
    %v1187 = vand.u32 %v864, 4294901760
    %v1188 = vsub.f32 %v864, %v1187
    %1189 = vmatpush1.msra.mxu0 %v1188
    %1190 = vmatprep.subr.mxu0 0.0
    %v1191 = vand.u32 %v865, 4294901760
    %v1192 = vsub.f32 %v865, %v1191
    %1193 = vmatpush1.msra.mxu0 %v1192
    %1194 = vmatprep.subr.mxu0 0.0
    %v1195 = vand.u32 %v866, 4294901760
    %v1196 = vsub.f32 %v866, %v1195
    %1197 = vmatpush1.msra.mxu0 %v1196
    %1198 = vmatprep.subr.mxu0 0.0
    %v1199 = vand.u32 %v867, 4294901760
    %v1200 = vsub.f32 %v867, %v1199
    %1201 = vmatpush1.msra.mxu0 %v1200
    %1202 = vmatprep.subr.mxu0 0.0
    %v1203 = vand.u32 %v868, 4294901760
    %v1204 = vsub.f32 %v868, %v1203
    %1205 = vmatpush1.msra.mxu0 %v1204
    %1206 = vmatprep.subr.mxu0 0.0
    %v1207 = vand.u32 %v869, 4294901760
    %v1208 = vsub.f32 %v869, %v1207
    %1209 = vmatpush1.msra.mxu0 %v1208
    %1210 = vmatprep.subr.mxu0 0.0
    %v1211 = vand.u32 %v870, 4294901760
    %v1212 = vsub.f32 %v870, %v1211
    %1213 = vmatpush1.msra.mxu0 %v1212
    %1214 = vmatprep.subr.mxu0 0.0
    %v1215 = vand.u32 %v871, 4294901760
    %v1216 = vsub.f32 %v871, %v1215
    %1217 = vmatpush1.msra.mxu0 %v1216
    %1218 = vmatprep.subr.mxu0 0.0
    %v1219 = vand.u32 %v872, 4294901760
    %v1220 = vsub.f32 %v872, %v1219
    %1221 = vmatpush1.msra.mxu0 %v1220
    %1222 = vmatprep.subr.mxu0 0.0
    %v1223 = vand.u32 %v873, 4294901760
    %v1224 = vsub.f32 %v873, %v1223
    %1225 = vmatpush1.msra.mxu0 %v1224
    %1226 = vmatprep.subr.mxu0 0.0
    %v1227 = vand.u32 %v874, 4294901760
    %v1228 = vsub.f32 %v874, %v1227
    %1229 = vmatpush1.msra.mxu0 %v1228
    %1230 = vmatprep.subr.mxu0 0.0
    %v1231 = vand.u32 %v875, 4294901760
    %v1232 = vsub.f32 %v875, %v1231
    %1233 = vmatpush1.msra.mxu0 %v1232
    %1234 = vmatprep.subr.mxu0 0.0
    %v1235 = vand.u32 %v876, 4294901760
    %v1236 = vsub.f32 %v876, %v1235
    %1237 = vmatpush1.msra.mxu0 %v1236
    %1238 = vmatprep.subr.mxu0 0.0
    %v1239 = vand.u32 %v877, 4294901760
    %v1240 = vsub.f32 %v877, %v1239
    %1241 = vmatpush1.msra.mxu0 %v1240
    %1242 = vmatprep.subr.mxu0 0.0
    %1243 = vmatpush1.msra.mxu0 0.0
    %1244 = vmatprep.subr.mxu0 0.0
    %1245 = vmatpush1.msra.mxu0 0.0
    %1246 = vmatprep.subr.mxu0 0.0
    %1247 = vmatpush1.msra.mxu0 0.0
    %1248 = vmatprep.subr.mxu0 0.0
    %1249 = vmatpush1.msra.mxu0 0.0
    %1250 = vmatprep.subr.mxu0 0.0
    %1251 = vmatpush1.msra.mxu0 0.0
    %1252 = vmatprep.subr.mxu0 0.0
    %1253 = vmatpush1.msra.mxu0 0.0
    %1254 = vmatprep.subr.mxu0 0.0
    %1255 = vmatpush1.msra.mxu0 0.0
    %1256 = vmatprep.subr.mxu0 0.0
    %1257 = vmatpush1.msra.mxu0 0.0
    %1258 = vmatprep.subr.mxu0 0.0
    %1259 = vmatpush1.msra.mxu0 0.0
    %1260 = vmatprep.subr.mxu0 0.0
    %1261 = vmatpush1.msra.mxu0 0.0
    %1262 = vmatprep.subr.mxu0 0.0
    %1263 = vmatpush1.msra.mxu0 0.0
    %1264 = vmatprep.subr.mxu0 0.0
    %1265 = vmatpush1.msra.mxu0 0.0
    %1266 = vmatprep.subr.mxu0 0.0
    %1267 = vmatpush1.msra.mxu0 0.0
    %1268 = vmatprep.subr.mxu0 0.0
    %1269 = vmatpush1.msra.mxu0 0.0
    %1270 = vmatprep.subr.mxu0 0.0
    %1271 = vmatpush1.msra.mxu0 0.0
    %1272 = vmatprep.subr.mxu0 0.0
    %1273 = vmatpush1.msra.mxu0 0.0
    %1274 = vmatprep.mubr.f32.mxu0 0.0
    %v1275 = vand.u32 %v858, 4294901760
    %v1276 = vsub.f32 %v858, %v1275
    %1277 = vmatmul.mubr.f32.gmra.mrb[0].mxu0 %v1276
    %v1278 = vpop.f32.mrb[0].mxu0
    %v1279 = vadd.f32 %v1157, %v1278
    %v1280 = vpop.f32.mrb[0].mxu0
    %1281 = vmatprep.mubr.f32.mxu0 0.0
    %v1282 = vand.u32 %v859, 4294901760
    %v1283 = vsub.f32 %v859, %v1282
    %1284 = vmatmul.mubr.f32.gmra.mrb[0].mxu0 %v1283
    %v1285 = vpop.f32.mrb[0].mxu0
    %v1286 = vadd.f32 %v1163, %v1285
    %v1287 = vpop.f32.mrb[0].mxu0
    %1288 = vmatprep.mubr.f32.mxu0 0.0
    %v1289 = vand.u32 %v860, 4294901760
    %v1290 = vsub.f32 %v860, %v1289
    %1291 = vmatmul.mubr.f32.gmra.mrb[0].mxu0 %v1290
    %v1292 = vpop.f32.mrb[0].mxu0
    %v1293 = vadd.f32 %v1169, %v1292
    %v1294 = vpop.f32.mrb[0].mxu0
    %1295 = vmatprep.mubr.f32.mxu0 0.0
    %v1296 = vand.u32 %v861, 4294901760
    %v1297 = vsub.f32 %v861, %v1296
    %1298 = vmatmul.mubr.f32.gmra.mrb[0].mxu0 %v1297
    %v1299 = vpop.f32.mrb[0].mxu0
    %v1300 = vadd.f32 %v1175, %v1299
    %v1301 = vpop.f32.mrb[0].mxu0
    %1302 = vdwg.mxu0
    %1303 = vmatprep.subr.mxu0 0.0
    %v1304 = vand.u32 %v862, 4294901760
    %1305 = vmatpush1.msra.mxu0 %v1304
    %1306 = vmatprep.subr.mxu0 0.0
    %v1307 = vand.u32 %v863, 4294901760
    %1308 = vmatpush1.msra.mxu0 %v1307
    %1309 = vmatprep.subr.mxu0 0.0
    %v1310 = vand.u32 %v864, 4294901760
    %1311 = vmatpush1.msra.mxu0 %v1310
    %1312 = vmatprep.subr.mxu0 0.0
    %v1313 = vand.u32 %v865, 4294901760
    %1314 = vmatpush1.msra.mxu0 %v1313
    %1315 = vmatprep.subr.mxu0 0.0
    %v1316 = vand.u32 %v866, 4294901760
    %1317 = vmatpush1.msra.mxu0 %v1316
    %1318 = vmatprep.subr.mxu0 0.0
    %v1319 = vand.u32 %v867, 4294901760
    %1320 = vmatpush1.msra.mxu0 %v1319
    %1321 = vmatprep.subr.mxu0 0.0
    %v1322 = vand.u32 %v868, 4294901760
    %1323 = vmatpush1.msra.mxu0 %v1322
    %1324 = vmatprep.subr.mxu0 0.0
    %v1325 = vand.u32 %v869, 4294901760
    %1326 = vmatpush1.msra.mxu0 %v1325
    %1327 = vmatprep.subr.mxu0 0.0
    %v1328 = vand.u32 %v870, 4294901760
    %1329 = vmatpush1.msra.mxu0 %v1328
    %1330 = vmatprep.subr.mxu0 0.0
    %v1331 = vand.u32 %v871, 4294901760
    %1332 = vmatpush1.msra.mxu0 %v1331
    %1333 = vmatprep.subr.mxu0 0.0
    %v1334 = vand.u32 %v872, 4294901760
    %1335 = vmatpush1.msra.mxu0 %v1334
    %1336 = vmatprep.subr.mxu0 0.0
    %v1337 = vand.u32 %v873, 4294901760
    %1338 = vmatpush1.msra.mxu0 %v1337
    %1339 = vmatprep.subr.mxu0 0.0
    %v1340 = vand.u32 %v874, 4294901760
    %1341 = vmatpush1.msra.mxu0 %v1340
    %1342 = vmatprep.subr.mxu0 0.0
    %v1343 = vand.u32 %v875, 4294901760
    %1344 = vmatpush1.msra.mxu0 %v1343
    %1345 = vmatprep.subr.mxu0 0.0
    %v1346 = vand.u32 %v876, 4294901760
    %1347 = vmatpush1.msra.mxu0 %v1346
    %1348 = vmatprep.subr.mxu0 0.0
    %v1349 = vand.u32 %v877, 4294901760
    %1350 = vmatpush1.msra.mxu0 %v1349
    %1351 = vmatprep.subr.mxu0 0.0
    %1352 = vmatpush1.msra.mxu0 0.0
    %1353 = vmatprep.subr.mxu0 0.0
    %1354 = vmatpush1.msra.mxu0 0.0
    %1355 = vmatprep.subr.mxu0 0.0
    %1356 = vmatpush1.msra.mxu0 0.0
    %1357 = vmatprep.subr.mxu0 0.0
    %1358 = vmatpush1.msra.mxu0 0.0
    %1359 = vmatprep.subr.mxu0 0.0
    %1360 = vmatpush1.msra.mxu0 0.0
    %1361 = vmatprep.subr.mxu0 0.0
    %1362 = vmatpush1.msra.mxu0 0.0
    %1363 = vmatprep.subr.mxu0 0.0
    %1364 = vmatpush1.msra.mxu0 0.0
    %1365 = vmatprep.subr.mxu0 0.0
    %1366 = vmatpush1.msra.mxu0 0.0
    %1367 = vmatprep.subr.mxu0 0.0
    %1368 = vmatpush1.msra.mxu0 0.0
    %1369 = vmatprep.subr.mxu0 0.0
    %1370 = vmatpush1.msra.mxu0 0.0
    %1371 = vmatprep.subr.mxu0 0.0
    %1372 = vmatpush1.msra.mxu0 0.0
    %1373 = vmatprep.subr.mxu0 0.0
    %1374 = vmatpush1.msra.mxu0 0.0
    %1375 = vmatprep.subr.mxu0 0.0
    %1376 = vmatpush1.msra.mxu0 0.0
    %1377 = vmatprep.subr.mxu0 0.0
    %1378 = vmatpush1.msra.mxu0 0.0
    %1379 = vmatprep.subr.mxu0 0.0
    %1380 = vmatpush1.msra.mxu0 0.0
    %1381 = vmatprep.subr.mxu0 0.0
    %1382 = vmatpush1.msra.mxu0 0.0
    %1383 = vmatprep.mubr.f32.mxu0 0.0
    %v1384 = vand.u32 %v858, 4294901760
    %v1385 = vsub.f32 %v858, %v1384
    %v1386 = vand.u32 %v1385, 4294901760
    %1387 = vmatmul.mubr.f32.gmra.mrb[0].mxu0 %v1386
    %v1388 = vpop.f32.mrb[0].mxu0
    %v1389 = vadd.f32 %v1279, %v1388
    %v1390 = vpop.f32.mrb[0].mxu0
    %1391 = vmatprep.mubr.f32.mxu0 0.0
    %v1392 = vand.u32 %v859, 4294901760
    %v1393 = vsub.f32 %v859, %v1392
    %v1394 = vand.u32 %v1393, 4294901760
    %1395 = vmatmul.mubr.f32.gmra.mrb[0].mxu0 %v1394
    %v1396 = vpop.f32.mrb[0].mxu0
    %v1397 = vadd.f32 %v1286, %v1396
    %v1398 = vpop.f32.mrb[0].mxu0
    %1399 = vmatprep.mubr.f32.mxu0 0.0
    %v1400 = vand.u32 %v860, 4294901760
    %v1401 = vsub.f32 %v860, %v1400
    %v1402 = vand.u32 %v1401, 4294901760
    %1403 = vmatmul.mubr.f32.gmra.mrb[0].mxu0 %v1402
    %v1404 = vpop.f32.mrb[0].mxu0
    %v1405 = vadd.f32 %v1293, %v1404
    %v1406 = vpop.f32.mrb[0].mxu0
    %1407 = vmatprep.mubr.f32.mxu0 0.0
    %v1408 = vand.u32 %v861, 4294901760
    %v1409 = vsub.f32 %v861, %v1408
    %v1410 = vand.u32 %v1409, 4294901760
    %1411 = vmatmul.mubr.f32.gmra.mrb[0].mxu0 %v1410
    %v1412 = vpop.f32.mrb[0].mxu0
    %v1413 = vadd.f32 %v1300, %v1412
    %v1414 = vpop.f32.mrb[0].mxu0
    %1415 = vdwg.mxu0
    %1416 = vmatprep.subr.mxu0 0.0
    %v1417 = vand.u32 %v862, 4294901760
    %v1418 = vsub.f32 %v862, %v1417
    %v1419 = vand.u32 %v1418, 4294901760
    %1420 = vmatpush1.msra.mxu0 %v1419
    %1421 = vmatprep.subr.mxu0 0.0
    %v1422 = vand.u32 %v863, 4294901760
    %v1423 = vsub.f32 %v863, %v1422
    %v1424 = vand.u32 %v1423, 4294901760
    %1425 = vmatpush1.msra.mxu0 %v1424
    %1426 = vmatprep.subr.mxu0 0.0
    %v1427 = vand.u32 %v864, 4294901760
    %v1428 = vsub.f32 %v864, %v1427
    %v1429 = vand.u32 %v1428, 4294901760
    %1430 = vmatpush1.msra.mxu0 %v1429
    %1431 = vmatprep.subr.mxu0 0.0
    %v1432 = vand.u32 %v865, 4294901760
    %v1433 = vsub.f32 %v865, %v1432
    %v1434 = vand.u32 %v1433, 4294901760
    %1435 = vmatpush1.msra.mxu0 %v1434
    %1436 = vmatprep.subr.mxu0 0.0
    %v1437 = vand.u32 %v866, 4294901760
    %v1438 = vsub.f32 %v866, %v1437
    %v1439 = vand.u32 %v1438, 4294901760
    %1440 = vmatpush1.msra.mxu0 %v1439
    %1441 = vmatprep.subr.mxu0 0.0
    %v1442 = vand.u32 %v867, 4294901760
    %v1443 = vsub.f32 %v867, %v1442
    %v1444 = vand.u32 %v1443, 4294901760
    %1445 = vmatpush1.msra.mxu0 %v1444
    %1446 = vmatprep.subr.mxu0 0.0
    %v1447 = vand.u32 %v868, 4294901760
    %v1448 = vsub.f32 %v868, %v1447
    %v1449 = vand.u32 %v1448, 4294901760
    %1450 = vmatpush1.msra.mxu0 %v1449
    %1451 = vmatprep.subr.mxu0 0.0
    %v1452 = vand.u32 %v869, 4294901760
    %v1453 = vsub.f32 %v869, %v1452
    %v1454 = vand.u32 %v1453, 4294901760
    %1455 = vmatpush1.msra.mxu0 %v1454
    %1456 = vmatprep.subr.mxu0 0.0
    %v1457 = vand.u32 %v870, 4294901760
    %v1458 = vsub.f32 %v870, %v1457
    %v1459 = vand.u32 %v1458, 4294901760
    %1460 = vmatpush1.msra.mxu0 %v1459
    %1461 = vmatprep.subr.mxu0 0.0
    %v1462 = vand.u32 %v871, 4294901760
    %v1463 = vsub.f32 %v871, %v1462
    %v1464 = vand.u32 %v1463, 4294901760
    %1465 = vmatpush1.msra.mxu0 %v1464
    %1466 = vmatprep.subr.mxu0 0.0
    %v1467 = vand.u32 %v872, 4294901760
    %v1468 = vsub.f32 %v872, %v1467
    %v1469 = vand.u32 %v1468, 4294901760
    %1470 = vmatpush1.msra.mxu0 %v1469
    %1471 = vmatprep.subr.mxu0 0.0
    %v1472 = vand.u32 %v873, 4294901760
    %v1473 = vsub.f32 %v873, %v1472
    %v1474 = vand.u32 %v1473, 4294901760
    %1475 = vmatpush1.msra.mxu0 %v1474
    %1476 = vmatprep.subr.mxu0 0.0
    %v1477 = vand.u32 %v874, 4294901760
    %v1478 = vsub.f32 %v874, %v1477
    %v1479 = vand.u32 %v1478, 4294901760
    %1480 = vmatpush1.msra.mxu0 %v1479
    %1481 = vmatprep.subr.mxu0 0.0
    %v1482 = vand.u32 %v875, 4294901760
    %v1483 = vsub.f32 %v875, %v1482
    %v1484 = vand.u32 %v1483, 4294901760
    %1485 = vmatpush1.msra.mxu0 %v1484
    %1486 = vmatprep.subr.mxu0 0.0
    %v1487 = vand.u32 %v876, 4294901760
    %v1488 = vsub.f32 %v876, %v1487
    %v1489 = vand.u32 %v1488, 4294901760
    %1490 = vmatpush1.msra.mxu0 %v1489
    %1491 = vmatprep.subr.mxu0 0.0
    %v1492 = vand.u32 %v877, 4294901760
    %v1493 = vsub.f32 %v877, %v1492
    %v1494 = vand.u32 %v1493, 4294901760
    %1495 = vmatpush1.msra.mxu0 %v1494
    %1496 = vmatprep.subr.mxu0 0.0
    %1497 = vmatpush1.msra.mxu0 0.0
    %1498 = vmatprep.subr.mxu0 0.0
    %1499 = vmatpush1.msra.mxu0 0.0
    %1500 = vmatprep.subr.mxu0 0.0
    %1501 = vmatpush1.msra.mxu0 0.0
    %1502 = vmatprep.subr.mxu0 0.0
    %1503 = vmatpush1.msra.mxu0 0.0
    %1504 = vmatprep.subr.mxu0 0.0
    %1505 = vmatpush1.msra.mxu0 0.0
    %1506 = vmatprep.subr.mxu0 0.0
    %1507 = vmatpush1.msra.mxu0 0.0
    %1508 = vmatprep.subr.mxu0 0.0
    %1509 = vmatpush1.msra.mxu0 0.0
    %1510 = vmatprep.subr.mxu0 0.0
    %1511 = vmatpush1.msra.mxu0 0.0
    %1512 = vmatprep.subr.mxu0 0.0
    %1513 = vmatpush1.msra.mxu0 0.0
    %1514 = vmatprep.subr.mxu0 0.0
    %1515 = vmatpush1.msra.mxu0 0.0
    %1516 = vmatprep.subr.mxu0 0.0
    %1517 = vmatpush1.msra.mxu0 0.0
    %1518 = vmatprep.subr.mxu0 0.0
    %1519 = vmatpush1.msra.mxu0 0.0
    %1520 = vmatprep.subr.mxu0 0.0
    %1521 = vmatpush1.msra.mxu0 0.0
    %1522 = vmatprep.subr.mxu0 0.0
    %1523 = vmatpush1.msra.mxu0 0.0
    %1524 = vmatprep.subr.mxu0 0.0
    %1525 = vmatpush1.msra.mxu0 0.0
    %1526 = vmatprep.subr.mxu0 0.0
    %1527 = vmatpush1.msra.mxu0 0.0
    %1528 = vmatprep.mubr.f32.mxu0 0.0
    %v1529 = vand.u32 %v858, 4294901760
    %1530 = vmatmul.mubr.f32.gmra.mrb[0].mxu0 %v1529
    %v1531 = vpop.f32.mrb[0].mxu0
    %v1532 = vadd.f32 %v1389, %v1531
    %v1533 = vpop.f32.mrb[0].mxu0
    %1534 = vmatprep.mubr.f32.mxu0 0.0
    %v1535 = vand.u32 %v859, 4294901760
    %1536 = vmatmul.mubr.f32.gmra.mrb[0].mxu0 %v1535
    %v1537 = vpop.f32.mrb[0].mxu0
    %v1538 = vadd.f32 %v1397, %v1537
    %v1539 = vpop.f32.mrb[0].mxu0
    %1540 = vmatprep.mubr.f32.mxu0 0.0
    %v1541 = vand.u32 %v860, 4294901760
    %1542 = vmatmul.mubr.f32.gmra.mrb[0].mxu0 %v1541
    %v1543 = vpop.f32.mrb[0].mxu0
    %v1544 = vadd.f32 %v1405, %v1543
    %v1545 = vpop.f32.mrb[0].mxu0
    %1546 = vmatprep.mubr.f32.mxu0 0.0
    %v1547 = vand.u32 %v861, 4294901760
    %1548 = vmatmul.mubr.f32.gmra.mrb[0].mxu0 %v1547
    %v1549 = vpop.f32.mrb[0].mxu0
    %v1550 = vadd.f32 %v1413, %v1549
    %v1551 = vpop.f32.mrb[0].mxu0
    %1552 = vdwg.mxu0
    %1553 = vmatprep.subr.mxu0 0.0
    %v1554 = vand.u32 %v862, 4294901760
    %1555 = vmatpush1.msra.mxu0 %v1554
    %1556 = vmatprep.subr.mxu0 0.0
    %v1557 = vand.u32 %v863, 4294901760
    %1558 = vmatpush1.msra.mxu0 %v1557
    %1559 = vmatprep.subr.mxu0 0.0
    %v1560 = vand.u32 %v864, 4294901760
    %1561 = vmatpush1.msra.mxu0 %v1560
    %1562 = vmatprep.subr.mxu0 0.0
    %v1563 = vand.u32 %v865, 4294901760
    %1564 = vmatpush1.msra.mxu0 %v1563
    %1565 = vmatprep.subr.mxu0 0.0
    %v1566 = vand.u32 %v866, 4294901760
    %1567 = vmatpush1.msra.mxu0 %v1566
    %1568 = vmatprep.subr.mxu0 0.0
    %v1569 = vand.u32 %v867, 4294901760
    %1570 = vmatpush1.msra.mxu0 %v1569
    %1571 = vmatprep.subr.mxu0 0.0
    %v1572 = vand.u32 %v868, 4294901760
    %1573 = vmatpush1.msra.mxu0 %v1572
    %1574 = vmatprep.subr.mxu0 0.0
    %v1575 = vand.u32 %v869, 4294901760
    %1576 = vmatpush1.msra.mxu0 %v1575
    %1577 = vmatprep.subr.mxu0 0.0
    %v1578 = vand.u32 %v870, 4294901760
    %1579 = vmatpush1.msra.mxu0 %v1578
    %1580 = vmatprep.subr.mxu0 0.0
    %v1581 = vand.u32 %v871, 4294901760
    %1582 = vmatpush1.msra.mxu0 %v1581
    %1583 = vmatprep.subr.mxu0 0.0
    %v1584 = vand.u32 %v872, 4294901760
    %1585 = vmatpush1.msra.mxu0 %v1584
    %1586 = vmatprep.subr.mxu0 0.0
    %v1587 = vand.u32 %v873, 4294901760
    %1588 = vmatpush1.msra.mxu0 %v1587
    %1589 = vmatprep.subr.mxu0 0.0
    %v1590 = vand.u32 %v874, 4294901760
    %1591 = vmatpush1.msra.mxu0 %v1590
    %1592 = vmatprep.subr.mxu0 0.0
    %v1593 = vand.u32 %v875, 4294901760
    %1594 = vmatpush1.msra.mxu0 %v1593
    %1595 = vmatprep.subr.mxu0 0.0
    %v1596 = vand.u32 %v876, 4294901760
    %1597 = vmatpush1.msra.mxu0 %v1596
    %1598 = vmatprep.subr.mxu0 0.0
    %v1599 = vand.u32 %v877, 4294901760
    %1600 = vmatpush1.msra.mxu0 %v1599
    %1601 = vmatprep.subr.mxu0 0.0
    %1602 = vmatpush1.msra.mxu0 0.0
    %1603 = vmatprep.subr.mxu0 0.0
    %1604 = vmatpush1.msra.mxu0 0.0
    %1605 = vmatprep.subr.mxu0 0.0
    %1606 = vmatpush1.msra.mxu0 0.0
    %1607 = vmatprep.subr.mxu0 0.0
    %1608 = vmatpush1.msra.mxu0 0.0
    %1609 = vmatprep.subr.mxu0 0.0
    %1610 = vmatpush1.msra.mxu0 0.0
    %1611 = vmatprep.subr.mxu0 0.0
    %1612 = vmatpush1.msra.mxu0 0.0
    %1613 = vmatprep.subr.mxu0 0.0
    %1614 = vmatpush1.msra.mxu0 0.0
    %1615 = vmatprep.subr.mxu0 0.0
    %1616 = vmatpush1.msra.mxu0 0.0
    %1617 = vmatprep.subr.mxu0 0.0
    %1618 = vmatpush1.msra.mxu0 0.0
    %1619 = vmatprep.subr.mxu0 0.0
    %1620 = vmatpush1.msra.mxu0 0.0
    %1621 = vmatprep.subr.mxu0 0.0
    %1622 = vmatpush1.msra.mxu0 0.0
    %1623 = vmatprep.subr.mxu0 0.0
    %1624 = vmatpush1.msra.mxu0 0.0
    %1625 = vmatprep.subr.mxu0 0.0
    %1626 = vmatpush1.msra.mxu0 0.0
    %1627 = vmatprep.subr.mxu0 0.0
    %1628 = vmatpush1.msra.mxu0 0.0
    %1629 = vmatprep.subr.mxu0 0.0
    %1630 = vmatpush1.msra.mxu0 0.0
    %1631 = vmatprep.subr.mxu0 0.0
    %1632 = vmatpush1.msra.mxu0 0.0
    %1633 = vmatprep.mubr.f32.mxu0 0.0
    %v1634 = vand.u32 %v858, 4294901760
    %1635 = vmatmul.mubr.f32.gmra.mrb[0].mxu0 %v1634
    %v1636 = vpop.f32.mrb[0].mxu0
    %v1637 = vadd.f32 %v1532, %v1636
    %v1638 = vpop.f32.mrb[0].mxu0
    %1639 = vmatprep.mubr.f32.mxu0 0.0
    %v1640 = vand.u32 %v859, 4294901760
    %1641 = vmatmul.mubr.f32.gmra.mrb[0].mxu0 %v1640
    %v1642 = vpop.f32.mrb[0].mxu0
    %v1643 = vadd.f32 %v1538, %v1642
    %v1644 = vpop.f32.mrb[0].mxu0
    %1645 = vmatprep.mubr.f32.mxu0 0.0
    %v1646 = vand.u32 %v860, 4294901760
    %1647 = vmatmul.mubr.f32.gmra.mrb[0].mxu0 %v1646
    %v1648 = vpop.f32.mrb[0].mxu0
    %v1649 = vadd.f32 %v1544, %v1648
    %v1650 = vpop.f32.mrb[0].mxu0
    %1651 = vmatprep.mubr.f32.mxu0 0.0
    %v1652 = vand.u32 %v861, 4294901760
    %1653 = vmatmul.mubr.f32.gmra.mrb[0].mxu0 %v1652
    %v1654 = vpop.f32.mrb[0].mxu0
    %v1655 = vadd.f32 %v1550, %v1654
    %v1656 = vpop.f32.mrb[0].mxu0
    %1657 = vdwg.mxu0
    %v1658 = vmax.f32 %v1637, 0.0
    %v1659 = vmax.f32 %v1643, 0.0
    %v1660 = vmax.f32 %v1649, 0.0
    %v1661 = vmax.f32 %v1655, 0.0
    %1664 = vrot.lane.b32.xlu0 %v140, 8
    %v1665 = vpop.permute.xlu0 %1664
    %1666 = vrot.lane.b32.xlu0 %v141, 8
    %v1667 = vpop.permute.xlu0 %1666
    %vm1670 = vcmask 64512
    %v1671 = vsel %vm1670, %v100, %v1665
    %v1672 = vsel %vm1670, %v101, %v1667
    %1675 = vrot.lane.b32.xlu0 %v100, 127
    %v1676 = vpop.permute.xlu0 %1675
    %1677 = vrot.lane.b32.xlu0 %v101, 127
    %v1678 = vpop.permute.xlu0 %1677
    %1681 = vrot.lane.b32.xlu0 %v140, 7
    %v1682 = vpop.permute.xlu0 %1681
    %1683 = vrot.lane.b32.xlu0 %v141, 7
    %v1684 = vpop.permute.xlu0 %1683
    %v1687 = vsel %vm1670, %v1676, %v1682
    %v1688 = vsel %vm1670, %v1678, %v1684
    %1689 = vrot.lane.b32.xlu0 %v100, 126
    %v1690 = vpop.permute.xlu0 %1689
    %1691 = vrot.lane.b32.xlu0 %v101, 126
    %v1692 = vpop.permute.xlu0 %1691
    %1695 = vrot.lane.b32.xlu0 %v140, 6
    %v1696 = vpop.permute.xlu0 %1695
    %1697 = vrot.lane.b32.xlu0 %v141, 6
    %v1698 = vpop.permute.xlu0 %1697
    %v1701 = vsel %vm1670, %v1690, %v1696
    %v1702 = vsel %vm1670, %v1692, %v1698
    %v1703 = vld [vmem:[%s7] sm:$0xff]
    %v1704 = vld [vmem:[%s7 + $0x8] sm:$0xff]
    %vm1705 = vcmask 392192
    %v1707 = vsel %vm1705, %v1703, 0
    %v1710 = vsel %vm1705, %v1704, 0
    %1712 = vmatprep.subr.mxu0 0.0
    %v1713 = vand.u32 %v1671, 4294901760
    %1714 = vmatpush1.msra.mxu0 %v1713
    %1715 = vmatprep.subr.mxu0 0.0
    %v1716 = vand.u32 %v1672, 4294901760
    %1717 = vmatpush1.msra.mxu0 %v1716
    %1718 = vmatprep.subr.mxu0 0.0
    %v1719 = vand.u32 %v1687, 4294901760
    %1720 = vmatpush1.msra.mxu0 %v1719
    %1721 = vmatprep.subr.mxu0 0.0
    %v1722 = vand.u32 %v1688, 4294901760
    %1723 = vmatpush1.msra.mxu0 %v1722
    %1724 = vmatprep.subr.mxu0 0.0
    %v1725 = vand.u32 %v1701, 4294901760
    %1726 = vmatpush1.msra.mxu0 %v1725
    %1727 = vmatprep.subr.mxu0 0.0
    %v1728 = vand.u32 %v1702, 4294901760
    %1729 = vmatpush1.msra.mxu0 %v1728
    %1730 = vmatprep.subr.mxu0 0.0
    %1731 = vmatpush1.msra.mxu0 0.0
    %1732 = vmatprep.subr.mxu0 0.0
    %1733 = vmatpush1.msra.mxu0 0.0
    %1734 = vmatprep.subr.mxu0 0.0
    %1735 = vmatpush1.msra.mxu0 0.0
    %1736 = vmatprep.subr.mxu0 0.0
    %1737 = vmatpush1.msra.mxu0 0.0
    %1738 = vmatprep.subr.mxu0 0.0
    %1739 = vmatpush1.msra.mxu0 0.0
    %1740 = vmatprep.subr.mxu0 0.0
    %1741 = vmatpush1.msra.mxu0 0.0
    %1742 = vmatprep.subr.mxu0 0.0
    %1743 = vmatpush1.msra.mxu0 0.0
    %1744 = vmatprep.subr.mxu0 0.0
    %1745 = vmatpush1.msra.mxu0 0.0
    %1746 = vmatprep.subr.mxu0 0.0
    %1747 = vmatpush1.msra.mxu0 0.0
    %1748 = vmatprep.subr.mxu0 0.0
    %1749 = vmatpush1.msra.mxu0 0.0
    %1750 = vmatprep.subr.mxu0 0.0
    %1751 = vmatpush1.msra.mxu0 0.0
    %1752 = vmatprep.subr.mxu0 0.0
    %1753 = vmatpush1.msra.mxu0 0.0
    %1754 = vmatprep.subr.mxu0 0.0
    %1755 = vmatpush1.msra.mxu0 0.0
    %1756 = vmatprep.subr.mxu0 0.0
    %1757 = vmatpush1.msra.mxu0 0.0
    %1758 = vmatprep.subr.mxu0 0.0
    %1759 = vmatpush1.msra.mxu0 0.0
    %1760 = vmatprep.subr.mxu0 0.0
    %1761 = vmatpush1.msra.mxu0 0.0
    %1762 = vmatprep.subr.mxu0 0.0
    %1763 = vmatpush1.msra.mxu0 0.0
    %1764 = vmatprep.subr.mxu0 0.0
    %1765 = vmatpush1.msra.mxu0 0.0
    %1766 = vmatprep.subr.mxu0 0.0
    %1767 = vmatpush1.msra.mxu0 0.0
    %1768 = vmatprep.subr.mxu0 0.0
    %1769 = vmatpush1.msra.mxu0 0.0
    %1770 = vmatprep.subr.mxu0 0.0
    %1771 = vmatpush1.msra.mxu0 0.0
    %1772 = vmatprep.subr.mxu0 0.0
    %1773 = vmatpush1.msra.mxu0 0.0
    %1774 = vmatprep.subr.mxu0 0.0
    %1775 = vmatpush1.msra.mxu0 0.0
    %1776 = vmatprep.subr.mxu0 0.0
    %1777 = vmatpush1.msra.mxu0 0.0
    %1778 = vmatprep.subr.mxu0 0.0
    %1779 = vmatpush1.msra.mxu0 0.0
    %1780 = vmatprep.subr.mxu0 0.0
    %1781 = vmatpush1.msra.mxu0 0.0
    %1782 = vmatprep.mubr.f32.mxu0 0.0
    %v1783 = vand.u32 %v1707, 4294901760
    %v1784 = vsub.f32 %v1707, %v1783
    %v1785 = vand.u32 %v1784, 4294901760
    %v1786 = vsub.f32 %v1784, %v1785
    %v1787 = vand.u32 %v1786, 4294901760
    %1788 = vmatmul.mubr.f32.gmra.mrb[0].mxu0 %v1787
    %v1789 = vpop.f32.mrb[0].mxu0
    %v1790 = vadd.f32 0.0, %v1789
    %v1791 = vpop.f32.mrb[0].mxu0
    %1792 = vmatprep.mubr.f32.mxu0 0.0
    %v1793 = vand.u32 %v1710, 4294901760
    %v1794 = vsub.f32 %v1710, %v1793
    %v1795 = vand.u32 %v1794, 4294901760
    %v1796 = vsub.f32 %v1794, %v1795
    %v1797 = vand.u32 %v1796, 4294901760
    %1798 = vmatmul.mubr.f32.gmra.mrb[0].mxu0 %v1797
    %v1799 = vpop.f32.mrb[0].mxu0
    %v1800 = vadd.f32 0.0, %v1799
    %v1801 = vpop.f32.mrb[0].mxu0
    %1802 = vdwg.mxu0
    %1803 = vmatprep.subr.mxu0 0.0
    %v1804 = vand.u32 %v1671, 4294901760
    %v1805 = vsub.f32 %v1671, %v1804
    %v1806 = vand.u32 %v1805, 4294901760
    %v1807 = vsub.f32 %v1805, %v1806
    %v1808 = vand.u32 %v1807, 4294901760
    %1809 = vmatpush1.msra.mxu0 %v1808
    %1810 = vmatprep.subr.mxu0 0.0
    %v1811 = vand.u32 %v1672, 4294901760
    %v1812 = vsub.f32 %v1672, %v1811
    %v1813 = vand.u32 %v1812, 4294901760
    %v1814 = vsub.f32 %v1812, %v1813
    %v1815 = vand.u32 %v1814, 4294901760
    %1816 = vmatpush1.msra.mxu0 %v1815
    %1817 = vmatprep.subr.mxu0 0.0
    %v1818 = vand.u32 %v1687, 4294901760
    %v1819 = vsub.f32 %v1687, %v1818
    %v1820 = vand.u32 %v1819, 4294901760
    %v1821 = vsub.f32 %v1819, %v1820
    %v1822 = vand.u32 %v1821, 4294901760
    %1823 = vmatpush1.msra.mxu0 %v1822
    %1824 = vmatprep.subr.mxu0 0.0
    %v1825 = vand.u32 %v1688, 4294901760
    %v1826 = vsub.f32 %v1688, %v1825
    %v1827 = vand.u32 %v1826, 4294901760
    %v1828 = vsub.f32 %v1826, %v1827
    %v1829 = vand.u32 %v1828, 4294901760
    %1830 = vmatpush1.msra.mxu0 %v1829
    %1831 = vmatprep.subr.mxu0 0.0
    %v1832 = vand.u32 %v1701, 4294901760
    %v1833 = vsub.f32 %v1701, %v1832
    %v1834 = vand.u32 %v1833, 4294901760
    %v1835 = vsub.f32 %v1833, %v1834
    %v1836 = vand.u32 %v1835, 4294901760
    %1837 = vmatpush1.msra.mxu0 %v1836
    %1838 = vmatprep.subr.mxu0 0.0
    %v1839 = vand.u32 %v1702, 4294901760
    %v1840 = vsub.f32 %v1702, %v1839
    %v1841 = vand.u32 %v1840, 4294901760
    %v1842 = vsub.f32 %v1840, %v1841
    %v1843 = vand.u32 %v1842, 4294901760
    %1844 = vmatpush1.msra.mxu0 %v1843
    %1845 = vmatprep.subr.mxu0 0.0
    %1846 = vmatpush1.msra.mxu0 0.0
    %1847 = vmatprep.subr.mxu0 0.0
    %1848 = vmatpush1.msra.mxu0 0.0
    %1849 = vmatprep.subr.mxu0 0.0
    %1850 = vmatpush1.msra.mxu0 0.0
    %1851 = vmatprep.subr.mxu0 0.0
    %1852 = vmatpush1.msra.mxu0 0.0
    %1853 = vmatprep.subr.mxu0 0.0
    %1854 = vmatpush1.msra.mxu0 0.0
    %1855 = vmatprep.subr.mxu0 0.0
    %1856 = vmatpush1.msra.mxu0 0.0
    %1857 = vmatprep.subr.mxu0 0.0
    %1858 = vmatpush1.msra.mxu0 0.0
    %1859 = vmatprep.subr.mxu0 0.0
    %1860 = vmatpush1.msra.mxu0 0.0
    %1861 = vmatprep.subr.mxu0 0.0
    %1862 = vmatpush1.msra.mxu0 0.0
    %1863 = vmatprep.subr.mxu0 0.0
    %1864 = vmatpush1.msra.mxu0 0.0
    %1865 = vmatprep.subr.mxu0 0.0
    %1866 = vmatpush1.msra.mxu0 0.0
    %1867 = vmatprep.subr.mxu0 0.0
    %1868 = vmatpush1.msra.mxu0 0.0
    %1869 = vmatprep.subr.mxu0 0.0
    %1870 = vmatpush1.msra.mxu0 0.0
    %1871 = vmatprep.subr.mxu0 0.0
    %1872 = vmatpush1.msra.mxu0 0.0
    %1873 = vmatprep.subr.mxu0 0.0
    %1874 = vmatpush1.msra.mxu0 0.0
    %1875 = vmatprep.subr.mxu0 0.0
    %1876 = vmatpush1.msra.mxu0 0.0
    %1877 = vmatprep.subr.mxu0 0.0
    %1878 = vmatpush1.msra.mxu0 0.0
    %1879 = vmatprep.subr.mxu0 0.0
    %1880 = vmatpush1.msra.mxu0 0.0
    %1881 = vmatprep.subr.mxu0 0.0
    %1882 = vmatpush1.msra.mxu0 0.0
    %1883 = vmatprep.subr.mxu0 0.0
    %1884 = vmatpush1.msra.mxu0 0.0
    %1885 = vmatprep.subr.mxu0 0.0
    %1886 = vmatpush1.msra.mxu0 0.0
    %1887 = vmatprep.subr.mxu0 0.0
    %1888 = vmatpush1.msra.mxu0 0.0
    %1889 = vmatprep.subr.mxu0 0.0
    %1890 = vmatpush1.msra.mxu0 0.0
    %1891 = vmatprep.subr.mxu0 0.0
    %1892 = vmatpush1.msra.mxu0 0.0
    %1893 = vmatprep.subr.mxu0 0.0
    %1894 = vmatpush1.msra.mxu0 0.0
    %1895 = vmatprep.subr.mxu0 0.0
    %1896 = vmatpush1.msra.mxu0 0.0
    %1897 = vmatprep.mubr.f32.mxu0 0.0
    %v1898 = vand.u32 %v1707, 4294901760
    %1899 = vmatmul.mubr.f32.gmra.mrb[0].mxu0 %v1898
    %v1900 = vpop.f32.mrb[0].mxu0
    %v1901 = vadd.f32 %v1790, %v1900
    %v1902 = vpop.f32.mrb[0].mxu0
    %1903 = vmatprep.mubr.f32.mxu0 0.0
    %v1904 = vand.u32 %v1710, 4294901760
    %1905 = vmatmul.mubr.f32.gmra.mrb[0].mxu0 %v1904
    %v1906 = vpop.f32.mrb[0].mxu0
    %v1907 = vadd.f32 %v1800, %v1906
    %v1908 = vpop.f32.mrb[0].mxu0
    %1909 = vdwg.mxu0
    %1910 = vmatprep.subr.mxu0 0.0
    %v1911 = vand.u32 %v1671, 4294901760
    %v1912 = vsub.f32 %v1671, %v1911
    %1913 = vmatpush1.msra.mxu0 %v1912
    %1914 = vmatprep.subr.mxu0 0.0
    %v1915 = vand.u32 %v1672, 4294901760
    %v1916 = vsub.f32 %v1672, %v1915
    %1917 = vmatpush1.msra.mxu0 %v1916
    %1918 = vmatprep.subr.mxu0 0.0
    %v1919 = vand.u32 %v1687, 4294901760
    %v1920 = vsub.f32 %v1687, %v1919
    %1921 = vmatpush1.msra.mxu0 %v1920
    %1922 = vmatprep.subr.mxu0 0.0
    %v1923 = vand.u32 %v1688, 4294901760
    %v1924 = vsub.f32 %v1688, %v1923
    %1925 = vmatpush1.msra.mxu0 %v1924
    %1926 = vmatprep.subr.mxu0 0.0
    %v1927 = vand.u32 %v1701, 4294901760
    %v1928 = vsub.f32 %v1701, %v1927
    %1929 = vmatpush1.msra.mxu0 %v1928
    %1930 = vmatprep.subr.mxu0 0.0
    %v1931 = vand.u32 %v1702, 4294901760
    %v1932 = vsub.f32 %v1702, %v1931
    %1933 = vmatpush1.msra.mxu0 %v1932
    %1934 = vmatprep.subr.mxu0 0.0
    %1935 = vmatpush1.msra.mxu0 0.0
    %1936 = vmatprep.subr.mxu0 0.0
    %1937 = vmatpush1.msra.mxu0 0.0
    %1938 = vmatprep.subr.mxu0 0.0
    %1939 = vmatpush1.msra.mxu0 0.0
    %1940 = vmatprep.subr.mxu0 0.0
    %1941 = vmatpush1.msra.mxu0 0.0
    %1942 = vmatprep.subr.mxu0 0.0
    %1943 = vmatpush1.msra.mxu0 0.0
    %1944 = vmatprep.subr.mxu0 0.0
    %1945 = vmatpush1.msra.mxu0 0.0
    %1946 = vmatprep.subr.mxu0 0.0
    %1947 = vmatpush1.msra.mxu0 0.0
    %1948 = vmatprep.subr.mxu0 0.0
    %1949 = vmatpush1.msra.mxu0 0.0
    %1950 = vmatprep.subr.mxu0 0.0
    %1951 = vmatpush1.msra.mxu0 0.0
    %1952 = vmatprep.subr.mxu0 0.0
    %1953 = vmatpush1.msra.mxu0 0.0
    %1954 = vmatprep.subr.mxu0 0.0
    %1955 = vmatpush1.msra.mxu0 0.0
    %1956 = vmatprep.subr.mxu0 0.0
    %1957 = vmatpush1.msra.mxu0 0.0
    %1958 = vmatprep.subr.mxu0 0.0
    %1959 = vmatpush1.msra.mxu0 0.0
    %1960 = vmatprep.subr.mxu0 0.0
    %1961 = vmatpush1.msra.mxu0 0.0
    %1962 = vmatprep.subr.mxu0 0.0
    %1963 = vmatpush1.msra.mxu0 0.0
    %1964 = vmatprep.subr.mxu0 0.0
    %1965 = vmatpush1.msra.mxu0 0.0
    %1966 = vmatprep.subr.mxu0 0.0
    %1967 = vmatpush1.msra.mxu0 0.0
    %1968 = vmatprep.subr.mxu0 0.0
    %1969 = vmatpush1.msra.mxu0 0.0
    %1970 = vmatprep.subr.mxu0 0.0
    %1971 = vmatpush1.msra.mxu0 0.0
    %1972 = vmatprep.subr.mxu0 0.0
    %1973 = vmatpush1.msra.mxu0 0.0
    %1974 = vmatprep.subr.mxu0 0.0
    %1975 = vmatpush1.msra.mxu0 0.0
    %1976 = vmatprep.subr.mxu0 0.0
    %1977 = vmatpush1.msra.mxu0 0.0
    %1978 = vmatprep.subr.mxu0 0.0
    %1979 = vmatpush1.msra.mxu0 0.0
    %1980 = vmatprep.subr.mxu0 0.0
    %1981 = vmatpush1.msra.mxu0 0.0
    %1982 = vmatprep.subr.mxu0 0.0
    %1983 = vmatpush1.msra.mxu0 0.0
    %1984 = vmatprep.subr.mxu0 0.0
    %1985 = vmatpush1.msra.mxu0 0.0
    %1986 = vmatprep.mubr.f32.mxu0 0.0
    %v1987 = vand.u32 %v1707, 4294901760
    %v1988 = vsub.f32 %v1707, %v1987
    %1989 = vmatmul.mubr.f32.gmra.mrb[0].mxu0 %v1988
    %v1990 = vpop.f32.mrb[0].mxu0
    %v1991 = vadd.f32 %v1901, %v1990
    %v1992 = vpop.f32.mrb[0].mxu0
    %1993 = vmatprep.mubr.f32.mxu0 0.0
    %v1994 = vand.u32 %v1710, 4294901760
    %v1995 = vsub.f32 %v1710, %v1994
    %1996 = vmatmul.mubr.f32.gmra.mrb[0].mxu0 %v1995
    %v1997 = vpop.f32.mrb[0].mxu0
    %v1998 = vadd.f32 %v1907, %v1997
    %v1999 = vpop.f32.mrb[0].mxu0
    %2000 = vdwg.mxu0
    %2001 = vmatprep.subr.mxu0 0.0
    %v2002 = vand.u32 %v1671, 4294901760
    %2003 = vmatpush1.msra.mxu0 %v2002
    %2004 = vmatprep.subr.mxu0 0.0
    %v2005 = vand.u32 %v1672, 4294901760
    %2006 = vmatpush1.msra.mxu0 %v2005
    %2007 = vmatprep.subr.mxu0 0.0
    %v2008 = vand.u32 %v1687, 4294901760
    %2009 = vmatpush1.msra.mxu0 %v2008
    %2010 = vmatprep.subr.mxu0 0.0
    %v2011 = vand.u32 %v1688, 4294901760
    %2012 = vmatpush1.msra.mxu0 %v2011
    %2013 = vmatprep.subr.mxu0 0.0
    %v2014 = vand.u32 %v1701, 4294901760
    %2015 = vmatpush1.msra.mxu0 %v2014
    %2016 = vmatprep.subr.mxu0 0.0
    %v2017 = vand.u32 %v1702, 4294901760
    %2018 = vmatpush1.msra.mxu0 %v2017
    %2019 = vmatprep.subr.mxu0 0.0
    %2020 = vmatpush1.msra.mxu0 0.0
    %2021 = vmatprep.subr.mxu0 0.0
    %2022 = vmatpush1.msra.mxu0 0.0
    %2023 = vmatprep.subr.mxu0 0.0
    %2024 = vmatpush1.msra.mxu0 0.0
    %2025 = vmatprep.subr.mxu0 0.0
    %2026 = vmatpush1.msra.mxu0 0.0
    %2027 = vmatprep.subr.mxu0 0.0
    %2028 = vmatpush1.msra.mxu0 0.0
    %2029 = vmatprep.subr.mxu0 0.0
    %2030 = vmatpush1.msra.mxu0 0.0
    %2031 = vmatprep.subr.mxu0 0.0
    %2032 = vmatpush1.msra.mxu0 0.0
    %2033 = vmatprep.subr.mxu0 0.0
    %2034 = vmatpush1.msra.mxu0 0.0
    %2035 = vmatprep.subr.mxu0 0.0
    %2036 = vmatpush1.msra.mxu0 0.0
    %2037 = vmatprep.subr.mxu0 0.0
    %2038 = vmatpush1.msra.mxu0 0.0
    %2039 = vmatprep.subr.mxu0 0.0
    %2040 = vmatpush1.msra.mxu0 0.0
    %2041 = vmatprep.subr.mxu0 0.0
    %2042 = vmatpush1.msra.mxu0 0.0
    %2043 = vmatprep.subr.mxu0 0.0
    %2044 = vmatpush1.msra.mxu0 0.0
    %2045 = vmatprep.subr.mxu0 0.0
    %2046 = vmatpush1.msra.mxu0 0.0
    %2047 = vmatprep.subr.mxu0 0.0
    %2048 = vmatpush1.msra.mxu0 0.0
    %2049 = vmatprep.subr.mxu0 0.0
    %2050 = vmatpush1.msra.mxu0 0.0
    %2051 = vmatprep.subr.mxu0 0.0
    %2052 = vmatpush1.msra.mxu0 0.0
    %2053 = vmatprep.subr.mxu0 0.0
    %2054 = vmatpush1.msra.mxu0 0.0
    %2055 = vmatprep.subr.mxu0 0.0
    %2056 = vmatpush1.msra.mxu0 0.0
    %2057 = vmatprep.subr.mxu0 0.0
    %2058 = vmatpush1.msra.mxu0 0.0
    %2059 = vmatprep.subr.mxu0 0.0
    %2060 = vmatpush1.msra.mxu0 0.0
    %2061 = vmatprep.subr.mxu0 0.0
    %2062 = vmatpush1.msra.mxu0 0.0
    %2063 = vmatprep.subr.mxu0 0.0
    %2064 = vmatpush1.msra.mxu0 0.0
    %2065 = vmatprep.subr.mxu0 0.0
    %2066 = vmatpush1.msra.mxu0 0.0
    %2067 = vmatprep.subr.mxu0 0.0
    %2068 = vmatpush1.msra.mxu0 0.0
    %2069 = vmatprep.subr.mxu0 0.0
    %2070 = vmatpush1.msra.mxu0 0.0
    %2071 = vmatprep.mubr.f32.mxu0 0.0
    %v2072 = vand.u32 %v1707, 4294901760
    %v2073 = vsub.f32 %v1707, %v2072
    %v2074 = vand.u32 %v2073, 4294901760
    %2075 = vmatmul.mubr.f32.gmra.mrb[0].mxu0 %v2074
    %v2076 = vpop.f32.mrb[0].mxu0
    %v2077 = vadd.f32 %v1991, %v2076
    %v2078 = vpop.f32.mrb[0].mxu0
    %2079 = vmatprep.mubr.f32.mxu0 0.0
    %v2080 = vand.u32 %v1710, 4294901760
    %v2081 = vsub.f32 %v1710, %v2080
    %v2082 = vand.u32 %v2081, 4294901760
    %2083 = vmatmul.mubr.f32.gmra.mrb[0].mxu0 %v2082
    %v2084 = vpop.f32.mrb[0].mxu0
    %v2085 = vadd.f32 %v1998, %v2084
    %v2086 = vpop.f32.mrb[0].mxu0
    %2087 = vdwg.mxu0
    %2088 = vmatprep.subr.mxu0 0.0
    %v2089 = vand.u32 %v1671, 4294901760
    %v2090 = vsub.f32 %v1671, %v2089
    %v2091 = vand.u32 %v2090, 4294901760
    %2092 = vmatpush1.msra.mxu0 %v2091
    %2093 = vmatprep.subr.mxu0 0.0
    %v2094 = vand.u32 %v1672, 4294901760
    %v2095 = vsub.f32 %v1672, %v2094
    %v2096 = vand.u32 %v2095, 4294901760
    %2097 = vmatpush1.msra.mxu0 %v2096
    %2098 = vmatprep.subr.mxu0 0.0
    %v2099 = vand.u32 %v1687, 4294901760
    %v2100 = vsub.f32 %v1687, %v2099
    %v2101 = vand.u32 %v2100, 4294901760
    %2102 = vmatpush1.msra.mxu0 %v2101
    %2103 = vmatprep.subr.mxu0 0.0
    %v2104 = vand.u32 %v1688, 4294901760
    %v2105 = vsub.f32 %v1688, %v2104
    %v2106 = vand.u32 %v2105, 4294901760
    %2107 = vmatpush1.msra.mxu0 %v2106
    %2108 = vmatprep.subr.mxu0 0.0
    %v2109 = vand.u32 %v1701, 4294901760
    %v2110 = vsub.f32 %v1701, %v2109
    %v2111 = vand.u32 %v2110, 4294901760
    %2112 = vmatpush1.msra.mxu0 %v2111
    %2113 = vmatprep.subr.mxu0 0.0
    %v2114 = vand.u32 %v1702, 4294901760
    %v2115 = vsub.f32 %v1702, %v2114
    %v2116 = vand.u32 %v2115, 4294901760
    %2117 = vmatpush1.msra.mxu0 %v2116
    %2118 = vmatprep.subr.mxu0 0.0
    %2119 = vmatpush1.msra.mxu0 0.0
    %2120 = vmatprep.subr.mxu0 0.0
    %2121 = vmatpush1.msra.mxu0 0.0
    %2122 = vmatprep.subr.mxu0 0.0
    %2123 = vmatpush1.msra.mxu0 0.0
    %2124 = vmatprep.subr.mxu0 0.0
    %2125 = vmatpush1.msra.mxu0 0.0
    %2126 = vmatprep.subr.mxu0 0.0
    %2127 = vmatpush1.msra.mxu0 0.0
    %2128 = vmatprep.subr.mxu0 0.0
    %2129 = vmatpush1.msra.mxu0 0.0
    %2130 = vmatprep.subr.mxu0 0.0
    %2131 = vmatpush1.msra.mxu0 0.0
    %2132 = vmatprep.subr.mxu0 0.0
    %2133 = vmatpush1.msra.mxu0 0.0
    %2134 = vmatprep.subr.mxu0 0.0
    %2135 = vmatpush1.msra.mxu0 0.0
    %2136 = vmatprep.subr.mxu0 0.0
    %2137 = vmatpush1.msra.mxu0 0.0
    %2138 = vmatprep.subr.mxu0 0.0
    %2139 = vmatpush1.msra.mxu0 0.0
    %2140 = vmatprep.subr.mxu0 0.0
    %2141 = vmatpush1.msra.mxu0 0.0
    %2142 = vmatprep.subr.mxu0 0.0
    %2143 = vmatpush1.msra.mxu0 0.0
    %2144 = vmatprep.subr.mxu0 0.0
    %2145 = vmatpush1.msra.mxu0 0.0
    %2146 = vmatprep.subr.mxu0 0.0
    %2147 = vmatpush1.msra.mxu0 0.0
    %2148 = vmatprep.subr.mxu0 0.0
    %2149 = vmatpush1.msra.mxu0 0.0
    %2150 = vmatprep.subr.mxu0 0.0
    %2151 = vmatpush1.msra.mxu0 0.0
    %2152 = vmatprep.subr.mxu0 0.0
    %2153 = vmatpush1.msra.mxu0 0.0
    %2154 = vmatprep.subr.mxu0 0.0
    %2155 = vmatpush1.msra.mxu0 0.0
    %2156 = vmatprep.subr.mxu0 0.0
    %2157 = vmatpush1.msra.mxu0 0.0
    %2158 = vmatprep.subr.mxu0 0.0
    %2159 = vmatpush1.msra.mxu0 0.0
    %2160 = vmatprep.subr.mxu0 0.0
    %2161 = vmatpush1.msra.mxu0 0.0
    %2162 = vmatprep.subr.mxu0 0.0
    %2163 = vmatpush1.msra.mxu0 0.0
    %2164 = vmatprep.subr.mxu0 0.0
    %2165 = vmatpush1.msra.mxu0 0.0
    %2166 = vmatprep.subr.mxu0 0.0
    %2167 = vmatpush1.msra.mxu0 0.0
    %2168 = vmatprep.subr.mxu0 0.0
    %2169 = vmatpush1.msra.mxu0 0.0
    %2170 = vmatprep.mubr.f32.mxu0 0.0
    %v2171 = vand.u32 %v1707, 4294901760
    %2172 = vmatmul.mubr.f32.gmra.mrb[0].mxu0 %v2171
    %v2173 = vpop.f32.mrb[0].mxu0
    %v2174 = vadd.f32 %v2077, %v2173
    %v2175 = vpop.f32.mrb[0].mxu0
    %2176 = vmatprep.mubr.f32.mxu0 0.0
    %v2177 = vand.u32 %v1710, 4294901760
    %2178 = vmatmul.mubr.f32.gmra.mrb[0].mxu0 %v2177
    %v2179 = vpop.f32.mrb[0].mxu0
    %v2180 = vadd.f32 %v2085, %v2179
    %v2181 = vpop.f32.mrb[0].mxu0
    %2182 = vdwg.mxu0
    %2183 = vmatprep.subr.mxu0 0.0
    %v2184 = vand.u32 %v1671, 4294901760
    %2185 = vmatpush1.msra.mxu0 %v2184
    %2186 = vmatprep.subr.mxu0 0.0
    %v2187 = vand.u32 %v1672, 4294901760
    %2188 = vmatpush1.msra.mxu0 %v2187
    %2189 = vmatprep.subr.mxu0 0.0
    %v2190 = vand.u32 %v1687, 4294901760
    %2191 = vmatpush1.msra.mxu0 %v2190
    %2192 = vmatprep.subr.mxu0 0.0
    %v2193 = vand.u32 %v1688, 4294901760
    %2194 = vmatpush1.msra.mxu0 %v2193
    %2195 = vmatprep.subr.mxu0 0.0
    %v2196 = vand.u32 %v1701, 4294901760
    %2197 = vmatpush1.msra.mxu0 %v2196
    %2198 = vmatprep.subr.mxu0 0.0
    %v2199 = vand.u32 %v1702, 4294901760
    %2200 = vmatpush1.msra.mxu0 %v2199
    %2201 = vmatprep.subr.mxu0 0.0
    %2202 = vmatpush1.msra.mxu0 0.0
    %2203 = vmatprep.subr.mxu0 0.0
    %2204 = vmatpush1.msra.mxu0 0.0
    %2205 = vmatprep.subr.mxu0 0.0
    %2206 = vmatpush1.msra.mxu0 0.0
    %2207 = vmatprep.subr.mxu0 0.0
    %2208 = vmatpush1.msra.mxu0 0.0
    %2209 = vmatprep.subr.mxu0 0.0
    %2210 = vmatpush1.msra.mxu0 0.0
    %2211 = vmatprep.subr.mxu0 0.0
    %2212 = vmatpush1.msra.mxu0 0.0
    %2213 = vmatprep.subr.mxu0 0.0
    %2214 = vmatpush1.msra.mxu0 0.0
    %2215 = vmatprep.subr.mxu0 0.0
    %2216 = vmatpush1.msra.mxu0 0.0
    %2217 = vmatprep.subr.mxu0 0.0
    %2218 = vmatpush1.msra.mxu0 0.0
    %2219 = vmatprep.subr.mxu0 0.0
    %2220 = vmatpush1.msra.mxu0 0.0
    %2221 = vmatprep.subr.mxu0 0.0
    %2222 = vmatpush1.msra.mxu0 0.0
    %2223 = vmatprep.subr.mxu0 0.0
    %2224 = vmatpush1.msra.mxu0 0.0
    %2225 = vmatprep.subr.mxu0 0.0
    %2226 = vmatpush1.msra.mxu0 0.0
    %2227 = vmatprep.subr.mxu0 0.0
    %2228 = vmatpush1.msra.mxu0 0.0
    %2229 = vmatprep.subr.mxu0 0.0
    %2230 = vmatpush1.msra.mxu0 0.0
    %2231 = vmatprep.subr.mxu0 0.0
    %2232 = vmatpush1.msra.mxu0 0.0
    %2233 = vmatprep.subr.mxu0 0.0
    %2234 = vmatpush1.msra.mxu0 0.0
    %2235 = vmatprep.subr.mxu0 0.0
    %2236 = vmatpush1.msra.mxu0 0.0
    %2237 = vmatprep.subr.mxu0 0.0
    %2238 = vmatpush1.msra.mxu0 0.0
    %2239 = vmatprep.subr.mxu0 0.0
    %2240 = vmatpush1.msra.mxu0 0.0
    %2241 = vmatprep.subr.mxu0 0.0
    %2242 = vmatpush1.msra.mxu0 0.0
    %2243 = vmatprep.subr.mxu0 0.0
    %2244 = vmatpush1.msra.mxu0 0.0
    %2245 = vmatprep.subr.mxu0 0.0
    %2246 = vmatpush1.msra.mxu0 0.0
    %2247 = vmatprep.subr.mxu0 0.0
    %2248 = vmatpush1.msra.mxu0 0.0
    %2249 = vmatprep.subr.mxu0 0.0
    %2250 = vmatpush1.msra.mxu0 0.0
    %2251 = vmatprep.subr.mxu0 0.0
    %2252 = vmatpush1.msra.mxu0 0.0
    %2253 = vmatprep.mubr.f32.mxu0 0.0
    %v2254 = vand.u32 %v1707, 4294901760
    %2255 = vmatmul.mubr.f32.gmra.mrb[0].mxu0 %v2254
    %v2256 = vpop.f32.mrb[0].mxu0
    %v2257 = vadd.f32 %v2174, %v2256
    %v2258 = vpop.f32.mrb[0].mxu0
    %2259 = vmatprep.mubr.f32.mxu0 0.0
    %v2260 = vand.u32 %v1710, 4294901760
    %2261 = vmatmul.mubr.f32.gmra.mrb[0].mxu0 %v2260
    %v2262 = vpop.f32.mrb[0].mxu0
    %v2263 = vadd.f32 %v2180, %v2262
    %v2264 = vpop.f32.mrb[0].mxu0
    %2265 = vdwg.mxu0
    %v2266 = vld [vmem:[%s8] sm:$0xff]
    %v2267 = vld [vmem:[%s8 + $0x8] sm:$0xff]
    %2269 = vset.pattern.permute.xlu0 0
    %2270 = vperm.xlu0 %2269, %v2266
    %v2271 = vpop.permute.xlu0 %2270
    %2274 = vset.pattern.permute.xlu0 0
    %2275 = vperm.xlu0 %2274, %v2267
    %v2276 = vpop.permute.xlu0 %2275
    %v2278 = vmul.f32 %v2257, %v2271
    %v2279 = vmul.f32 %v2263, %v2276
    %v2280 = vld [vmem:[%s9] sm:$0xff]
    %v2281 = vld [vmem:[%s9 + $0x8] sm:$0xff]
    %2283 = vset.pattern.permute.xlu0 0
    %2284 = vperm.xlu0 %2283, %v2280
    %v2285 = vpop.permute.xlu0 %2284
    %2288 = vset.pattern.permute.xlu0 0
    %2289 = vperm.xlu0 %2288, %v2281
    %v2290 = vpop.permute.xlu0 %2289
    %v2292 = vadd.f32 %v2278, %v2285
    %v2293 = vadd.f32 %v2279, %v2290
    %v2294 = vmax.f32 %v2292, 0.0
    %v2295 = vmax.f32 %v2293, 0.0
    %v2296 = vld [vmem:[%s10] sm:$0x1]
    %v2297 = vld [vmem:[#allocation3] sm:$0x1]
    %2299 = vset.pattern.permute.xlu0 0
    %2300 = vperm.xlu0 %2299, %v2297
    %v2301 = vpop.permute.xlu0 %2300
    %v2303 = vlaneseq
    %v2304 = vshrl.u32 %v2303, 7
    %v2305 = vsub.s32 0, %v2304
    %v2306 = vrot.slane %v2301, %v2305
    %vm2307 = vcmask 130048
    %v2309 = vsel %vm2307, %v2296, 0
    %2311 = vmatprep.subr.mxu0 0.0
    %v2312 = vand.u32 %v2294, 4294901760
    %2313 = vmatpush1.msra.mxu0 %v2312
    %2314 = vmatprep.subr.mxu0 0.0
    %v2315 = vand.u32 %v2295, 4294901760
    %2316 = vmatpush1.msra.mxu0 %v2315
    %2317 = vmatprep.subr.mxu0 0.0
    %2318 = vmatpush1.msra.mxu0 0.0
    %2319 = vmatprep.subr.mxu0 0.0
    %2320 = vmatpush1.msra.mxu0 0.0
    %2321 = vmatprep.subr.mxu0 0.0
    %2322 = vmatpush1.msra.mxu0 0.0
    %2323 = vmatprep.subr.mxu0 0.0
    %2324 = vmatpush1.msra.mxu0 0.0
    %2325 = vmatprep.subr.mxu0 0.0
    %2326 = vmatpush1.msra.mxu0 0.0
    %2327 = vmatprep.subr.mxu0 0.0
    %2328 = vmatpush1.msra.mxu0 0.0
    %2329 = vmatprep.subr.mxu0 0.0
    %2330 = vmatpush1.msra.mxu0 0.0
    %2331 = vmatprep.subr.mxu0 0.0
    %2332 = vmatpush1.msra.mxu0 0.0
    %2333 = vmatprep.subr.mxu0 0.0
    %2334 = vmatpush1.msra.mxu0 0.0
    %2335 = vmatprep.subr.mxu0 0.0
    %2336 = vmatpush1.msra.mxu0 0.0
    %2337 = vmatprep.subr.mxu0 0.0
    %2338 = vmatpush1.msra.mxu0 0.0
    %2339 = vmatprep.subr.mxu0 0.0
    %2340 = vmatpush1.msra.mxu0 0.0
    %2341 = vmatprep.subr.mxu0 0.0
    %2342 = vmatpush1.msra.mxu0 0.0
    %2343 = vmatprep.subr.mxu0 0.0
    %2344 = vmatpush1.msra.mxu0 0.0
    %2345 = vmatprep.subr.mxu0 0.0
    %2346 = vmatpush1.msra.mxu0 0.0
    %2347 = vmatprep.subr.mxu0 0.0
    %2348 = vmatpush1.msra.mxu0 0.0
    %2349 = vmatprep.subr.mxu0 0.0
    %2350 = vmatpush1.msra.mxu0 0.0
    %2351 = vmatprep.subr.mxu0 0.0
    %2352 = vmatpush1.msra.mxu0 0.0
    %2353 = vmatprep.subr.mxu0 0.0
    %2354 = vmatpush1.msra.mxu0 0.0
    %2355 = vmatprep.subr.mxu0 0.0
    %2356 = vmatpush1.msra.mxu0 0.0
    %2357 = vmatprep.subr.mxu0 0.0
    %2358 = vmatpush1.msra.mxu0 0.0
    %2359 = vmatprep.subr.mxu0 0.0
    %2360 = vmatpush1.msra.mxu0 0.0
    %2361 = vmatprep.subr.mxu0 0.0
    %2362 = vmatpush1.msra.mxu0 0.0
    %2363 = vmatprep.subr.mxu0 0.0
    %2364 = vmatpush1.msra.mxu0 0.0
    %2365 = vmatprep.subr.mxu0 0.0
    %2366 = vmatpush1.msra.mxu0 0.0
    %2367 = vmatprep.subr.mxu0 0.0
    %2368 = vmatpush1.msra.mxu0 0.0
    %2369 = vmatprep.subr.mxu0 0.0
    %2370 = vmatpush1.msra.mxu0 0.0
    %2371 = vmatprep.subr.mxu0 0.0
    %2372 = vmatpush1.msra.mxu0 0.0
    %2373 = vmatprep.subr.mxu0 0.0
    %2374 = vmatpush1.msra.mxu0 0.0
    %2375 = vmatprep.subr.mxu0 0.0
    %2376 = vmatpush1.msra.mxu0 0.0
    %2377 = vmatprep.mubr.f32.mxu0 0.0
    %v2378 = vand.u32 %v2309, 4294901760
    %v2379 = vsub.f32 %v2309, %v2378
    %v2380 = vand.u32 %v2379, 4294901760
    %v2381 = vsub.f32 %v2379, %v2380
    %v2382 = vand.u32 %v2381, 4294901760
    %2383 = vmatmul.mubr.f32.gmra.mrb[0].mxu0 %v2382
    %v2384 = vpop.f32.mrb[0].mxu0
    %v2385 = vadd.f32 %v2306, %v2384
    %v2386 = vpop.f32.mrb[0].mxu0
    %2387 = vdwg.mxu0
    %2388 = vmatprep.subr.mxu0 0.0
    %v2389 = vand.u32 %v2294, 4294901760
    %v2390 = vsub.f32 %v2294, %v2389
    %v2391 = vand.u32 %v2390, 4294901760
    %v2392 = vsub.f32 %v2390, %v2391
    %v2393 = vand.u32 %v2392, 4294901760
    %2394 = vmatpush1.msra.mxu0 %v2393
    %2395 = vmatprep.subr.mxu0 0.0
    %v2396 = vand.u32 %v2295, 4294901760
    %v2397 = vsub.f32 %v2295, %v2396
    %v2398 = vand.u32 %v2397, 4294901760
    %v2399 = vsub.f32 %v2397, %v2398
    %v2400 = vand.u32 %v2399, 4294901760
    %2401 = vmatpush1.msra.mxu0 %v2400
    %2402 = vmatprep.subr.mxu0 0.0
    %2403 = vmatpush1.msra.mxu0 0.0
    %2404 = vmatprep.subr.mxu0 0.0
    %2405 = vmatpush1.msra.mxu0 0.0
    %2406 = vmatprep.subr.mxu0 0.0
    %2407 = vmatpush1.msra.mxu0 0.0
    %2408 = vmatprep.subr.mxu0 0.0
    %2409 = vmatpush1.msra.mxu0 0.0
    %2410 = vmatprep.subr.mxu0 0.0
    %2411 = vmatpush1.msra.mxu0 0.0
    %2412 = vmatprep.subr.mxu0 0.0
    %2413 = vmatpush1.msra.mxu0 0.0
    %2414 = vmatprep.subr.mxu0 0.0
    %2415 = vmatpush1.msra.mxu0 0.0
    %2416 = vmatprep.subr.mxu0 0.0
    %2417 = vmatpush1.msra.mxu0 0.0
    %2418 = vmatprep.subr.mxu0 0.0
    %2419 = vmatpush1.msra.mxu0 0.0
    %2420 = vmatprep.subr.mxu0 0.0
    %2421 = vmatpush1.msra.mxu0 0.0
    %2422 = vmatprep.subr.mxu0 0.0
    %2423 = vmatpush1.msra.mxu0 0.0
    %2424 = vmatprep.subr.mxu0 0.0
    %2425 = vmatpush1.msra.mxu0 0.0
    %2426 = vmatprep.subr.mxu0 0.0
    %2427 = vmatpush1.msra.mxu0 0.0
    %2428 = vmatprep.subr.mxu0 0.0
    %2429 = vmatpush1.msra.mxu0 0.0
    %2430 = vmatprep.subr.mxu0 0.0
    %2431 = vmatpush1.msra.mxu0 0.0
    %2432 = vmatprep.subr.mxu0 0.0
    %2433 = vmatpush1.msra.mxu0 0.0
    %2434 = vmatprep.subr.mxu0 0.0
    %2435 = vmatpush1.msra.mxu0 0.0
    %2436 = vmatprep.subr.mxu0 0.0
    %2437 = vmatpush1.msra.mxu0 0.0
    %2438 = vmatprep.subr.mxu0 0.0
    %2439 = vmatpush1.msra.mxu0 0.0
    %2440 = vmatprep.subr.mxu0 0.0
    %2441 = vmatpush1.msra.mxu0 0.0
    %2442 = vmatprep.subr.mxu0 0.0
    %2443 = vmatpush1.msra.mxu0 0.0
    %2444 = vmatprep.subr.mxu0 0.0
    %2445 = vmatpush1.msra.mxu0 0.0
    %2446 = vmatprep.subr.mxu0 0.0
    %2447 = vmatpush1.msra.mxu0 0.0
    %2448 = vmatprep.subr.mxu0 0.0
    %2449 = vmatpush1.msra.mxu0 0.0
    %2450 = vmatprep.subr.mxu0 0.0
    %2451 = vmatpush1.msra.mxu0 0.0
    %2452 = vmatprep.subr.mxu0 0.0
    %2453 = vmatpush1.msra.mxu0 0.0
    %2454 = vmatprep.subr.mxu0 0.0
    %2455 = vmatpush1.msra.mxu0 0.0
    %2456 = vmatprep.subr.mxu0 0.0
    %2457 = vmatpush1.msra.mxu0 0.0
    %2458 = vmatprep.subr.mxu0 0.0
    %2459 = vmatpush1.msra.mxu0 0.0
    %2460 = vmatprep.subr.mxu0 0.0
    %2461 = vmatpush1.msra.mxu0 0.0
    %2462 = vmatprep.mubr.f32.mxu0 0.0
    %v2463 = vand.u32 %v2309, 4294901760
    %2464 = vmatmul.mubr.f32.gmra.mrb[0].mxu0 %v2463
    %v2465 = vpop.f32.mrb[0].mxu0
    %v2466 = vadd.f32 %v2385, %v2465
    %v2467 = vpop.f32.mrb[0].mxu0
    %2468 = vdwg.mxu0
    %2469 = vmatprep.subr.mxu0 0.0
    %v2470 = vand.u32 %v2294, 4294901760
    %v2471 = vsub.f32 %v2294, %v2470
    %2472 = vmatpush1.msra.mxu0 %v2471
    %2473 = vmatprep.subr.mxu0 0.0
    %v2474 = vand.u32 %v2295, 4294901760
    %v2475 = vsub.f32 %v2295, %v2474
    %2476 = vmatpush1.msra.mxu0 %v2475
    %2477 = vmatprep.subr.mxu0 0.0
    %2478 = vmatpush1.msra.mxu0 0.0
    %2479 = vmatprep.subr.mxu0 0.0
    %2480 = vmatpush1.msra.mxu0 0.0
    %2481 = vmatprep.subr.mxu0 0.0
    %2482 = vmatpush1.msra.mxu0 0.0
    %2483 = vmatprep.subr.mxu0 0.0
    %2484 = vmatpush1.msra.mxu0 0.0
    %2485 = vmatprep.subr.mxu0 0.0
    %2486 = vmatpush1.msra.mxu0 0.0
    %2487 = vmatprep.subr.mxu0 0.0
    %2488 = vmatpush1.msra.mxu0 0.0
    %2489 = vmatprep.subr.mxu0 0.0
    %2490 = vmatpush1.msra.mxu0 0.0
    %2491 = vmatprep.subr.mxu0 0.0
    %2492 = vmatpush1.msra.mxu0 0.0
    %2493 = vmatprep.subr.mxu0 0.0
    %2494 = vmatpush1.msra.mxu0 0.0
    %2495 = vmatprep.subr.mxu0 0.0
    %2496 = vmatpush1.msra.mxu0 0.0
    %2497 = vmatprep.subr.mxu0 0.0
    %2498 = vmatpush1.msra.mxu0 0.0
    %2499 = vmatprep.subr.mxu0 0.0
    %2500 = vmatpush1.msra.mxu0 0.0
    %2501 = vmatprep.subr.mxu0 0.0
    %2502 = vmatpush1.msra.mxu0 0.0
    %2503 = vmatprep.subr.mxu0 0.0
    %2504 = vmatpush1.msra.mxu0 0.0
    %2505 = vmatprep.subr.mxu0 0.0
    %2506 = vmatpush1.msra.mxu0 0.0
    %2507 = vmatprep.subr.mxu0 0.0
    %2508 = vmatpush1.msra.mxu0 0.0
    %2509 = vmatprep.subr.mxu0 0.0
    %2510 = vmatpush1.msra.mxu0 0.0
    %2511 = vmatprep.subr.mxu0 0.0
    %2512 = vmatpush1.msra.mxu0 0.0
    %2513 = vmatprep.subr.mxu0 0.0
    %2514 = vmatpush1.msra.mxu0 0.0
    %2515 = vmatprep.subr.mxu0 0.0
    %2516 = vmatpush1.msra.mxu0 0.0
    %2517 = vmatprep.subr.mxu0 0.0
    %2518 = vmatpush1.msra.mxu0 0.0
    %2519 = vmatprep.subr.mxu0 0.0
    %2520 = vmatpush1.msra.mxu0 0.0
    %2521 = vmatprep.subr.mxu0 0.0
    %2522 = vmatpush1.msra.mxu0 0.0
    %2523 = vmatprep.subr.mxu0 0.0
    %2524 = vmatpush1.msra.mxu0 0.0
    %2525 = vmatprep.subr.mxu0 0.0
    %2526 = vmatpush1.msra.mxu0 0.0
    %2527 = vmatprep.subr.mxu0 0.0
    %2528 = vmatpush1.msra.mxu0 0.0
    %2529 = vmatprep.subr.mxu0 0.0
    %2530 = vmatpush1.msra.mxu0 0.0
    %2531 = vmatprep.subr.mxu0 0.0
    %2532 = vmatpush1.msra.mxu0 0.0
    %2533 = vmatprep.subr.mxu0 0.0
    %2534 = vmatpush1.msra.mxu0 0.0
    %2535 = vmatprep.subr.mxu0 0.0
    %2536 = vmatpush1.msra.mxu0 0.0
    %2537 = vmatprep.mubr.f32.mxu0 0.0
    %v2538 = vand.u32 %v2309, 4294901760
    %v2539 = vsub.f32 %v2309, %v2538
    %2540 = vmatmul.mubr.f32.gmra.mrb[0].mxu0 %v2539
    %v2541 = vpop.f32.mrb[0].mxu0
    %v2542 = vadd.f32 %v2466, %v2541
    %v2543 = vpop.f32.mrb[0].mxu0
    %2544 = vdwg.mxu0
    %2545 = vmatprep.subr.mxu0 0.0
    %v2546 = vand.u32 %v2294, 4294901760
    %2547 = vmatpush1.msra.mxu0 %v2546
    %2548 = vmatprep.subr.mxu0 0.0
    %v2549 = vand.u32 %v2295, 4294901760
    %2550 = vmatpush1.msra.mxu0 %v2549
    %2551 = vmatprep.subr.mxu0 0.0
    %2552 = vmatpush1.msra.mxu0 0.0
    %2553 = vmatprep.subr.mxu0 0.0
    %2554 = vmatpush1.msra.mxu0 0.0
    %2555 = vmatprep.subr.mxu0 0.0
    %2556 = vmatpush1.msra.mxu0 0.0
    %2557 = vmatprep.subr.mxu0 0.0
    %2558 = vmatpush1.msra.mxu0 0.0
    %2559 = vmatprep.subr.mxu0 0.0
    %2560 = vmatpush1.msra.mxu0 0.0
    %2561 = vmatprep.subr.mxu0 0.0
    %2562 = vmatpush1.msra.mxu0 0.0
    %2563 = vmatprep.subr.mxu0 0.0
    %2564 = vmatpush1.msra.mxu0 0.0
    %2565 = vmatprep.subr.mxu0 0.0
    %2566 = vmatpush1.msra.mxu0 0.0
    %2567 = vmatprep.subr.mxu0 0.0
    %2568 = vmatpush1.msra.mxu0 0.0
    %2569 = vmatprep.subr.mxu0 0.0
    %2570 = vmatpush1.msra.mxu0 0.0
    %2571 = vmatprep.subr.mxu0 0.0
    %2572 = vmatpush1.msra.mxu0 0.0
    %2573 = vmatprep.subr.mxu0 0.0
    %2574 = vmatpush1.msra.mxu0 0.0
    %2575 = vmatprep.subr.mxu0 0.0
    %2576 = vmatpush1.msra.mxu0 0.0
    %2577 = vmatprep.subr.mxu0 0.0
    %2578 = vmatpush1.msra.mxu0 0.0
    %2579 = vmatprep.subr.mxu0 0.0
    %2580 = vmatpush1.msra.mxu0 0.0
    %2581 = vmatprep.subr.mxu0 0.0
    %2582 = vmatpush1.msra.mxu0 0.0
    %2583 = vmatprep.subr.mxu0 0.0
    %2584 = vmatpush1.msra.mxu0 0.0
    %2585 = vmatprep.subr.mxu0 0.0
    %2586 = vmatpush1.msra.mxu0 0.0
    %2587 = vmatprep.subr.mxu0 0.0
    %2588 = vmatpush1.msra.mxu0 0.0
    %2589 = vmatprep.subr.mxu0 0.0
    %2590 = vmatpush1.msra.mxu0 0.0
    %2591 = vmatprep.subr.mxu0 0.0
    %2592 = vmatpush1.msra.mxu0 0.0
    %2593 = vmatprep.subr.mxu0 0.0
    %2594 = vmatpush1.msra.mxu0 0.0
    %2595 = vmatprep.subr.mxu0 0.0
    %2596 = vmatpush1.msra.mxu0 0.0
    %2597 = vmatprep.subr.mxu0 0.0
    %2598 = vmatpush1.msra.mxu0 0.0
    %2599 = vmatprep.subr.mxu0 0.0
    %2600 = vmatpush1.msra.mxu0 0.0
    %2601 = vmatprep.subr.mxu0 0.0
    %2602 = vmatpush1.msra.mxu0 0.0
    %2603 = vmatprep.subr.mxu0 0.0
    %2604 = vmatpush1.msra.mxu0 0.0
    %2605 = vmatprep.subr.mxu0 0.0
    %2606 = vmatpush1.msra.mxu0 0.0
    %2607 = vmatprep.subr.mxu0 0.0
    %2608 = vmatpush1.msra.mxu0 0.0
    %2609 = vmatprep.subr.mxu0 0.0
    %2610 = vmatpush1.msra.mxu0 0.0
    %2611 = vmatprep.mubr.f32.mxu0 0.0
    %v2612 = vand.u32 %v2309, 4294901760
    %v2613 = vsub.f32 %v2309, %v2612
    %v2614 = vand.u32 %v2613, 4294901760
    %2615 = vmatmul.mubr.f32.gmra.mrb[0].mxu0 %v2614
    %v2616 = vpop.f32.mrb[0].mxu0
    %v2617 = vadd.f32 %v2542, %v2616
    %v2618 = vpop.f32.mrb[0].mxu0
    %2619 = vdwg.mxu0
    %2620 = vmatprep.subr.mxu0 0.0
    %v2621 = vand.u32 %v2294, 4294901760
    %v2622 = vsub.f32 %v2294, %v2621
    %v2623 = vand.u32 %v2622, 4294901760
    %2624 = vmatpush1.msra.mxu0 %v2623
    %2625 = vmatprep.subr.mxu0 0.0
    %v2626 = vand.u32 %v2295, 4294901760
    %v2627 = vsub.f32 %v2295, %v2626
    %v2628 = vand.u32 %v2627, 4294901760
    %2629 = vmatpush1.msra.mxu0 %v2628
    %2630 = vmatprep.subr.mxu0 0.0
    %2631 = vmatpush1.msra.mxu0 0.0
    %2632 = vmatprep.subr.mxu0 0.0
    %2633 = vmatpush1.msra.mxu0 0.0
    %2634 = vmatprep.subr.mxu0 0.0
    %2635 = vmatpush1.msra.mxu0 0.0
    %2636 = vmatprep.subr.mxu0 0.0
    %2637 = vmatpush1.msra.mxu0 0.0
    %2638 = vmatprep.subr.mxu0 0.0
    %2639 = vmatpush1.msra.mxu0 0.0
    %2640 = vmatprep.subr.mxu0 0.0
    %2641 = vmatpush1.msra.mxu0 0.0
    %2642 = vmatprep.subr.mxu0 0.0
    %2643 = vmatpush1.msra.mxu0 0.0
    %2644 = vmatprep.subr.mxu0 0.0
    %2645 = vmatpush1.msra.mxu0 0.0
    %2646 = vmatprep.subr.mxu0 0.0
    %2647 = vmatpush1.msra.mxu0 0.0
    %2648 = vmatprep.subr.mxu0 0.0
    %2649 = vmatpush1.msra.mxu0 0.0
    %2650 = vmatprep.subr.mxu0 0.0
    %2651 = vmatpush1.msra.mxu0 0.0
    %2652 = vmatprep.subr.mxu0 0.0
    %2653 = vmatpush1.msra.mxu0 0.0
    %2654 = vmatprep.subr.mxu0 0.0
    %2655 = vmatpush1.msra.mxu0 0.0
    %2656 = vmatprep.subr.mxu0 0.0
    %2657 = vmatpush1.msra.mxu0 0.0
    %2658 = vmatprep.subr.mxu0 0.0
    %2659 = vmatpush1.msra.mxu0 0.0
    %2660 = vmatprep.subr.mxu0 0.0
    %2661 = vmatpush1.msra.mxu0 0.0
    %2662 = vmatprep.subr.mxu0 0.0
    %2663 = vmatpush1.msra.mxu0 0.0
    %2664 = vmatprep.subr.mxu0 0.0
    %2665 = vmatpush1.msra.mxu0 0.0
    %2666 = vmatprep.subr.mxu0 0.0
    %2667 = vmatpush1.msra.mxu0 0.0
    %2668 = vmatprep.subr.mxu0 0.0
    %2669 = vmatpush1.msra.mxu0 0.0
    %2670 = vmatprep.subr.mxu0 0.0
    %2671 = vmatpush1.msra.mxu0 0.0
    %2672 = vmatprep.subr.mxu0 0.0
    %2673 = vmatpush1.msra.mxu0 0.0
    %2674 = vmatprep.subr.mxu0 0.0
    %2675 = vmatpush1.msra.mxu0 0.0
    %2676 = vmatprep.subr.mxu0 0.0
    %2677 = vmatpush1.msra.mxu0 0.0
    %2678 = vmatprep.subr.mxu0 0.0
    %2679 = vmatpush1.msra.mxu0 0.0
    %2680 = vmatprep.subr.mxu0 0.0
    %2681 = vmatpush1.msra.mxu0 0.0
    %2682 = vmatprep.subr.mxu0 0.0
    %2683 = vmatpush1.msra.mxu0 0.0
    %2684 = vmatprep.subr.mxu0 0.0
    %2685 = vmatpush1.msra.mxu0 0.0
    %2686 = vmatprep.subr.mxu0 0.0
    %2687 = vmatpush1.msra.mxu0 0.0
    %2688 = vmatprep.subr.mxu0 0.0
    %2689 = vmatpush1.msra.mxu0 0.0
    %2690 = vmatprep.mubr.f32.mxu0 0.0
    %v2691 = vand.u32 %v2309, 4294901760
    %2692 = vmatmul.mubr.f32.gmra.mrb[0].mxu0 %v2691
    %v2693 = vpop.f32.mrb[0].mxu0
    %v2694 = vadd.f32 %v2617, %v2693
    %v2695 = vpop.f32.mrb[0].mxu0
    %2696 = vdwg.mxu0
    %2697 = vmatprep.subr.mxu0 0.0
    %v2698 = vand.u32 %v2294, 4294901760
    %2699 = vmatpush1.msra.mxu0 %v2698
    %2700 = vmatprep.subr.mxu0 0.0
    %v2701 = vand.u32 %v2295, 4294901760
    %2702 = vmatpush1.msra.mxu0 %v2701
    %2703 = vmatprep.subr.mxu0 0.0
    %2704 = vmatpush1.msra.mxu0 0.0
    %2705 = vmatprep.subr.mxu0 0.0
    %2706 = vmatpush1.msra.mxu0 0.0
    %2707 = vmatprep.subr.mxu0 0.0
    %2708 = vmatpush1.msra.mxu0 0.0
    %2709 = vmatprep.subr.mxu0 0.0
    %2710 = vmatpush1.msra.mxu0 0.0
    %2711 = vmatprep.subr.mxu0 0.0
    %2712 = vmatpush1.msra.mxu0 0.0
    %2713 = vmatprep.subr.mxu0 0.0
    %2714 = vmatpush1.msra.mxu0 0.0
    %2715 = vmatprep.subr.mxu0 0.0
    %2716 = vmatpush1.msra.mxu0 0.0
    %2717 = vmatprep.subr.mxu0 0.0
    %2718 = vmatpush1.msra.mxu0 0.0
    %2719 = vmatprep.subr.mxu0 0.0
    %2720 = vmatpush1.msra.mxu0 0.0
    %2721 = vmatprep.subr.mxu0 0.0
    %2722 = vmatpush1.msra.mxu0 0.0
    %2723 = vmatprep.subr.mxu0 0.0
    %2724 = vmatpush1.msra.mxu0 0.0
    %2725 = vmatprep.subr.mxu0 0.0
    %2726 = vmatpush1.msra.mxu0 0.0
    %2727 = vmatprep.subr.mxu0 0.0
    %2728 = vmatpush1.msra.mxu0 0.0
    %2729 = vmatprep.subr.mxu0 0.0
    %2730 = vmatpush1.msra.mxu0 0.0
    %2731 = vmatprep.subr.mxu0 0.0
    %2732 = vmatpush1.msra.mxu0 0.0
    %2733 = vmatprep.subr.mxu0 0.0
    %2734 = vmatpush1.msra.mxu0 0.0
    %2735 = vmatprep.subr.mxu0 0.0
    %2736 = vmatpush1.msra.mxu0 0.0
    %2737 = vmatprep.subr.mxu0 0.0
    %2738 = vmatpush1.msra.mxu0 0.0
    %2739 = vmatprep.subr.mxu0 0.0
    %2740 = vmatpush1.msra.mxu0 0.0
    %2741 = vmatprep.subr.mxu0 0.0
    %2742 = vmatpush1.msra.mxu0 0.0
    %2743 = vmatprep.subr.mxu0 0.0
    %2744 = vmatpush1.msra.mxu0 0.0
    %2745 = vmatprep.subr.mxu0 0.0
    %2746 = vmatpush1.msra.mxu0 0.0
    %2747 = vmatprep.subr.mxu0 0.0
    %2748 = vmatpush1.msra.mxu0 0.0
    %2749 = vmatprep.subr.mxu0 0.0
    %2750 = vmatpush1.msra.mxu0 0.0
    %2751 = vmatprep.subr.mxu0 0.0
    %2752 = vmatpush1.msra.mxu0 0.0
    %2753 = vmatprep.subr.mxu0 0.0
    %2754 = vmatpush1.msra.mxu0 0.0
    %2755 = vmatprep.subr.mxu0 0.0
    %2756 = vmatpush1.msra.mxu0 0.0
    %2757 = vmatprep.subr.mxu0 0.0
    %2758 = vmatpush1.msra.mxu0 0.0
    %2759 = vmatprep.subr.mxu0 0.0
    %2760 = vmatpush1.msra.mxu0 0.0
    %2761 = vmatprep.subr.mxu0 0.0
    %2762 = vmatpush1.msra.mxu0 0.0
    %2763 = vmatprep.mubr.f32.mxu0 0.0
    %v2764 = vand.u32 %v2309, 4294901760
    %2765 = vmatmul.mubr.f32.gmra.mrb[0].mxu0 %v2764
    %v2766 = vpop.f32.mrb[0].mxu0
    %v2767 = vadd.f32 %v2694, %v2766
    %v2768 = vpop.f32.mrb[0].mxu0
    %2769 = vdwg.mxu0
    %v2770 = vmax.f32 %v2767, 0.0
    %v2773 = vrot.slane %v1658, 7
    %v2774 = vrot.slane %v1659, 7
    %v2775 = vsel %vm79, %v2773, %v2774
    %v2780 = vrot.slane %v2770, 7
    %v2782 = vsel %vm79, 0.0, %v2773
    %v2783 = vsel %vm79, %v2774, %v2780
    %vm2784 = vcmask 1041408
    %v2785 = vsel %vm2784, %v2783, 0.0
    %v2788 = vrot.slane %v2782, 1
    %v2789 = vrot.slane %v2775, 1
    %v2790 = vsel %vm144, %v2788, %v2789
    %v2791 = vrot.slane %v2785, 1
    %v2792 = vsel %vm144, %v2789, %v2791
    %2793 = vrot.lane.b32.xlu0 %v2790, 8
    %v2794 = vpop.permute.xlu0 %2793
    %2795 = vrot.lane.b32.xlu0 %v2792, 8
    %v2796 = vpop.permute.xlu0 %2795
    %2797 = vrot.lane.b32.xlu0 %v2791, 8
    %v2798 = vpop.permute.xlu0 %2797
    %v2802 = vrot.slane %v2782, 2
    %v2803 = vrot.slane %v2775, 2
    %v2804 = vsel %vm157, %v2802, %v2803
    %v2805 = vrot.slane %v2785, 2
    %v2806 = vsel %vm157, %v2803, %v2805
    %2807 = vrot.lane.b32.xlu0 %v2804, 16
    %v2808 = vpop.permute.xlu0 %2807
    %2809 = vrot.lane.b32.xlu0 %v2806, 16
    %v2810 = vpop.permute.xlu0 %2809
    %2811 = vrot.lane.b32.xlu0 %v2805, 16
    %v2812 = vpop.permute.xlu0 %2811
    %v2816 = vsel %vm1670, %v2782, %v2794
    %v2817 = vsel %vm1670, %v2775, %v2796
    %v2818 = vsel %vm1670, %v2785, %v2798
    %v2819 = vsel %vm2307, %v2816, %v2808
    %v2820 = vsel %vm2307, %v2817, %v2810
    %v2821 = vsel %vm2307, %v2818, %v2812
    %v2824 = vrot.slane %v1660, 7
    %v2825 = vrot.slane %v1661, 7
    %v2826 = vsel %vm79, %v2824, %v2825
    %2830 = vrot.lane.b32.xlu0 %v2780, 120
    %v2831 = vpop.permute.xlu0 %2830
    %v2833 = vsel %vm79, 0.0, %v2824
    %v2834 = vsel %vm79, %v2825, %v2831
    %v2835 = vsel %vm2784, %v2834, 0.0
    %v2838 = vrot.slane %v2833, 1
    %v2839 = vrot.slane %v2826, 1
    %v2840 = vsel %vm144, %v2838, %v2839
    %v2841 = vrot.slane %v2835, 1
    %v2842 = vsel %vm144, %v2839, %v2841
    %2843 = vrot.lane.b32.xlu0 %v2840, 8
    %v2844 = vpop.permute.xlu0 %2843
    %2845 = vrot.lane.b32.xlu0 %v2842, 8
    %v2846 = vpop.permute.xlu0 %2845
    %2847 = vrot.lane.b32.xlu0 %v2841, 8
    %v2848 = vpop.permute.xlu0 %2847
    %v2852 = vrot.slane %v2833, 2
    %v2853 = vrot.slane %v2826, 2
    %v2854 = vsel %vm157, %v2852, %v2853
    %v2855 = vrot.slane %v2835, 2
    %v2856 = vsel %vm157, %v2853, %v2855
    %2857 = vrot.lane.b32.xlu0 %v2854, 16
    %v2858 = vpop.permute.xlu0 %2857
    %2859 = vrot.lane.b32.xlu0 %v2856, 16
    %v2860 = vpop.permute.xlu0 %2859
    %2861 = vrot.lane.b32.xlu0 %v2855, 16
    %v2862 = vpop.permute.xlu0 %2861
    %v2866 = vsel %vm1670, %v2833, %v2844
    %v2867 = vsel %vm1670, %v2826, %v2846
    %v2868 = vsel %vm1670, %v2835, %v2848
    %v2869 = vsel %vm2307, %v2866, %v2858
    %v2870 = vsel %vm2307, %v2867, %v2860
    %v2871 = vsel %vm2307, %v2868, %v2862
    %v2875 = vrot.slane %v2869, 7
    %v2876 = vrot.slane %v2870, 7
    %v2877 = vsel %vm79, %v2875, %v2876
    %v2878 = vrot.slane %v2871, 7
    %v2879 = vsel %vm79, %v2876, %v2878
    %v2881 = vsel %vm79, %v2821, %v2875
    %v2882 = vld [vmem:[%s12] sm:$0xff]
    %v2883 = vld [vmem:[%s12 + $0x8] sm:$0xff]
    %v2884 = vld [vmem:[%s12 + $0x10] sm:$0xff]
    %vm2885 = vcmask 195584
    %v2887 = vsel %vm2885, %v2819, 0
    %v2890 = vsel %vm2885, %v2820, 0
    %v2893 = vsel %vm2885, %v2881, 0
    %v2895 = vsel %vm2885, %v2877, 0
    %v2897 = vsel %vm2885, %v2879, 0
    %2899 = vmatprep.subr.mxu0 0.0
    %v2900 = vand.u32 %v2882, 4294901760
    %2901 = vmatpush1.msra.mxu0 %v2900
    %2902 = vmatprep.subr.mxu0 0.0
    %v2903 = vand.u32 %v2883, 4294901760
    %2904 = vmatpush1.msra.mxu0 %v2903
    %2905 = vmatprep.subr.mxu0 0.0
    %v2906 = vand.u32 %v2884, 4294901760
    %2907 = vmatpush1.msra.mxu0 %v2906
    %2908 = vmatprep.subr.mxu0 0.0
    %2909 = vmatpush1.msra.mxu0 0.0
    %2910 = vmatprep.subr.mxu0 0.0
    %2911 = vmatpush1.msra.mxu0 0.0
    %2912 = vmatprep.subr.mxu0 0.0
    %2913 = vmatpush1.msra.mxu0 0.0
    %2914 = vmatprep.subr.mxu0 0.0
    %2915 = vmatpush1.msra.mxu0 0.0
    %2916 = vmatprep.subr.mxu0 0.0
    %2917 = vmatpush1.msra.mxu0 0.0
    %2918 = vmatprep.subr.mxu0 0.0
    %2919 = vmatpush1.msra.mxu0 0.0
    %2920 = vmatprep.subr.mxu0 0.0
    %2921 = vmatpush1.msra.mxu0 0.0
    %2922 = vmatprep.subr.mxu0 0.0
    %2923 = vmatpush1.msra.mxu0 0.0
    %2924 = vmatprep.subr.mxu0 0.0
    %2925 = vmatpush1.msra.mxu0 0.0
    %2926 = vmatprep.subr.mxu0 0.0
    %2927 = vmatpush1.msra.mxu0 0.0
    %2928 = vmatprep.subr.mxu0 0.0
    %2929 = vmatpush1.msra.mxu0 0.0
    %2930 = vmatprep.subr.mxu0 0.0
    %2931 = vmatpush1.msra.mxu0 0.0
    %2932 = vmatprep.subr.mxu0 0.0
    %2933 = vmatpush1.msra.mxu0 0.0
    %2934 = vmatprep.subr.mxu0 0.0
    %2935 = vmatpush1.msra.mxu0 0.0
    %2936 = vmatprep.subr.mxu0 0.0
    %2937 = vmatpush1.msra.mxu0 0.0
    %2938 = vmatprep.subr.mxu0 0.0
    %2939 = vmatpush1.msra.mxu0 0.0
    %2940 = vmatprep.subr.mxu0 0.0
    %2941 = vmatpush1.msra.mxu0 0.0
    %2942 = vmatprep.subr.mxu0 0.0
    %2943 = vmatpush1.msra.mxu0 0.0
    %2944 = vmatprep.subr.mxu0 0.0
    %2945 = vmatpush1.msra.mxu0 0.0
    %2946 = vmatprep.subr.mxu0 0.0
    %2947 = vmatpush1.msra.mxu0 0.0
    %2948 = vmatprep.subr.mxu0 0.0
    %2949 = vmatpush1.msra.mxu0 0.0
    %2950 = vmatprep.subr.mxu0 0.0
    %2951 = vmatpush1.msra.mxu0 0.0
    %2952 = vmatprep.subr.mxu0 0.0
    %2953 = vmatpush1.msra.mxu0 0.0
    %2954 = vmatprep.subr.mxu0 0.0
    %2955 = vmatpush1.msra.mxu0 0.0
    %2956 = vmatprep.subr.mxu0 0.0
    %2957 = vmatpush1.msra.mxu0 0.0
    %2958 = vmatprep.subr.mxu0 0.0
    %2959 = vmatpush1.msra.mxu0 0.0
    %2960 = vmatprep.subr.mxu0 0.0
    %2961 = vmatpush1.msra.mxu0 0.0
    %2962 = vmatprep.subr.mxu0 0.0
    %2963 = vmatpush1.msra.mxu0 0.0
    %2964 = vmatprep.subr.mxu0 0.0
    %2965 = vmatpush1.msra.mxu0 0.0
    %2966 = vmatprep.mubr.f32.mxu0 0.0
    %v2967 = vand.u32 %v2887, 4294901760
    %v2968 = vsub.f32 %v2887, %v2967
    %v2969 = vand.u32 %v2968, 4294901760
    %v2970 = vsub.f32 %v2968, %v2969
    %v2971 = vand.u32 %v2970, 4294901760
    %2972 = vmatmul.mubr.f32.gmra.mrb[0].mxu0 %v2971
    %v2973 = vpop.f32.mrb[0].mxu0
    %v2974 = vadd.f32 0.0, %v2973
    %v2975 = vpop.f32.mrb[0].mxu0
    %2976 = vmatprep.mubr.f32.mxu0 0.0
    %v2977 = vand.u32 %v2890, 4294901760
    %v2978 = vsub.f32 %v2890, %v2977
    %v2979 = vand.u32 %v2978, 4294901760
    %v2980 = vsub.f32 %v2978, %v2979
    %v2981 = vand.u32 %v2980, 4294901760
    %2982 = vmatmul.mubr.f32.gmra.mrb[0].mxu0 %v2981
    %v2983 = vpop.f32.mrb[0].mxu0
    %v2984 = vadd.f32 0.0, %v2983
    %v2985 = vpop.f32.mrb[0].mxu0
    %2986 = vmatprep.mubr.f32.mxu0 0.0
    %v2987 = vand.u32 %v2893, 4294901760
    %v2988 = vsub.f32 %v2893, %v2987
    %v2989 = vand.u32 %v2988, 4294901760
    %v2990 = vsub.f32 %v2988, %v2989
    %v2991 = vand.u32 %v2990, 4294901760
    %2992 = vmatmul.mubr.f32.gmra.mrb[0].mxu0 %v2991
    %v2993 = vpop.f32.mrb[0].mxu0
    %v2994 = vadd.f32 0.0, %v2993
    %v2995 = vpop.f32.mrb[0].mxu0
    %2996 = vmatprep.mubr.f32.mxu0 0.0
    %v2997 = vand.u32 %v2895, 4294901760
    %v2998 = vsub.f32 %v2895, %v2997
    %v2999 = vand.u32 %v2998, 4294901760
    %v3000 = vsub.f32 %v2998, %v2999
    %v3001 = vand.u32 %v3000, 4294901760
    %3002 = vmatmul.mubr.f32.gmra.mrb[0].mxu0 %v3001
    %v3003 = vpop.f32.mrb[0].mxu0
    %v3004 = vadd.f32 0.0, %v3003
    %v3005 = vpop.f32.mrb[0].mxu0
    %3006 = vmatprep.mubr.f32.mxu0 0.0
    %v3007 = vand.u32 %v2897, 4294901760
    %v3008 = vsub.f32 %v2897, %v3007
    %v3009 = vand.u32 %v3008, 4294901760
    %v3010 = vsub.f32 %v3008, %v3009
    %v3011 = vand.u32 %v3010, 4294901760
    %3012 = vmatmul.mubr.f32.gmra.mrb[0].mxu0 %v3011
    %v3013 = vpop.f32.mrb[0].mxu0
    %v3014 = vadd.f32 0.0, %v3013
    %v3015 = vpop.f32.mrb[0].mxu0
    %3016 = vdwg.mxu0
    %3017 = vmatprep.subr.mxu0 0.0
    %v3018 = vand.u32 %v2882, 4294901760
    %v3019 = vsub.f32 %v2882, %v3018
    %v3020 = vand.u32 %v3019, 4294901760
    %v3021 = vsub.f32 %v3019, %v3020
    %v3022 = vand.u32 %v3021, 4294901760
    %3023 = vmatpush1.msra.mxu0 %v3022
    %3024 = vmatprep.subr.mxu0 0.0
    %v3025 = vand.u32 %v2883, 4294901760
    %v3026 = vsub.f32 %v2883, %v3025
    %v3027 = vand.u32 %v3026, 4294901760
    %v3028 = vsub.f32 %v3026, %v3027
    %v3029 = vand.u32 %v3028, 4294901760
    %3030 = vmatpush1.msra.mxu0 %v3029
    %3031 = vmatprep.subr.mxu0 0.0
    %v3032 = vand.u32 %v2884, 4294901760
    %v3033 = vsub.f32 %v2884, %v3032
    %v3034 = vand.u32 %v3033, 4294901760
    %v3035 = vsub.f32 %v3033, %v3034
    %v3036 = vand.u32 %v3035, 4294901760
    %3037 = vmatpush1.msra.mxu0 %v3036
    %3038 = vmatprep.subr.mxu0 0.0
    %3039 = vmatpush1.msra.mxu0 0.0
    %3040 = vmatprep.subr.mxu0 0.0
    %3041 = vmatpush1.msra.mxu0 0.0
    %3042 = vmatprep.subr.mxu0 0.0
    %3043 = vmatpush1.msra.mxu0 0.0
    %3044 = vmatprep.subr.mxu0 0.0
    %3045 = vmatpush1.msra.mxu0 0.0
    %3046 = vmatprep.subr.mxu0 0.0
    %3047 = vmatpush1.msra.mxu0 0.0
    %3048 = vmatprep.subr.mxu0 0.0
    %3049 = vmatpush1.msra.mxu0 0.0
    %3050 = vmatprep.subr.mxu0 0.0
    %3051 = vmatpush1.msra.mxu0 0.0
    %3052 = vmatprep.subr.mxu0 0.0
    %3053 = vmatpush1.msra.mxu0 0.0
    %3054 = vmatprep.subr.mxu0 0.0
    %3055 = vmatpush1.msra.mxu0 0.0
    %3056 = vmatprep.subr.mxu0 0.0
    %3057 = vmatpush1.msra.mxu0 0.0
    %3058 = vmatprep.subr.mxu0 0.0
    %3059 = vmatpush1.msra.mxu0 0.0
    %3060 = vmatprep.subr.mxu0 0.0
    %3061 = vmatpush1.msra.mxu0 0.0
    %3062 = vmatprep.subr.mxu0 0.0
    %3063 = vmatpush1.msra.mxu0 0.0
    %3064 = vmatprep.subr.mxu0 0.0
    %3065 = vmatpush1.msra.mxu0 0.0
    %3066 = vmatprep.subr.mxu0 0.0
    %3067 = vmatpush1.msra.mxu0 0.0
    %3068 = vmatprep.subr.mxu0 0.0
    %3069 = vmatpush1.msra.mxu0 0.0
    %3070 = vmatprep.subr.mxu0 0.0
    %3071 = vmatpush1.msra.mxu0 0.0
    %3072 = vmatprep.subr.mxu0 0.0
    %3073 = vmatpush1.msra.mxu0 0.0
    %3074 = vmatprep.subr.mxu0 0.0
    %3075 = vmatpush1.msra.mxu0 0.0
    %3076 = vmatprep.subr.mxu0 0.0
    %3077 = vmatpush1.msra.mxu0 0.0
    %3078 = vmatprep.subr.mxu0 0.0
    %3079 = vmatpush1.msra.mxu0 0.0
    %3080 = vmatprep.subr.mxu0 0.0
    %3081 = vmatpush1.msra.mxu0 0.0
    %3082 = vmatprep.subr.mxu0 0.0
    %3083 = vmatpush1.msra.mxu0 0.0
    %3084 = vmatprep.subr.mxu0 0.0
    %3085 = vmatpush1.msra.mxu0 0.0
    %3086 = vmatprep.subr.mxu0 0.0
    %3087 = vmatpush1.msra.mxu0 0.0
    %3088 = vmatprep.subr.mxu0 0.0
    %3089 = vmatpush1.msra.mxu0 0.0
    %3090 = vmatprep.subr.mxu0 0.0
    %3091 = vmatpush1.msra.mxu0 0.0
    %3092 = vmatprep.subr.mxu0 0.0
    %3093 = vmatpush1.msra.mxu0 0.0
    %3094 = vmatprep.subr.mxu0 0.0
    %3095 = vmatpush1.msra.mxu0 0.0
    %3096 = vmatprep.mubr.f32.mxu0 0.0
    %v3097 = vand.u32 %v2887, 4294901760
    %3098 = vmatmul.mubr.f32.gmra.mrb[0].mxu0 %v3097
    %v3099 = vpop.f32.mrb[0].mxu0
    %v3100 = vadd.f32 %v2974, %v3099
    %v3101 = vpop.f32.mrb[0].mxu0
    %3102 = vmatprep.mubr.f32.mxu0 0.0
    %v3103 = vand.u32 %v2890, 4294901760
    %3104 = vmatmul.mubr.f32.gmra.mrb[0].mxu0 %v3103
    %v3105 = vpop.f32.mrb[0].mxu0
    %v3106 = vadd.f32 %v2984, %v3105
    %v3107 = vpop.f32.mrb[0].mxu0
    %3108 = vmatprep.mubr.f32.mxu0 0.0
    %v3109 = vand.u32 %v2893, 4294901760
    %3110 = vmatmul.mubr.f32.gmra.mrb[0].mxu0 %v3109
    %v3111 = vpop.f32.mrb[0].mxu0
    %v3112 = vadd.f32 %v2994, %v3111
    %v3113 = vpop.f32.mrb[0].mxu0
    %3114 = vmatprep.mubr.f32.mxu0 0.0
    %v3115 = vand.u32 %v2895, 4294901760
    %3116 = vmatmul.mubr.f32.gmra.mrb[0].mxu0 %v3115
    %v3117 = vpop.f32.mrb[0].mxu0
    %v3118 = vadd.f32 %v3004, %v3117
    %v3119 = vpop.f32.mrb[0].mxu0
    %3120 = vmatprep.mubr.f32.mxu0 0.0
    %v3121 = vand.u32 %v2897, 4294901760
    %3122 = vmatmul.mubr.f32.gmra.mrb[0].mxu0 %v3121
    %v3123 = vpop.f32.mrb[0].mxu0
    %v3124 = vadd.f32 %v3014, %v3123
    %v3125 = vpop.f32.mrb[0].mxu0
    %3126 = vdwg.mxu0
    %3127 = vmatprep.subr.mxu0 0.0
    %v3128 = vand.u32 %v2882, 4294901760
    %v3129 = vsub.f32 %v2882, %v3128
    %3130 = vmatpush1.msra.mxu0 %v3129
    %3131 = vmatprep.subr.mxu0 0.0
    %v3132 = vand.u32 %v2883, 4294901760
    %v3133 = vsub.f32 %v2883, %v3132
    %3134 = vmatpush1.msra.mxu0 %v3133
    %3135 = vmatprep.subr.mxu0 0.0
    %v3136 = vand.u32 %v2884, 4294901760
    %v3137 = vsub.f32 %v2884, %v3136
    %3138 = vmatpush1.msra.mxu0 %v3137
    %3139 = vmatprep.subr.mxu0 0.0
    %3140 = vmatpush1.msra.mxu0 0.0
    %3141 = vmatprep.subr.mxu0 0.0
    %3142 = vmatpush1.msra.mxu0 0.0
    %3143 = vmatprep.subr.mxu0 0.0
    %3144 = vmatpush1.msra.mxu0 0.0
    %3145 = vmatprep.subr.mxu0 0.0
    %3146 = vmatpush1.msra.mxu0 0.0
    %3147 = vmatprep.subr.mxu0 0.0
    %3148 = vmatpush1.msra.mxu0 0.0
    %3149 = vmatprep.subr.mxu0 0.0
    %3150 = vmatpush1.msra.mxu0 0.0
    %3151 = vmatprep.subr.mxu0 0.0
    %3152 = vmatpush1.msra.mxu0 0.0
    %3153 = vmatprep.subr.mxu0 0.0
    %3154 = vmatpush1.msra.mxu0 0.0
    %3155 = vmatprep.subr.mxu0 0.0
    %3156 = vmatpush1.msra.mxu0 0.0
    %3157 = vmatprep.subr.mxu0 0.0
    %3158 = vmatpush1.msra.mxu0 0.0
    %3159 = vmatprep.subr.mxu0 0.0
    %3160 = vmatpush1.msra.mxu0 0.0
    %3161 = vmatprep.subr.mxu0 0.0
    %3162 = vmatpush1.msra.mxu0 0.0
    %3163 = vmatprep.subr.mxu0 0.0
    %3164 = vmatpush1.msra.mxu0 0.0
    %3165 = vmatprep.subr.mxu0 0.0
    %3166 = vmatpush1.msra.mxu0 0.0
    %3167 = vmatprep.subr.mxu0 0.0
    %3168 = vmatpush1.msra.mxu0 0.0
    %3169 = vmatprep.subr.mxu0 0.0
    %3170 = vmatpush1.msra.mxu0 0.0
    %3171 = vmatprep.subr.mxu0 0.0
    %3172 = vmatpush1.msra.mxu0 0.0
    %3173 = vmatprep.subr.mxu0 0.0
    %3174 = vmatpush1.msra.mxu0 0.0
    %3175 = vmatprep.subr.mxu0 0.0
    %3176 = vmatpush1.msra.mxu0 0.0
    %3177 = vmatprep.subr.mxu0 0.0
    %3178 = vmatpush1.msra.mxu0 0.0
    %3179 = vmatprep.subr.mxu0 0.0
    %3180 = vmatpush1.msra.mxu0 0.0
    %3181 = vmatprep.subr.mxu0 0.0
    %3182 = vmatpush1.msra.mxu0 0.0
    %3183 = vmatprep.subr.mxu0 0.0
    %3184 = vmatpush1.msra.mxu0 0.0
    %3185 = vmatprep.subr.mxu0 0.0
    %3186 = vmatpush1.msra.mxu0 0.0
    %3187 = vmatprep.subr.mxu0 0.0
    %3188 = vmatpush1.msra.mxu0 0.0
    %3189 = vmatprep.subr.mxu0 0.0
    %3190 = vmatpush1.msra.mxu0 0.0
    %3191 = vmatprep.subr.mxu0 0.0
    %3192 = vmatpush1.msra.mxu0 0.0
    %3193 = vmatprep.subr.mxu0 0.0
    %3194 = vmatpush1.msra.mxu0 0.0
    %3195 = vmatprep.subr.mxu0 0.0
    %3196 = vmatpush1.msra.mxu0 0.0
    %3197 = vmatprep.mubr.f32.mxu0 0.0
    %v3198 = vand.u32 %v2887, 4294901760
    %v3199 = vsub.f32 %v2887, %v3198
    %3200 = vmatmul.mubr.f32.gmra.mrb[0].mxu0 %v3199
    %v3201 = vpop.f32.mrb[0].mxu0
    %v3202 = vadd.f32 %v3100, %v3201
    %v3203 = vpop.f32.mrb[0].mxu0
    %3204 = vmatprep.mubr.f32.mxu0 0.0
    %v3205 = vand.u32 %v2890, 4294901760
    %v3206 = vsub.f32 %v2890, %v3205
    %3207 = vmatmul.mubr.f32.gmra.mrb[0].mxu0 %v3206
    %v3208 = vpop.f32.mrb[0].mxu0
    %v3209 = vadd.f32 %v3106, %v3208
    %v3210 = vpop.f32.mrb[0].mxu0
    %3211 = vmatprep.mubr.f32.mxu0 0.0
    %v3212 = vand.u32 %v2893, 4294901760
    %v3213 = vsub.f32 %v2893, %v3212
    %3214 = vmatmul.mubr.f32.gmra.mrb[0].mxu0 %v3213
    %v3215 = vpop.f32.mrb[0].mxu0
    %v3216 = vadd.f32 %v3112, %v3215
    %v3217 = vpop.f32.mrb[0].mxu0
    %3218 = vmatprep.mubr.f32.mxu0 0.0
    %v3219 = vand.u32 %v2895, 4294901760
    %v3220 = vsub.f32 %v2895, %v3219
    %3221 = vmatmul.mubr.f32.gmra.mrb[0].mxu0 %v3220
    %v3222 = vpop.f32.mrb[0].mxu0
    %v3223 = vadd.f32 %v3118, %v3222
    %v3224 = vpop.f32.mrb[0].mxu0
    %3225 = vmatprep.mubr.f32.mxu0 0.0
    %v3226 = vand.u32 %v2897, 4294901760
    %v3227 = vsub.f32 %v2897, %v3226
    %3228 = vmatmul.mubr.f32.gmra.mrb[0].mxu0 %v3227
    %v3229 = vpop.f32.mrb[0].mxu0
    %v3230 = vadd.f32 %v3124, %v3229
    %v3231 = vpop.f32.mrb[0].mxu0
    %3232 = vdwg.mxu0
    %3233 = vmatprep.subr.mxu0 0.0
    %v3234 = vand.u32 %v2882, 4294901760
    %3235 = vmatpush1.msra.mxu0 %v3234
    %3236 = vmatprep.subr.mxu0 0.0
    %v3237 = vand.u32 %v2883, 4294901760
    %3238 = vmatpush1.msra.mxu0 %v3237
    %3239 = vmatprep.subr.mxu0 0.0
    %v3240 = vand.u32 %v2884, 4294901760
    %3241 = vmatpush1.msra.mxu0 %v3240
    %3242 = vmatprep.subr.mxu0 0.0
    %3243 = vmatpush1.msra.mxu0 0.0
    %3244 = vmatprep.subr.mxu0 0.0
    %3245 = vmatpush1.msra.mxu0 0.0
    %3246 = vmatprep.subr.mxu0 0.0
    %3247 = vmatpush1.msra.mxu0 0.0
    %3248 = vmatprep.subr.mxu0 0.0
    %3249 = vmatpush1.msra.mxu0 0.0
    %3250 = vmatprep.subr.mxu0 0.0
    %3251 = vmatpush1.msra.mxu0 0.0
    %3252 = vmatprep.subr.mxu0 0.0
    %3253 = vmatpush1.msra.mxu0 0.0
    %3254 = vmatprep.subr.mxu0 0.0
    %3255 = vmatpush1.msra.mxu0 0.0
    %3256 = vmatprep.subr.mxu0 0.0
    %3257 = vmatpush1.msra.mxu0 0.0
    %3258 = vmatprep.subr.mxu0 0.0
    %3259 = vmatpush1.msra.mxu0 0.0
    %3260 = vmatprep.subr.mxu0 0.0
    %3261 = vmatpush1.msra.mxu0 0.0
    %3262 = vmatprep.subr.mxu0 0.0
    %3263 = vmatpush1.msra.mxu0 0.0
    %3264 = vmatprep.subr.mxu0 0.0
    %3265 = vmatpush1.msra.mxu0 0.0
    %3266 = vmatprep.subr.mxu0 0.0
    %3267 = vmatpush1.msra.mxu0 0.0
    %3268 = vmatprep.subr.mxu0 0.0
    %3269 = vmatpush1.msra.mxu0 0.0
    %3270 = vmatprep.subr.mxu0 0.0
    %3271 = vmatpush1.msra.mxu0 0.0
    %3272 = vmatprep.subr.mxu0 0.0
    %3273 = vmatpush1.msra.mxu0 0.0
    %3274 = vmatprep.subr.mxu0 0.0
    %3275 = vmatpush1.msra.mxu0 0.0
    %3276 = vmatprep.subr.mxu0 0.0
    %3277 = vmatpush1.msra.mxu0 0.0
    %3278 = vmatprep.subr.mxu0 0.0
    %3279 = vmatpush1.msra.mxu0 0.0
    %3280 = vmatprep.subr.mxu0 0.0
    %3281 = vmatpush1.msra.mxu0 0.0
    %3282 = vmatprep.subr.mxu0 0.0
    %3283 = vmatpush1.msra.mxu0 0.0
    %3284 = vmatprep.subr.mxu0 0.0
    %3285 = vmatpush1.msra.mxu0 0.0
    %3286 = vmatprep.subr.mxu0 0.0
    %3287 = vmatpush1.msra.mxu0 0.0
    %3288 = vmatprep.subr.mxu0 0.0
    %3289 = vmatpush1.msra.mxu0 0.0
    %3290 = vmatprep.subr.mxu0 0.0
    %3291 = vmatpush1.msra.mxu0 0.0
    %3292 = vmatprep.subr.mxu0 0.0
    %3293 = vmatpush1.msra.mxu0 0.0
    %3294 = vmatprep.subr.mxu0 0.0
    %3295 = vmatpush1.msra.mxu0 0.0
    %3296 = vmatprep.subr.mxu0 0.0
    %3297 = vmatpush1.msra.mxu0 0.0
    %3298 = vmatprep.subr.mxu0 0.0
    %3299 = vmatpush1.msra.mxu0 0.0
    %3300 = vmatprep.mubr.f32.mxu0 0.0
    %v3301 = vand.u32 %v2887, 4294901760
    %v3302 = vsub.f32 %v2887, %v3301
    %v3303 = vand.u32 %v3302, 4294901760
    %3304 = vmatmul.mubr.f32.gmra.mrb[0].mxu0 %v3303
    %v3305 = vpop.f32.mrb[0].mxu0
    %v3306 = vadd.f32 %v3202, %v3305
    %v3307 = vpop.f32.mrb[0].mxu0
    %3308 = vmatprep.mubr.f32.mxu0 0.0
    %v3309 = vand.u32 %v2890, 4294901760
    %v3310 = vsub.f32 %v2890, %v3309
    %v3311 = vand.u32 %v3310, 4294901760
    %3312 = vmatmul.mubr.f32.gmra.mrb[0].mxu0 %v3311
    %v3313 = vpop.f32.mrb[0].mxu0
    %v3314 = vadd.f32 %v3209, %v3313
    %v3315 = vpop.f32.mrb[0].mxu0
    %3316 = vmatprep.mubr.f32.mxu0 0.0
    %v3317 = vand.u32 %v2893, 4294901760
    %v3318 = vsub.f32 %v2893, %v3317
    %v3319 = vand.u32 %v3318, 4294901760
    %3320 = vmatmul.mubr.f32.gmra.mrb[0].mxu0 %v3319
    %v3321 = vpop.f32.mrb[0].mxu0
    %v3322 = vadd.f32 %v3216, %v3321
    %v3323 = vpop.f32.mrb[0].mxu0
    %3324 = vmatprep.mubr.f32.mxu0 0.0
    %v3325 = vand.u32 %v2895, 4294901760
    %v3326 = vsub.f32 %v2895, %v3325
    %v3327 = vand.u32 %v3326, 4294901760
    %3328 = vmatmul.mubr.f32.gmra.mrb[0].mxu0 %v3327
    %v3329 = vpop.f32.mrb[0].mxu0
    %v3330 = vadd.f32 %v3223, %v3329
    %v3331 = vpop.f32.mrb[0].mxu0
    %3332 = vmatprep.mubr.f32.mxu0 0.0
    %v3333 = vand.u32 %v2897, 4294901760
    %v3334 = vsub.f32 %v2897, %v3333
    %v3335 = vand.u32 %v3334, 4294901760
    %3336 = vmatmul.mubr.f32.gmra.mrb[0].mxu0 %v3335
    %v3337 = vpop.f32.mrb[0].mxu0
    %v3338 = vadd.f32 %v3230, %v3337
    %v3339 = vpop.f32.mrb[0].mxu0
    %3340 = vdwg.mxu0
    %3341 = vmatprep.subr.mxu0 0.0
    %v3342 = vand.u32 %v2882, 4294901760
    %v3343 = vsub.f32 %v2882, %v3342
    %v3344 = vand.u32 %v3343, 4294901760
    %3345 = vmatpush1.msra.mxu0 %v3344
    %3346 = vmatprep.subr.mxu0 0.0
    %v3347 = vand.u32 %v2883, 4294901760
    %v3348 = vsub.f32 %v2883, %v3347
    %v3349 = vand.u32 %v3348, 4294901760
    %3350 = vmatpush1.msra.mxu0 %v3349
    %3351 = vmatprep.subr.mxu0 0.0
    %v3352 = vand.u32 %v2884, 4294901760
    %v3353 = vsub.f32 %v2884, %v3352
    %v3354 = vand.u32 %v3353, 4294901760
    %3355 = vmatpush1.msra.mxu0 %v3354
    %3356 = vmatprep.subr.mxu0 0.0
    %3357 = vmatpush1.msra.mxu0 0.0
    %3358 = vmatprep.subr.mxu0 0.0
    %3359 = vmatpush1.msra.mxu0 0.0
    %3360 = vmatprep.subr.mxu0 0.0
    %3361 = vmatpush1.msra.mxu0 0.0
    %3362 = vmatprep.subr.mxu0 0.0
    %3363 = vmatpush1.msra.mxu0 0.0
    %3364 = vmatprep.subr.mxu0 0.0
    %3365 = vmatpush1.msra.mxu0 0.0
    %3366 = vmatprep.subr.mxu0 0.0
    %3367 = vmatpush1.msra.mxu0 0.0
    %3368 = vmatprep.subr.mxu0 0.0
    %3369 = vmatpush1.msra.mxu0 0.0
    %3370 = vmatprep.subr.mxu0 0.0
    %3371 = vmatpush1.msra.mxu0 0.0
    %3372 = vmatprep.subr.mxu0 0.0
    %3373 = vmatpush1.msra.mxu0 0.0
    %3374 = vmatprep.subr.mxu0 0.0
    %3375 = vmatpush1.msra.mxu0 0.0
    %3376 = vmatprep.subr.mxu0 0.0
    %3377 = vmatpush1.msra.mxu0 0.0
    %3378 = vmatprep.subr.mxu0 0.0
    %3379 = vmatpush1.msra.mxu0 0.0
    %3380 = vmatprep.subr.mxu0 0.0
    %3381 = vmatpush1.msra.mxu0 0.0
    %3382 = vmatprep.subr.mxu0 0.0
    %3383 = vmatpush1.msra.mxu0 0.0
    %3384 = vmatprep.subr.mxu0 0.0
    %3385 = vmatpush1.msra.mxu0 0.0
    %3386 = vmatprep.subr.mxu0 0.0
    %3387 = vmatpush1.msra.mxu0 0.0
    %3388 = vmatprep.subr.mxu0 0.0
    %3389 = vmatpush1.msra.mxu0 0.0
    %3390 = vmatprep.subr.mxu0 0.0
    %3391 = vmatpush1.msra.mxu0 0.0
    %3392 = vmatprep.subr.mxu0 0.0
    %3393 = vmatpush1.msra.mxu0 0.0
    %3394 = vmatprep.subr.mxu0 0.0
    %3395 = vmatpush1.msra.mxu0 0.0
    %3396 = vmatprep.subr.mxu0 0.0
    %3397 = vmatpush1.msra.mxu0 0.0
    %3398 = vmatprep.subr.mxu0 0.0
    %3399 = vmatpush1.msra.mxu0 0.0
    %3400 = vmatprep.subr.mxu0 0.0
    %3401 = vmatpush1.msra.mxu0 0.0
    %3402 = vmatprep.subr.mxu0 0.0
    %3403 = vmatpush1.msra.mxu0 0.0
    %3404 = vmatprep.subr.mxu0 0.0
    %3405 = vmatpush1.msra.mxu0 0.0
    %3406 = vmatprep.subr.mxu0 0.0
    %3407 = vmatpush1.msra.mxu0 0.0
    %3408 = vmatprep.subr.mxu0 0.0
    %3409 = vmatpush1.msra.mxu0 0.0
    %3410 = vmatprep.subr.mxu0 0.0
    %3411 = vmatpush1.msra.mxu0 0.0
    %3412 = vmatprep.subr.mxu0 0.0
    %3413 = vmatpush1.msra.mxu0 0.0
    %3414 = vmatprep.mubr.f32.mxu0 0.0
    %v3415 = vand.u32 %v2887, 4294901760
    %3416 = vmatmul.mubr.f32.gmra.mrb[0].mxu0 %v3415
    %v3417 = vpop.f32.mrb[0].mxu0
    %v3418 = vadd.f32 %v3306, %v3417
    %v3419 = vpop.f32.mrb[0].mxu0
    %3420 = vmatprep.mubr.f32.mxu0 0.0
    %v3421 = vand.u32 %v2890, 4294901760
    %3422 = vmatmul.mubr.f32.gmra.mrb[0].mxu0 %v3421
    %v3423 = vpop.f32.mrb[0].mxu0
    %v3424 = vadd.f32 %v3314, %v3423
    %v3425 = vpop.f32.mrb[0].mxu0
    %3426 = vmatprep.mubr.f32.mxu0 0.0
    %v3427 = vand.u32 %v2893, 4294901760
    %3428 = vmatmul.mubr.f32.gmra.mrb[0].mxu0 %v3427
    %v3429 = vpop.f32.mrb[0].mxu0
    %v3430 = vadd.f32 %v3322, %v3429
    %v3431 = vpop.f32.mrb[0].mxu0
    %3432 = vmatprep.mubr.f32.mxu0 0.0
    %v3433 = vand.u32 %v2895, 4294901760
    %3434 = vmatmul.mubr.f32.gmra.mrb[0].mxu0 %v3433
    %v3435 = vpop.f32.mrb[0].mxu0
    %v3436 = vadd.f32 %v3330, %v3435
    %v3437 = vpop.f32.mrb[0].mxu0
    %3438 = vmatprep.mubr.f32.mxu0 0.0
    %v3439 = vand.u32 %v2897, 4294901760
    %3440 = vmatmul.mubr.f32.gmra.mrb[0].mxu0 %v3439
    %v3441 = vpop.f32.mrb[0].mxu0
    %v3442 = vadd.f32 %v3338, %v3441
    %v3443 = vpop.f32.mrb[0].mxu0
    %3444 = vdwg.mxu0
    %3445 = vmatprep.subr.mxu0 0.0
    %v3446 = vand.u32 %v2882, 4294901760
    %3447 = vmatpush1.msra.mxu0 %v3446
    %3448 = vmatprep.subr.mxu0 0.0
    %v3449 = vand.u32 %v2883, 4294901760
    %3450 = vmatpush1.msra.mxu0 %v3449
    %3451 = vmatprep.subr.mxu0 0.0
    %v3452 = vand.u32 %v2884, 4294901760
    %3453 = vmatpush1.msra.mxu0 %v3452
    %3454 = vmatprep.subr.mxu0 0.0
    %3455 = vmatpush1.msra.mxu0 0.0
    %3456 = vmatprep.subr.mxu0 0.0
    %3457 = vmatpush1.msra.mxu0 0.0
    %3458 = vmatprep.subr.mxu0 0.0
    %3459 = vmatpush1.msra.mxu0 0.0
    %3460 = vmatprep.subr.mxu0 0.0
    %3461 = vmatpush1.msra.mxu0 0.0
    %3462 = vmatprep.subr.mxu0 0.0
    %3463 = vmatpush1.msra.mxu0 0.0
    %3464 = vmatprep.subr.mxu0 0.0
    %3465 = vmatpush1.msra.mxu0 0.0
    %3466 = vmatprep.subr.mxu0 0.0
    %3467 = vmatpush1.msra.mxu0 0.0
    %3468 = vmatprep.subr.mxu0 0.0
    %3469 = vmatpush1.msra.mxu0 0.0
    %3470 = vmatprep.subr.mxu0 0.0
    %3471 = vmatpush1.msra.mxu0 0.0
    %3472 = vmatprep.subr.mxu0 0.0
    %3473 = vmatpush1.msra.mxu0 0.0
    %3474 = vmatprep.subr.mxu0 0.0
    %3475 = vmatpush1.msra.mxu0 0.0
    %3476 = vmatprep.subr.mxu0 0.0
    %3477 = vmatpush1.msra.mxu0 0.0
    %3478 = vmatprep.subr.mxu0 0.0
    %3479 = vmatpush1.msra.mxu0 0.0
    %3480 = vmatprep.subr.mxu0 0.0
    %3481 = vmatpush1.msra.mxu0 0.0
    %3482 = vmatprep.subr.mxu0 0.0
    %3483 = vmatpush1.msra.mxu0 0.0
    %3484 = vmatprep.subr.mxu0 0.0
    %3485 = vmatpush1.msra.mxu0 0.0
    %3486 = vmatprep.subr.mxu0 0.0
    %3487 = vmatpush1.msra.mxu0 0.0
    %3488 = vmatprep.subr.mxu0 0.0
    %3489 = vmatpush1.msra.mxu0 0.0
    %3490 = vmatprep.subr.mxu0 0.0
    %3491 = vmatpush1.msra.mxu0 0.0
    %3492 = vmatprep.subr.mxu0 0.0
    %3493 = vmatpush1.msra.mxu0 0.0
    %3494 = vmatprep.subr.mxu0 0.0
    %3495 = vmatpush1.msra.mxu0 0.0
    %3496 = vmatprep.subr.mxu0 0.0
    %3497 = vmatpush1.msra.mxu0 0.0
    %3498 = vmatprep.subr.mxu0 0.0
    %3499 = vmatpush1.msra.mxu0 0.0
    %3500 = vmatprep.subr.mxu0 0.0
    %3501 = vmatpush1.msra.mxu0 0.0
    %3502 = vmatprep.subr.mxu0 0.0
    %3503 = vmatpush1.msra.mxu0 0.0
    %3504 = vmatprep.subr.mxu0 0.0
    %3505 = vmatpush1.msra.mxu0 0.0
    %3506 = vmatprep.subr.mxu0 0.0
    %3507 = vmatpush1.msra.mxu0 0.0
    %3508 = vmatprep.subr.mxu0 0.0
    %3509 = vmatpush1.msra.mxu0 0.0
    %3510 = vmatprep.subr.mxu0 0.0
    %3511 = vmatpush1.msra.mxu0 0.0
    %3512 = vmatprep.mubr.f32.mxu0 0.0
    %v3513 = vand.u32 %v2887, 4294901760
    %3514 = vmatmul.mubr.f32.gmra.mrb[0].mxu0 %v3513
    %v3515 = vpop.f32.mrb[0].mxu0
    %v3516 = vadd.f32 %v3418, %v3515
    %v3517 = vpop.f32.mrb[0].mxu0
    %3518 = vmatprep.mubr.f32.mxu0 0.0
    %v3519 = vand.u32 %v2890, 4294901760
    %3520 = vmatmul.mubr.f32.gmra.mrb[0].mxu0 %v3519
    %v3521 = vpop.f32.mrb[0].mxu0
    %v3522 = vadd.f32 %v3424, %v3521
    %v3523 = vpop.f32.mrb[0].mxu0
    %3524 = vmatprep.mubr.f32.mxu0 0.0
    %v3525 = vand.u32 %v2893, 4294901760
    %3526 = vmatmul.mubr.f32.gmra.mrb[0].mxu0 %v3525
    %v3527 = vpop.f32.mrb[0].mxu0
    %v3528 = vadd.f32 %v3430, %v3527
    %v3529 = vpop.f32.mrb[0].mxu0
    %3530 = vmatprep.mubr.f32.mxu0 0.0
    %v3531 = vand.u32 %v2895, 4294901760
    %3532 = vmatmul.mubr.f32.gmra.mrb[0].mxu0 %v3531
    %v3533 = vpop.f32.mrb[0].mxu0
    %v3534 = vadd.f32 %v3436, %v3533
    %v3535 = vpop.f32.mrb[0].mxu0
    %3536 = vmatprep.mubr.f32.mxu0 0.0
    %v3537 = vand.u32 %v2897, 4294901760
    %3538 = vmatmul.mubr.f32.gmra.mrb[0].mxu0 %v3537
    %v3539 = vpop.f32.mrb[0].mxu0
    %v3540 = vadd.f32 %v3442, %v3539
    %v3541 = vpop.f32.mrb[0].mxu0
    %3542 = vdwg.mxu0
    %v3543 = vld [vmem:[%s13] sm:$0x1]
    %v3545 = vlaneseq
    %v3546 = vshrl.u32 %v3545, 7
    %v3547 = vsub.s32 0, %v3546
    %v3548 = vrot.slane %v3543, %v3547
    %v3550 = vmul.f32 %v3516, %v3548
    %v3551 = vmul.f32 %v3522, %v3548
    %v3552 = vmul.f32 %v3528, %v3548
    %v3553 = vmul.f32 %v3534, %v3548
    %v3554 = vmul.f32 %v3540, %v3548
    %v3555 = vld [vmem:[%s14] sm:$0x1]
    %v3557 = vlaneseq
    %v3558 = vshrl.u32 %v3557, 7
    %v3559 = vsub.s32 0, %v3558
    %v3560 = vrot.slane %v3555, %v3559
    %v3562 = vadd.f32 %v3550, %v3560
    %v3563 = vadd.f32 %v3551, %v3560
    %v3564 = vadd.f32 %v3552, %v3560
    %v3565 = vadd.f32 %v3553, %v3560
    %v3566 = vadd.f32 %v3554, %v3560
    %v3567 = vmax.f32 %v3562, 0.0
    %v3568 = vmax.f32 %v3563, 0.0
    %v3569 = vmax.f32 %v3564, 0.0
    %v3570 = vmax.f32 %v3565, 0.0
    %v3571 = vmax.f32 %v3566, 0.0
    %vm3572 = vcmask 261120
    %v3573 = vsel %vm3572, %v3567, 0.0
    %v3574 = vsel %vm3572, %v3568, 0.0
    %v3575 = vadd.f32 %v3573, %v3574
    %vm3576 = vcmask 253952
    %v3577 = vsel %vm3576, %v3569, 0.0
    %v3578 = vadd.f32 %v3575, %v3577
    %v3579 = vrot.slane %v3578, 4
    %v3580 = vadd.f32 %v3578, %v3579
    %v3581 = vrot.slane %v3580, 2
    %v3582 = vadd.f32 %v3580, %v3581
    %v3583 = vrot.slane %v3582, 1
    %v3584 = vadd.f32 %v3582, %v3583
    %v3588 = vrot.slane %v3569, 1
    %v3589 = vrot.slane %v3570, 1
    %v3590 = vsel %vm144, %v3588, %v3589
    %v3591 = vrot.slane %v3571, 1
    %v3592 = vsel %vm144, %v3589, %v3591
    %v3596 = vsel %vm3572, %v3590, 0.0
    %v3597 = vsel %vm3572, %v3592, 0.0
    %v3598 = vadd.f32 %v3596, %v3597
    %v3599 = vsel %vm3576, %v3591, 0.0
    %v3600 = vadd.f32 %v3598, %v3599
    %v3601 = vrot.slane %v3600, 4
    %v3602 = vadd.f32 %v3600, %v3601
    %v3603 = vrot.slane %v3602, 2
    %v3604 = vadd.f32 %v3602, %v3603
    %v3605 = vrot.slane %v3604, 1
    %v3606 = vadd.f32 %v3604, %v3605
    %v3607 = vsel %vm79, %v3584, %v3606
    %v3608 = vmul.f32 %v3607, 0.05882353
    %v3609 = vld [vmem:[%s15] sm:$0xff]
    %v3610 = vld [vmem:[%s15 + $0x8] sm:$0xff]
    %v3611 = vld [vmem:[%s15 + $0x10] sm:$0xff]
    %v3612 = vld [vmem:[%s15 + $0x18] sm:$0xff]
    %v3613 = vld [vmem:[%s16] sm:$0x1]
    %v3615 = vlaneseq
    %v3616 = vshrl.u32 %v3615, 7
    %v3617 = vsub.s32 0, %v3616
    %v3618 = vrot.slane %v3613, %v3617
    %v3621 = vsel %vm3572, %v3608, 0
    %3623 = vmatprep.subr.mxu0 0.0
    %v3624 = vand.u32 %v3609, 4294901760
    %3625 = vmatpush1.msra.mxu0 %v3624
    %3626 = vmatprep.subr.mxu0 0.0
    %v3627 = vand.u32 %v3610, 4294901760
    %3628 = vmatpush1.msra.mxu0 %v3627
    %3629 = vmatprep.subr.mxu0 0.0
    %v3630 = vand.u32 %v3611, 4294901760
    %3631 = vmatpush1.msra.mxu0 %v3630
    %3632 = vmatprep.subr.mxu0 0.0
    %v3633 = vand.u32 %v3612, 4294901760
    %3634 = vmatpush1.msra.mxu0 %v3633
    %3635 = vmatprep.subr.mxu0 0.0
    %3636 = vmatpush1.msra.mxu0 0.0
    %3637 = vmatprep.subr.mxu0 0.0
    %3638 = vmatpush1.msra.mxu0 0.0
    %3639 = vmatprep.subr.mxu0 0.0
    %3640 = vmatpush1.msra.mxu0 0.0
    %3641 = vmatprep.subr.mxu0 0.0
    %3642 = vmatpush1.msra.mxu0 0.0
    %3643 = vmatprep.subr.mxu0 0.0
    %3644 = vmatpush1.msra.mxu0 0.0
    %3645 = vmatprep.subr.mxu0 0.0
    %3646 = vmatpush1.msra.mxu0 0.0
    %3647 = vmatprep.subr.mxu0 0.0
    %3648 = vmatpush1.msra.mxu0 0.0
    %3649 = vmatprep.subr.mxu0 0.0
    %3650 = vmatpush1.msra.mxu0 0.0
    %3651 = vmatprep.subr.mxu0 0.0
    %3652 = vmatpush1.msra.mxu0 0.0
    %3653 = vmatprep.subr.mxu0 0.0
    %3654 = vmatpush1.msra.mxu0 0.0
    %3655 = vmatprep.subr.mxu0 0.0
    %3656 = vmatpush1.msra.mxu0 0.0
    %3657 = vmatprep.subr.mxu0 0.0
    %3658 = vmatpush1.msra.mxu0 0.0
    %3659 = vmatprep.subr.mxu0 0.0
    %3660 = vmatpush1.msra.mxu0 0.0
    %3661 = vmatprep.subr.mxu0 0.0
    %3662 = vmatpush1.msra.mxu0 0.0
    %3663 = vmatprep.subr.mxu0 0.0
    %3664 = vmatpush1.msra.mxu0 0.0
    %3665 = vmatprep.subr.mxu0 0.0
    %3666 = vmatpush1.msra.mxu0 0.0
    %3667 = vmatprep.subr.mxu0 0.0
    %3668 = vmatpush1.msra.mxu0 0.0
    %3669 = vmatprep.subr.mxu0 0.0
    %3670 = vmatpush1.msra.mxu0 0.0
    %3671 = vmatprep.subr.mxu0 0.0
    %3672 = vmatpush1.msra.mxu0 0.0
    %3673 = vmatprep.subr.mxu0 0.0
    %3674 = vmatpush1.msra.mxu0 0.0
    %3675 = vmatprep.subr.mxu0 0.0
    %3676 = vmatpush1.msra.mxu0 0.0
    %3677 = vmatprep.subr.mxu0 0.0
    %3678 = vmatpush1.msra.mxu0 0.0
    %3679 = vmatprep.subr.mxu0 0.0
    %3680 = vmatpush1.msra.mxu0 0.0
    %3681 = vmatprep.subr.mxu0 0.0
    %3682 = vmatpush1.msra.mxu0 0.0
    %3683 = vmatprep.subr.mxu0 0.0
    %3684 = vmatpush1.msra.mxu0 0.0
    %3685 = vmatprep.subr.mxu0 0.0
    %3686 = vmatpush1.msra.mxu0 0.0
    %3687 = vmatprep.subr.mxu0 0.0
    %3688 = vmatpush1.msra.mxu0 0.0
    %3689 = vmatprep.subr.mxu0 0.0
    %3690 = vmatpush1.msra.mxu0 0.0
    %3691 = vmatprep.mubr.f32.mxu0 0.0
    %v3692 = vand.u32 %v3621, 4294901760
    %v3693 = vsub.f32 %v3621, %v3692
    %v3694 = vand.u32 %v3693, 4294901760
    %v3695 = vsub.f32 %v3693, %v3694
    %v3696 = vand.u32 %v3695, 4294901760
    %3697 = vmatmul.mubr.f32.gmra.mrb[0].mxu0 %v3696
    %v3698 = vpop.f32.mrb[0].mxu0
    %v3699 = vadd.f32 %v3618, %v3698
    %v3700 = vpop.f32.mrb[0].mxu0
    %3701 = vdwg.mxu0
    %3702 = vmatprep.subr.mxu0 0.0
    %v3703 = vand.u32 %v3609, 4294901760
    %v3704 = vsub.f32 %v3609, %v3703
    %v3705 = vand.u32 %v3704, 4294901760
    %v3706 = vsub.f32 %v3704, %v3705
    %v3707 = vand.u32 %v3706, 4294901760
    %3708 = vmatpush1.msra.mxu0 %v3707
    %3709 = vmatprep.subr.mxu0 0.0
    %v3710 = vand.u32 %v3610, 4294901760
    %v3711 = vsub.f32 %v3610, %v3710
    %v3712 = vand.u32 %v3711, 4294901760
    %v3713 = vsub.f32 %v3711, %v3712
    %v3714 = vand.u32 %v3713, 4294901760
    %3715 = vmatpush1.msra.mxu0 %v3714
    %3716 = vmatprep.subr.mxu0 0.0
    %v3717 = vand.u32 %v3611, 4294901760
    %v3718 = vsub.f32 %v3611, %v3717
    %v3719 = vand.u32 %v3718, 4294901760
    %v3720 = vsub.f32 %v3718, %v3719
    %v3721 = vand.u32 %v3720, 4294901760
    %3722 = vmatpush1.msra.mxu0 %v3721
    %3723 = vmatprep.subr.mxu0 0.0
    %v3724 = vand.u32 %v3612, 4294901760
    %v3725 = vsub.f32 %v3612, %v3724
    %v3726 = vand.u32 %v3725, 4294901760
    %v3727 = vsub.f32 %v3725, %v3726
    %v3728 = vand.u32 %v3727, 4294901760
    %3729 = vmatpush1.msra.mxu0 %v3728
    %3730 = vmatprep.subr.mxu0 0.0
    %3731 = vmatpush1.msra.mxu0 0.0
    %3732 = vmatprep.subr.mxu0 0.0
    %3733 = vmatpush1.msra.mxu0 0.0
    %3734 = vmatprep.subr.mxu0 0.0
    %3735 = vmatpush1.msra.mxu0 0.0
    %3736 = vmatprep.subr.mxu0 0.0
    %3737 = vmatpush1.msra.mxu0 0.0
    %3738 = vmatprep.subr.mxu0 0.0
    %3739 = vmatpush1.msra.mxu0 0.0
    %3740 = vmatprep.subr.mxu0 0.0
    %3741 = vmatpush1.msra.mxu0 0.0
    %3742 = vmatprep.subr.mxu0 0.0
    %3743 = vmatpush1.msra.mxu0 0.0
    %3744 = vmatprep.subr.mxu0 0.0
    %3745 = vmatpush1.msra.mxu0 0.0
    %3746 = vmatprep.subr.mxu0 0.0
    %3747 = vmatpush1.msra.mxu0 0.0
    %3748 = vmatprep.subr.mxu0 0.0
    %3749 = vmatpush1.msra.mxu0 0.0
    %3750 = vmatprep.subr.mxu0 0.0
    %3751 = vmatpush1.msra.mxu0 0.0
    %3752 = vmatprep.subr.mxu0 0.0
    %3753 = vmatpush1.msra.mxu0 0.0
    %3754 = vmatprep.subr.mxu0 0.0
    %3755 = vmatpush1.msra.mxu0 0.0
    %3756 = vmatprep.subr.mxu0 0.0
    %3757 = vmatpush1.msra.mxu0 0.0
    %3758 = vmatprep.subr.mxu0 0.0
    %3759 = vmatpush1.msra.mxu0 0.0
    %3760 = vmatprep.subr.mxu0 0.0
    %3761 = vmatpush1.msra.mxu0 0.0
    %3762 = vmatprep.subr.mxu0 0.0
    %3763 = vmatpush1.msra.mxu0 0.0
    %3764 = vmatprep.subr.mxu0 0.0
    %3765 = vmatpush1.msra.mxu0 0.0
    %3766 = vmatprep.subr.mxu0 0.0
    %3767 = vmatpush1.msra.mxu0 0.0
    %3768 = vmatprep.subr.mxu0 0.0
    %3769 = vmatpush1.msra.mxu0 0.0
    %3770 = vmatprep.subr.mxu0 0.0
    %3771 = vmatpush1.msra.mxu0 0.0
    %3772 = vmatprep.subr.mxu0 0.0
    %3773 = vmatpush1.msra.mxu0 0.0
    %3774 = vmatprep.subr.mxu0 0.0
    %3775 = vmatpush1.msra.mxu0 0.0
    %3776 = vmatprep.subr.mxu0 0.0
    %3777 = vmatpush1.msra.mxu0 0.0
    %3778 = vmatprep.subr.mxu0 0.0
    %3779 = vmatpush1.msra.mxu0 0.0
    %3780 = vmatprep.subr.mxu0 0.0
    %3781 = vmatpush1.msra.mxu0 0.0
    %3782 = vmatprep.subr.mxu0 0.0
    %3783 = vmatpush1.msra.mxu0 0.0
    %3784 = vmatprep.subr.mxu0 0.0
    %3785 = vmatpush1.msra.mxu0 0.0
    %3786 = vmatprep.mubr.f32.mxu0 0.0
    %v3787 = vand.u32 %v3621, 4294901760
    %3788 = vmatmul.mubr.f32.gmra.mrb[0].mxu0 %v3787
    %v3789 = vpop.f32.mrb[0].mxu0
    %v3790 = vadd.f32 %v3699, %v3789
    %v3791 = vpop.f32.mrb[0].mxu0
    %3792 = vdwg.mxu0
    %3793 = vmatprep.subr.mxu0 0.0
    %v3794 = vand.u32 %v3609, 4294901760
    %v3795 = vsub.f32 %v3609, %v3794
    %3796 = vmatpush1.msra.mxu0 %v3795
    %3797 = vmatprep.subr.mxu0 0.0
    %v3798 = vand.u32 %v3610, 4294901760
    %v3799 = vsub.f32 %v3610, %v3798
    %3800 = vmatpush1.msra.mxu0 %v3799
    %3801 = vmatprep.subr.mxu0 0.0
    %v3802 = vand.u32 %v3611, 4294901760
    %v3803 = vsub.f32 %v3611, %v3802
    %3804 = vmatpush1.msra.mxu0 %v3803
    %3805 = vmatprep.subr.mxu0 0.0
    %v3806 = vand.u32 %v3612, 4294901760
    %v3807 = vsub.f32 %v3612, %v3806
    %3808 = vmatpush1.msra.mxu0 %v3807
    %3809 = vmatprep.subr.mxu0 0.0
    %3810 = vmatpush1.msra.mxu0 0.0
    %3811 = vmatprep.subr.mxu0 0.0
    %3812 = vmatpush1.msra.mxu0 0.0
    %3813 = vmatprep.subr.mxu0 0.0
    %3814 = vmatpush1.msra.mxu0 0.0
    %3815 = vmatprep.subr.mxu0 0.0
    %3816 = vmatpush1.msra.mxu0 0.0
    %3817 = vmatprep.subr.mxu0 0.0
    %3818 = vmatpush1.msra.mxu0 0.0
    %3819 = vmatprep.subr.mxu0 0.0
    %3820 = vmatpush1.msra.mxu0 0.0
    %3821 = vmatprep.subr.mxu0 0.0
    %3822 = vmatpush1.msra.mxu0 0.0
    %3823 = vmatprep.subr.mxu0 0.0
    %3824 = vmatpush1.msra.mxu0 0.0
    %3825 = vmatprep.subr.mxu0 0.0
    %3826 = vmatpush1.msra.mxu0 0.0
    %3827 = vmatprep.subr.mxu0 0.0
    %3828 = vmatpush1.msra.mxu0 0.0
    %3829 = vmatprep.subr.mxu0 0.0
    %3830 = vmatpush1.msra.mxu0 0.0
    %3831 = vmatprep.subr.mxu0 0.0
    %3832 = vmatpush1.msra.mxu0 0.0
    %3833 = vmatprep.subr.mxu0 0.0
    %3834 = vmatpush1.msra.mxu0 0.0
    %3835 = vmatprep.subr.mxu0 0.0
    %3836 = vmatpush1.msra.mxu0 0.0
    %3837 = vmatprep.subr.mxu0 0.0
    %3838 = vmatpush1.msra.mxu0 0.0
    %3839 = vmatprep.subr.mxu0 0.0
    %3840 = vmatpush1.msra.mxu0 0.0
    %3841 = vmatprep.subr.mxu0 0.0
    %3842 = vmatpush1.msra.mxu0 0.0
    %3843 = vmatprep.subr.mxu0 0.0
    %3844 = vmatpush1.msra.mxu0 0.0
    %3845 = vmatprep.subr.mxu0 0.0
    %3846 = vmatpush1.msra.mxu0 0.0
    %3847 = vmatprep.subr.mxu0 0.0
    %3848 = vmatpush1.msra.mxu0 0.0
    %3849 = vmatprep.subr.mxu0 0.0
    %3850 = vmatpush1.msra.mxu0 0.0
    %3851 = vmatprep.subr.mxu0 0.0
    %3852 = vmatpush1.msra.mxu0 0.0
    %3853 = vmatprep.subr.mxu0 0.0
    %3854 = vmatpush1.msra.mxu0 0.0
    %3855 = vmatprep.subr.mxu0 0.0
    %3856 = vmatpush1.msra.mxu0 0.0
    %3857 = vmatprep.subr.mxu0 0.0
    %3858 = vmatpush1.msra.mxu0 0.0
    %3859 = vmatprep.subr.mxu0 0.0
    %3860 = vmatpush1.msra.mxu0 0.0
    %3861 = vmatprep.subr.mxu0 0.0
    %3862 = vmatpush1.msra.mxu0 0.0
    %3863 = vmatprep.subr.mxu0 0.0
    %3864 = vmatpush1.msra.mxu0 0.0
    %3865 = vmatprep.mubr.f32.mxu0 0.0
    %v3866 = vand.u32 %v3621, 4294901760
    %v3867 = vsub.f32 %v3621, %v3866
    %3868 = vmatmul.mubr.f32.gmra.mrb[0].mxu0 %v3867
    %v3869 = vpop.f32.mrb[0].mxu0
    %v3870 = vadd.f32 %v3790, %v3869
    %v3871 = vpop.f32.mrb[0].mxu0
    %3872 = vdwg.mxu0
    %3873 = vmatprep.subr.mxu0 0.0
    %v3874 = vand.u32 %v3609, 4294901760
    %3875 = vmatpush1.msra.mxu0 %v3874
    %3876 = vmatprep.subr.mxu0 0.0
    %v3877 = vand.u32 %v3610, 4294901760
    %3878 = vmatpush1.msra.mxu0 %v3877
    %3879 = vmatprep.subr.mxu0 0.0
    %v3880 = vand.u32 %v3611, 4294901760
    %3881 = vmatpush1.msra.mxu0 %v3880
    %3882 = vmatprep.subr.mxu0 0.0
    %v3883 = vand.u32 %v3612, 4294901760
    %3884 = vmatpush1.msra.mxu0 %v3883
    %3885 = vmatprep.subr.mxu0 0.0
    %3886 = vmatpush1.msra.mxu0 0.0
    %3887 = vmatprep.subr.mxu0 0.0
    %3888 = vmatpush1.msra.mxu0 0.0
    %3889 = vmatprep.subr.mxu0 0.0
    %3890 = vmatpush1.msra.mxu0 0.0
    %3891 = vmatprep.subr.mxu0 0.0
    %3892 = vmatpush1.msra.mxu0 0.0
    %3893 = vmatprep.subr.mxu0 0.0
    %3894 = vmatpush1.msra.mxu0 0.0
    %3895 = vmatprep.subr.mxu0 0.0
    %3896 = vmatpush1.msra.mxu0 0.0
    %3897 = vmatprep.subr.mxu0 0.0
    %3898 = vmatpush1.msra.mxu0 0.0
    %3899 = vmatprep.subr.mxu0 0.0
    %3900 = vmatpush1.msra.mxu0 0.0
    %3901 = vmatprep.subr.mxu0 0.0
    %3902 = vmatpush1.msra.mxu0 0.0
    %3903 = vmatprep.subr.mxu0 0.0
    %3904 = vmatpush1.msra.mxu0 0.0
    %3905 = vmatprep.subr.mxu0 0.0
    %3906 = vmatpush1.msra.mxu0 0.0
    %3907 = vmatprep.subr.mxu0 0.0
    %3908 = vmatpush1.msra.mxu0 0.0
    %3909 = vmatprep.subr.mxu0 0.0
    %3910 = vmatpush1.msra.mxu0 0.0
    %3911 = vmatprep.subr.mxu0 0.0
    %3912 = vmatpush1.msra.mxu0 0.0
    %3913 = vmatprep.subr.mxu0 0.0
    %3914 = vmatpush1.msra.mxu0 0.0
    %3915 = vmatprep.subr.mxu0 0.0
    %3916 = vmatpush1.msra.mxu0 0.0
    %3917 = vmatprep.subr.mxu0 0.0
    %3918 = vmatpush1.msra.mxu0 0.0
    %3919 = vmatprep.subr.mxu0 0.0
    %3920 = vmatpush1.msra.mxu0 0.0
    %3921 = vmatprep.subr.mxu0 0.0
    %3922 = vmatpush1.msra.mxu0 0.0
    %3923 = vmatprep.subr.mxu0 0.0
    %3924 = vmatpush1.msra.mxu0 0.0
    %3925 = vmatprep.subr.mxu0 0.0
    %3926 = vmatpush1.msra.mxu0 0.0
    %3927 = vmatprep.subr.mxu0 0.0
    %3928 = vmatpush1.msra.mxu0 0.0
    %3929 = vmatprep.subr.mxu0 0.0
    %3930 = vmatpush1.msra.mxu0 0.0
    %3931 = vmatprep.subr.mxu0 0.0
    %3932 = vmatpush1.msra.mxu0 0.0
    %3933 = vmatprep.subr.mxu0 0.0
    %3934 = vmatpush1.msra.mxu0 0.0
    %3935 = vmatprep.subr.mxu0 0.0
    %3936 = vmatpush1.msra.mxu0 0.0
    %3937 = vmatprep.subr.mxu0 0.0
    %3938 = vmatpush1.msra.mxu0 0.0
    %3939 = vmatprep.subr.mxu0 0.0
    %3940 = vmatpush1.msra.mxu0 0.0
    %3941 = vmatprep.mubr.f32.mxu0 0.0
    %v3942 = vand.u32 %v3621, 4294901760
    %v3943 = vsub.f32 %v3621, %v3942
    %v3944 = vand.u32 %v3943, 4294901760
    %3945 = vmatmul.mubr.f32.gmra.mrb[0].mxu0 %v3944
    %v3946 = vpop.f32.mrb[0].mxu0
    %v3947 = vadd.f32 %v3870, %v3946
    %v3948 = vpop.f32.mrb[0].mxu0
    %3949 = vdwg.mxu0
    %3950 = vmatprep.subr.mxu0 0.0
    %v3951 = vand.u32 %v3609, 4294901760
    %v3952 = vsub.f32 %v3609, %v3951
    %v3953 = vand.u32 %v3952, 4294901760
    %3954 = vmatpush1.msra.mxu0 %v3953
    %3955 = vmatprep.subr.mxu0 0.0
    %v3956 = vand.u32 %v3610, 4294901760
    %v3957 = vsub.f32 %v3610, %v3956
    %v3958 = vand.u32 %v3957, 4294901760
    %3959 = vmatpush1.msra.mxu0 %v3958
    %3960 = vmatprep.subr.mxu0 0.0
    %v3961 = vand.u32 %v3611, 4294901760
    %v3962 = vsub.f32 %v3611, %v3961
    %v3963 = vand.u32 %v3962, 4294901760
    %3964 = vmatpush1.msra.mxu0 %v3963
    %3965 = vmatprep.subr.mxu0 0.0
    %v3966 = vand.u32 %v3612, 4294901760
    %v3967 = vsub.f32 %v3612, %v3966
    %v3968 = vand.u32 %v3967, 4294901760
    %3969 = vmatpush1.msra.mxu0 %v3968
    %3970 = vmatprep.subr.mxu0 0.0
    %3971 = vmatpush1.msra.mxu0 0.0
    %3972 = vmatprep.subr.mxu0 0.0
    %3973 = vmatpush1.msra.mxu0 0.0
    %3974 = vmatprep.subr.mxu0 0.0
    %3975 = vmatpush1.msra.mxu0 0.0
    %3976 = vmatprep.subr.mxu0 0.0
    %3977 = vmatpush1.msra.mxu0 0.0
    %3978 = vmatprep.subr.mxu0 0.0
    %3979 = vmatpush1.msra.mxu0 0.0
    %3980 = vmatprep.subr.mxu0 0.0
    %3981 = vmatpush1.msra.mxu0 0.0
    %3982 = vmatprep.subr.mxu0 0.0
    %3983 = vmatpush1.msra.mxu0 0.0
    %3984 = vmatprep.subr.mxu0 0.0
    %3985 = vmatpush1.msra.mxu0 0.0
    %3986 = vmatprep.subr.mxu0 0.0
    %3987 = vmatpush1.msra.mxu0 0.0
    %3988 = vmatprep.subr.mxu0 0.0
    %3989 = vmatpush1.msra.mxu0 0.0
    %3990 = vmatprep.subr.mxu0 0.0
    %3991 = vmatpush1.msra.mxu0 0.0
    %3992 = vmatprep.subr.mxu0 0.0
    %3993 = vmatpush1.msra.mxu0 0.0
    %3994 = vmatprep.subr.mxu0 0.0
    %3995 = vmatpush1.msra.mxu0 0.0
    %3996 = vmatprep.subr.mxu0 0.0
    %3997 = vmatpush1.msra.mxu0 0.0
    %3998 = vmatprep.subr.mxu0 0.0
    %3999 = vmatpush1.msra.mxu0 0.0
    %4000 = vmatprep.subr.mxu0 0.0
    %4001 = vmatpush1.msra.mxu0 0.0
    %4002 = vmatprep.subr.mxu0 0.0
    %4003 = vmatpush1.msra.mxu0 0.0
    %4004 = vmatprep.subr.mxu0 0.0
    %4005 = vmatpush1.msra.mxu0 0.0
    %4006 = vmatprep.subr.mxu0 0.0
    %4007 = vmatpush1.msra.mxu0 0.0
    %4008 = vmatprep.subr.mxu0 0.0
    %4009 = vmatpush1.msra.mxu0 0.0
    %4010 = vmatprep.subr.mxu0 0.0
    %4011 = vmatpush1.msra.mxu0 0.0
    %4012 = vmatprep.subr.mxu0 0.0
    %4013 = vmatpush1.msra.mxu0 0.0
    %4014 = vmatprep.subr.mxu0 0.0
    %4015 = vmatpush1.msra.mxu0 0.0
    %4016 = vmatprep.subr.mxu0 0.0
    %4017 = vmatpush1.msra.mxu0 0.0
    %4018 = vmatprep.subr.mxu0 0.0
    %4019 = vmatpush1.msra.mxu0 0.0
    %4020 = vmatprep.subr.mxu0 0.0
    %4021 = vmatpush1.msra.mxu0 0.0
    %4022 = vmatprep.subr.mxu0 0.0
    %4023 = vmatpush1.msra.mxu0 0.0
    %4024 = vmatprep.subr.mxu0 0.0
    %4025 = vmatpush1.msra.mxu0 0.0
    %4026 = vmatprep.mubr.f32.mxu0 0.0
    %v4027 = vand.u32 %v3621, 4294901760
    %4028 = vmatmul.mubr.f32.gmra.mrb[0].mxu0 %v4027
    %v4029 = vpop.f32.mrb[0].mxu0
    %v4030 = vadd.f32 %v3947, %v4029
    %v4031 = vpop.f32.mrb[0].mxu0
    %4032 = vdwg.mxu0
    %4033 = vmatprep.subr.mxu0 0.0
    %v4034 = vand.u32 %v3609, 4294901760
    %4035 = vmatpush1.msra.mxu0 %v4034
    %4036 = vmatprep.subr.mxu0 0.0
    %v4037 = vand.u32 %v3610, 4294901760
    %4038 = vmatpush1.msra.mxu0 %v4037
    %4039 = vmatprep.subr.mxu0 0.0
    %v4040 = vand.u32 %v3611, 4294901760
    %4041 = vmatpush1.msra.mxu0 %v4040
    %4042 = vmatprep.subr.mxu0 0.0
    %v4043 = vand.u32 %v3612, 4294901760
    %4044 = vmatpush1.msra.mxu0 %v4043
    %4045 = vmatprep.subr.mxu0 0.0
    %4046 = vmatpush1.msra.mxu0 0.0
    %4047 = vmatprep.subr.mxu0 0.0
    %4048 = vmatpush1.msra.mxu0 0.0
    %4049 = vmatprep.subr.mxu0 0.0
    %4050 = vmatpush1.msra.mxu0 0.0
    %4051 = vmatprep.subr.mxu0 0.0
    %4052 = vmatpush1.msra.mxu0 0.0
    %4053 = vmatprep.subr.mxu0 0.0
    %4054 = vmatpush1.msra.mxu0 0.0
    %4055 = vmatprep.subr.mxu0 0.0
    %4056 = vmatpush1.msra.mxu0 0.0
    %4057 = vmatprep.subr.mxu0 0.0
    %4058 = vmatpush1.msra.mxu0 0.0
    %4059 = vmatprep.subr.mxu0 0.0
    %4060 = vmatpush1.msra.mxu0 0.0
    %4061 = vmatprep.subr.mxu0 0.0
    %4062 = vmatpush1.msra.mxu0 0.0
    %4063 = vmatprep.subr.mxu0 0.0
    %4064 = vmatpush1.msra.mxu0 0.0
    %4065 = vmatprep.subr.mxu0 0.0
    %4066 = vmatpush1.msra.mxu0 0.0
    %4067 = vmatprep.subr.mxu0 0.0
    %4068 = vmatpush1.msra.mxu0 0.0
    %4069 = vmatprep.subr.mxu0 0.0
    %4070 = vmatpush1.msra.mxu0 0.0
    %4071 = vmatprep.subr.mxu0 0.0
    %4072 = vmatpush1.msra.mxu0 0.0
    %4073 = vmatprep.subr.mxu0 0.0
    %4074 = vmatpush1.msra.mxu0 0.0
    %4075 = vmatprep.subr.mxu0 0.0
    %4076 = vmatpush1.msra.mxu0 0.0
    %4077 = vmatprep.subr.mxu0 0.0
    %4078 = vmatpush1.msra.mxu0 0.0
    %4079 = vmatprep.subr.mxu0 0.0
    %4080 = vmatpush1.msra.mxu0 0.0
    %4081 = vmatprep.subr.mxu0 0.0
    %4082 = vmatpush1.msra.mxu0 0.0
    %4083 = vmatprep.subr.mxu0 0.0
    %4084 = vmatpush1.msra.mxu0 0.0
    %4085 = vmatprep.subr.mxu0 0.0
    %4086 = vmatpush1.msra.mxu0 0.0
    %4087 = vmatprep.subr.mxu0 0.0
    %4088 = vmatpush1.msra.mxu0 0.0
    %4089 = vmatprep.subr.mxu0 0.0
    %4090 = vmatpush1.msra.mxu0 0.0
    %4091 = vmatprep.subr.mxu0 0.0
    %4092 = vmatpush1.msra.mxu0 0.0
    %4093 = vmatprep.subr.mxu0 0.0
    %4094 = vmatpush1.msra.mxu0 0.0
    %4095 = vmatprep.subr.mxu0 0.0
    %4096 = vmatpush1.msra.mxu0 0.0
    %4097 = vmatprep.subr.mxu0 0.0
    %4098 = vmatpush1.msra.mxu0 0.0
    %4099 = vmatprep.subr.mxu0 0.0
    %4100 = vmatpush1.msra.mxu0 0.0
    %4101 = vmatprep.mubr.f32.mxu0 0.0
    %v4102 = vand.u32 %v3621, 4294901760
    %4103 = vmatmul.mubr.f32.gmra.mrb[0].mxu0 %v4102
    %v4104 = vpop.f32.mrb[0].mxu0
    %v4105 = vadd.f32 %v4030, %v4104
    %v4106 = vpop.f32.mrb[0].mxu0
    %4107 = vdwg.mxu0
    %vm4108 = vcmask 33792
    %v4109 = vsel %vm4108, %v4105, -inf
    %4110 = vmax.xlane.f32.xlu0 %v4109
    %v4111 = vpop.xlane.xlu0 %4110
    %v4112 = vsub.f32 %v4105, %v4111
    %v4113 = vmul.f32 %v4112, 1.442695
    %v4114 = vpow.pop %v4113
    %v4115 = vsel %vm4108, %v4114, 0.0
    %4116 = vadd.xlane.f32.xlu0 %v4115
    %v4117 = vpop.xlane.xlu0 %4116
    %v4118 = vrcp.pop %v4117
    %v4119 = vmul.f32 %v4114, %v4118
    %4120 = vst.msk [vmem:[#allocation4] sm:$0x3] %vm4108, %v4119
    // Predicated region
    $region70: #{xcm_forward.1} parent=1 // pred_check
      _
    $region71: #{xcm_forward.1} parent=1 // pred_check_branch
      %4122 = sbr.rel (0) target = $region73
    $region72: #{xcm_forward.1} parent=1 // pred_region
      %s4124 = ssub.s32 32, 32
      %4125 = vsyncadd [#allocation5], %s4124
      %s4127 = sshll.u32 [#allocation4], 4
      %s4128 = int_to_ptr.vmem [resolvable:$true] %s4127
      %4130 = dma.vmem_to_hbm [thread:$0]  %s4128, 32, %s17, [#allocation5]
    $region73: #{xcm_forward.1} parent=1 // pred_fallthru
      _
    // Predicated region
    $region74: #{xcm_forward.1} parent=1 // pred_check
      _
    $region75: #{xcm_forward.1} parent=1 // pred_check_branch
      %4132 = sbr.rel (0) target = $region77
    $region76: #{xcm_forward.1} parent=1 // pred_region
      %4133 = dma.done [#allocation5], 32
    $region77: #{xcm_forward.1} parent=1 // pred_fallthru
      _
    %4134 = vsyncpa [#allocation5], 1

</llo_original>
